<compile_context>
chip_gen: v7x
topology: tpu7x:2x2x1
jax: 0.10.0
libtpu: 0.0.40
codegen_flags: <defaults>
</compile_context>

<pallas_src>
import math

import jax
import jax.numpy as jnp
from jax.experimental import pallas as pl
from jax.experimental.pallas import tpu as pltpu

_LANE = 128
_SUBLANE = 8
_TARGET_STEP_BYTES = 4 << 20      # aim for >= ~4 MiB of HBM traffic per grid step
_VMEM_TILE_BUDGET = 12 << 20      # per-step working set incl. double buffering
_VMEM_LIMIT_BYTES = 32 << 20      # raise v5e's 16 MiB scoped default; fine on v6e/v7x
_MAX_KRON_BYTES = 32 << 20        # largest fused kron(H, I) map we keep resident
_TINY_FALLBACK_ELEMS = 64 * 1024  # below this, plain XLA beats kernel launch overhead


# ----------------------------------------------------------------------------- kernels
def _fourier_kron_kernel(k_ref, x_ref, o_ref):
    """o = x @ K  with x:(bt, seq_len*d), K:(seq_len*d, nt), o:(bt, nt)."""
    x = x_ref[...].astype(jnp.float32)
    y = jnp.dot(x, k_ref[...], preferred_element_type=jnp.float32,
                precision=jax.lax.Precision.HIGHEST)
    o_ref[...] = y.astype(o_ref.dtype)


def _fourier_batched_kernel(h_ref, x_ref, o_ref):
    """Per-batch o[i] = H @ x[i]  with H:(out_len, seq_len), x:(bt, seq_len, d)."""
    h = h_ref[...]

    def body(i, carry):
        xi = x_ref[i].astype(jnp.float32)                           # (seq_len, d)
        yi = jnp.dot(h, xi, preferred_element_type=jnp.float32,
                     precision=jax.lax.Precision.HIGHEST)
        o_ref[i] = yi.astype(o_ref.dtype)
        return carry

    jax.lax.fori_loop(0, x_ref.shape[0], body, 0)


# ----------------------------------------------------------------------------- fused map
def _build_fused_map(seq_len, pred_len, dtype=jnp.float32):
    """H such that  irfft(rfft(x, axis=0)[:freq_num], n=out_len, axis=0) == H @ x."""
    out_len = seq_len + pred_len
    freq_num = seq_len // 2 + 1

    t = jnp.arange(seq_len, dtype=jnp.float32)
    k = jnp.arange(freq_num, dtype=jnp.float32)
    m = jnp.arange(out_len, dtype=jnp.float32)

    # Forward rDFT:  X_k = sum_t x_t * exp(-2i*pi*k*t/seq_len)
    ang_f = 2.0 * jnp.pi * k[:, None] * t[None, :] / seq_len            # (freq, seq)
    f_re = jnp.cos(ang_f)
    f_im = -jnp.sin(ang_f)

    # irfft with n=out_len of the (zero-padded) truncated spectrum:
    #   y_m = (1/out_len) * [ X_0 + 2 * sum_{k>=1} Re(X_k * exp(2i*pi*k*m/out_len)) ]
    w = jnp.where(k == 0, 1.0, 2.0)
    if 2 * (freq_num - 1) == out_len:            # only possible when pred_len == 0
        w = w.at[freq_num - 1].set(1.0)          # Nyquist bin of the output grid
    ang_g = 2.0 * jnp.pi * m[:, None] * k[None, :] / out_len            # (out, freq)
    g_c = jnp.cos(ang_g) * (w[None, :] / out_len)
    g_s = jnp.sin(ang_g) * (w[None, :] / out_len)

    h = g_c @ f_re - g_s @ f_im                                          # (out, seq)
    return h.astype(dtype)


# ----------------------------------------------------------------------------- tiling
def _pick_kron_tiles(batch, sd, od, x_itemsize, out_itemsize):
    """Tiles for the kron row formulation: (batch rows, output columns) per step."""
    # Output-column tile (lane axis): take all of `od` if the K tile stays small.
    if sd * od * 4 * 2 <= _VMEM_TILE_BUDGET // 2:
        nt = od
    else:
        nt = (_VMEM_TILE_BUDGET // 2) // (2 * sd * 4)
        nt = min(od, max(_LANE, (nt // _LANE) * _LANE))
    # Batch-row tile: second-to-last block dim -> multiple of 8, or the full batch.
    moved_per_row = sd * x_itemsize + nt * out_itemsize
    bt_vmem = max(1, (_VMEM_TILE_BUDGET // 2) // (2 * moved_per_row))
    bt_target = max(1, pl.cdiv(_TARGET_STEP_BYTES, moved_per_row))
    bt = min(bt_vmem, bt_target)
    if bt >= batch or batch <= _SUBLANE:
        bt = batch
    else:
        bt = max(_SUBLANE, (bt // _SUBLANE) * _SUBLANE)
    # Prefer >= 2 total grid steps so both v7x TensorCores get work.
    if pl.cdiv(batch, bt) * pl.cdiv(od, nt) < 2:
        if batch >= 2 * _SUBLANE:
            bt = max(_SUBLANE, (pl.cdiv(batch, 2) // _SUBLANE) * _SUBLANE)
        elif od >= 2 * _LANE:
            nt = max(_LANE, (pl.cdiv(od, 2) // _LANE) * _LANE)
    return bt, nt


def _pick_batch_tile(batch, seq_len, out_len, in_dim, x_itemsize, out_itemsize):
    """Batch tile for the 3-D-block path (in_dim >= 128)."""
    moved_per_batch = in_dim * (seq_len * x_itemsize + out_len * out_itemsize)
    bt_vmem = max(1, (_VMEM_TILE_BUDGET // 2) // (2 * moved_per_batch))
    bt_target = max(1, pl.cdiv(_TARGET_STEP_BYTES, moved_per_batch))
    bt = min(batch, bt_vmem, bt_target)
    if batch >= 2 and pl.cdiv(batch, bt) < 2:    # >= 2 grid steps for v7x megacore
        bt = pl.cdiv(batch, 2)
    return bt


# ----------------------------------------------------------------------------- forward
def neural_fourier_layer_forward(x_emb, *, seq_len, pred_len, force_pallas=False):
    """Pallas implementation of NeuralFourierLayer.forward(x_emb, mask=False)."""
    # TODO(synk): mask=True branch (per-(batch,channel) top-8 frequency-magnitude
    # masking before the irfft) is not implemented.
    batch, n, in_dim = x_emb.shape
    assert n == seq_len, "input sequence length must equal seq_len"
    out_len = seq_len + pred_len
    out_dtype = x_emb.dtype
    x_itemsize = jnp.dtype(x_emb.dtype).itemsize
    out_itemsize = jnp.dtype(out_dtype).itemsize

    h = _build_fused_map(seq_len, pred_len, dtype=jnp.float32)       # (out_len, seq_len)

    # Tiny problems: fixed pallas_call launch overhead dominates -> plain XLA.
    if not force_pallas and x_emb.size <= _TINY_FALLBACK_ELEMS:
        y = jnp.einsum("os,bsd->bod", h, x_emb.astype(jnp.float32),
                       precision=jax.lax.Precision.HIGHEST)
        return y.astype(out_dtype)

    sd = seq_len * in_dim
    od = out_len * in_dim
    use_kron = (in_dim < _LANE) and (sd * od * 4 <= _MAX_KRON_BYTES)

    if use_kron:
        # Transpose-free row formulation: y2 = x2 @ kron(H.T, I_d).
        # Both reshapes below are contiguous row-major -> no extra HBM passes.
        k_mat = jnp.kron(h.T, jnp.eye(in_dim, dtype=jnp.float32))    # (sd, od)
        x2 = x_emb.reshape(batch, sd)
        bt, nt = _pick_kron_tiles(batch, sd, od, x_itemsize, out_itemsize)
        grid = (pl.cdiv(batch, bt), pl.cdiv(od, nt))
        y2 = pl.pallas_call(
            _fourier_kron_kernel,
            out_shape=jax.ShapeDtypeStruct((batch, od), out_dtype),
            grid_spec=pltpu.PrefetchScalarGridSpec(
                num_scalar_prefetch=0,
                grid=grid,
                in_specs=[
                    pl.BlockSpec((sd, nt), lambda b, j: (0, j)),     # fused kron map
                    pl.BlockSpec((bt, sd), lambda b, j: (b, 0)),     # activation rows
                ],
                out_specs=pl.BlockSpec((bt, nt), lambda b, j: (b, j)),
            ),
            compiler_params=pltpu.CompilerParams(
                dimension_semantics=("parallel", "parallel"),
                vmem_limit_bytes=_VMEM_LIMIT_BYTES,
            ),
            cost_estimate=pl.CostEstimate(
                flops=2 * batch * sd * od,
                transcendentals=0,
                bytes_accessed=batch * (sd * x_itemsize + od * out_itemsize)
                + sd * od * 4,
            ),
        )(k_mat, x2)
        return y2.reshape(batch, out_len, in_dim)

    # in_dim >= 128 (or kron map too large): 3-D batch blocks in the caller layout.
    bt = _pick_batch_tile(batch, seq_len, out_len, in_dim, x_itemsize, out_itemsize)
    grid = (pl.cdiv(batch, bt),)
    y = pl.pallas_call(
        _fourier_batched_kernel,
        out_shape=jax.ShapeDtypeStruct((batch, out_len, in_dim), out_dtype),
        grid_spec=pltpu.PrefetchScalarGridSpec(
            num_scalar_prefetch=0,
            grid=grid,
            in_specs=[
                pl.BlockSpec((out_len, seq_len), lambda b: (0, 0)),          # H (const)
                pl.BlockSpec((bt, seq_len, in_dim), lambda b: (b, 0, 0)),    # x chunk
            ],
            out_specs=pl.BlockSpec((bt, out_len, in_dim), lambda b: (b, 0, 0)),
        ),
        compiler_params=pltpu.CompilerParams(
            dimension_semantics=("parallel",),
            vmem_limit_bytes=_VMEM_LIMIT_BYTES,
        ),
        cost_estimate=pl.CostEstimate(
            flops=2 * batch * out_len * seq_len * in_dim,
            transcendentals=0,
            bytes_accessed=batch * in_dim * (seq_len * x_itemsize + out_len * out_itemsize)
            + out_len * seq_len * 4,
        ),
    )(h, x_emb)
    return y


# ----------------------------------------------------------------------------- params
def init_parameters(key, in_dim, out_dim, seq_len):
    """Deterministic init matching the module's __init__ shapes.

    Note: these complex parameters are declared by the PyTorch module but never
    used in its forward pass; created only for shape fidelity.
    """
    freq_num = seq_len // 2 + 1
    fan_in = in_dim * out_dim
    bound = 1.0 / math.sqrt(fan_in)
    k1, k2, k3, k4 = jax.random.split(key, 4)
    weight = (jax.random.uniform(k1, (freq_num, in_dim, out_dim), minval=-bound, maxval=bound)
              + 1j * jax.random.uniform(k2, (freq_num, in_dim, out_dim), minval=-bound, maxval=bound)
              ).astype(jnp.complex64)
    bias = (jax.random.uniform(k3, (freq_num, out_dim), minval=-bound, maxval=bound)
            + 1j * jax.random.uniform(k4, (freq_num, out_dim), minval=-bound, maxval=bound)
            ).astype(jnp.complex64)
    return weight, bias


if __name__ == "__main__":
    key = jax.random.PRNGKey(0)
    seq_len, pred_len = 16, 8
    freq_num = seq_len // 2 + 1

    fwd = jax.jit(neural_fourier_layer_forward,
                  static_argnames=("seq_len", "pred_len", "force_pallas"))

    # --- case 1: in_dim < 128 -> kron(H, I) lane-dense row formulation ---------------
    batch, in_dim = 2, 32
    kx1, kp, kx2 = jax.random.split(key, 3)
    x1 = jax.random.normal(kx1, (batch, seq_len, in_dim), dtype=jnp.float32)
    weight, bias = init_parameters(kp, in_dim, in_dim, seq_len)    # unused in forward
    y1 = jax.block_until_ready(fwd(x1, seq_len=seq_len, pred_len=pred_len, force_pallas=True))
    y1_ref = jnp.fft.irfft(jnp.fft.rfft(x1, axis=1)[:, :freq_num],
                           n=seq_len + pred_len, axis=1)
    assert y1.shape == (batch, seq_len + pred_len, in_dim)
    assert jnp.allclose(y1, y1_ref, atol=1e-3, rtol=1e-3), "kron path mismatch vs FFT ref"

    # --- case 2: in_dim >= 128 -> direct 3-D batch-block path (caller layout) --------
    batch2, in_dim2 = 4, 128
    x2 = jax.random.normal(kx2, (batch2, seq_len, in_dim2), dtype=jnp.float32)
    y2 = jax.block_until_ready(fwd(x2, seq_len=seq_len, pred_len=pred_len, force_pallas=True))
    y2_ref = jnp.fft.irfft(jnp.fft.rfft(x2, axis=1)[:, :freq_num],
                           n=seq_len + pred_len, axis=1)
    assert y2.shape == (batch2, seq_len + pred_len, in_dim2)
    assert jnp.allclose(y2, y2_ref, atol=1e-3, rtol=1e-3), "batched path mismatch vs FFT ref"

    print("KERNEL_OK")
</pallas_src>

<mosaic_0001>
module attributes {stable_mosaic.version = 11 : i64} {
  func.func @_fourier_kron_kernel(%arg0: i32, %arg1: i32, %arg2: memref<512x384xf32, #tpu.memory_space<vmem>>, %arg3: memref<2x512xf32, #tpu.memory_space<vmem>>, %arg4: memref<2x384xf32, #tpu.memory_space<vmem>>) attributes {dimension_semantics = [#tpu.dimension_semantics<parallel>, #tpu.dimension_semantics<parallel>], iteration_bounds = array<i64: 1, 2>, scalar_prefetch = 0 : i64, scratch_operands = 0 : i64, tpu.core_type = #tpu.core_type<tc>, window_params = [{transform_indices = @transform_0, window_bounds = array<i64: 512, 384>}, {transform_indices = @transform_1, window_bounds = array<i64: 2, 512>}, {transform_indices = @transform_2, window_bounds = array<i64: 2, 384>}]} {
    %c0 = arith.constant 0 : index
    %c0_0 = arith.constant 0 : index
    %0 = vector.load %arg3[%c0, %c0_0] : memref<2x512xf32, #tpu.memory_space<vmem>>, vector<2x512xf32>
    %c0_1 = arith.constant 0 : index
    %c0_2 = arith.constant 0 : index
    %1 = vector.load %arg2[%c0_1, %c0_2] : memref<512x384xf32, #tpu.memory_space<vmem>>, vector<512x384xf32>
    %cst = arith.constant dense<0.000000e+00> : vector<2x384xf32>
    %2 = tpu.matmul %0, %1, %cst {dimension_numbers = #tpu.dot_dimension_numbers<[1], [0], [0], [1], [0, 0, 1, 1], [], []>, precision = #tpu.contract_precision<fp32>} : vector<2x512xf32>, vector<512x384xf32>, vector<2x384xf32> -> vector<2x384xf32>
    %c0_3 = arith.constant 0 : index
    %c0_4 = arith.constant 0 : index
    %3 = vector.load %arg4[%c0_3, %c0_4] : memref<2x384xf32, #tpu.memory_space<vmem>>, vector<2x384xf32>
    tpu.vector_store %arg4[%c0_3, %c0_4], %2 {strides = array<i32>} : memref<2x384xf32, #tpu.memory_space<vmem>>, vector<2x384xf32>,
    return
  }
  func.func @transform_0(%arg0: i32, %arg1: i32) -> (i32, i32) {
    %c0_i32 = arith.constant 0 : i32
    %c0_i32_0 = arith.constant 0 : i32
    return %c0_i32, %arg1 : i32, i32
  }
  func.func @transform_1(%arg0: i32, %arg1: i32) -> (i32, i32) {
    %c0_i32 = arith.constant 0 : i32
    %c0_i32_0 = arith.constant 0 : i32
    return %arg0, %c0_i32 : i32, i32
  }
  func.func @transform_2(%arg0: i32, %arg1: i32) -> (i32, i32) {
    %c0_i32 = arith.constant 0 : i32
    return %arg0, %arg1 : i32, i32
  }
}

</mosaic_0001>

<llo_original>
// kernel: neural_fourier_layer_forward.1
$region0: #{neural_fourier_layer_forward.1}
  #allocation0 [shape = 'u32[]', space=smem, size = 0x4, offset = 0x4, fixed_abs, tag = 'smem constant byte address 0x4 - core index']
  #allocation1 [shape = 'u32[144,128]{1,0:T(1,128)}', space=vmem, size = 0x12000, scoped, tag = 'internal scratch']
  %s0 = inlined_call_operand.vmem [shape: f32[512,768], index: 0, kind: input, shape index: {}]
  %s1 = inlined_call_operand.vmem [shape: f32[2,512], index: 1, kind: input, shape index: {}]
  %s2 = inlined_call_operand.vmem [shape: f32[2,768], index: 2, kind: output, shape index: {}]
  %s3 = sld [smem:[#allocation0]]
  $region64: #{neural_fourier_layer_forward.1} parent=0
    _
  %s5 = ssub.s32 1, %s3
  %s6 = scalar_select 0, %s5, %s3
  $region1: #{neural_fourier_layer_forward.1} parent=0
    #allocation2 [shape = 'u8[1572864]{0}', space=vmem, size = 0x180000, scoped, tag = 'input window, operand 0']
    loop: start=0, step=1, limit=4
    $region2: #{neural_fourier_layer_forward.1} parent=1 // loop_pre_header
      _
    $region3: #{neural_fourier_layer_forward.1} parent=1 // loop_header
      %s8 = sphi 0, %s12
      %p9 = scmp.ge.s32.totalorder %s8, 4
      %s15 = sphi 0, %s27
      %s16 = sphi 0, %s23
      %s17 = sphi 0, %s15
      %s18 = sphi 0, %s16
      %s19 = sphi 0, %s17
      %s20 = sphi 0, %s18
      %s30 = sphi 0, %s32
      %s33 = sphi 0, %s30
      %s34 = sphi 0, %s33
      %s50 = sphi 0, %s34
      %s56 = sphi 0, %s58
      %s59 = sphi 0, %s56
      %s60 = sphi 0, %s59
      %s76 = sphi 0, %s60
      %s84 = sphi 0, %s86
      %s87 = sphi 0, %s84
      %s88 = sphi 0, %s87
      %s104 = sphi 0, %s88
    $region4: #{neural_fourier_layer_forward.1} parent=1 // loop_header_branch
      %11 = sbr.rel (%p9) target = $region8
    $region5: #{neural_fourier_layer_forward.1} parent=1 // loop_body
      %s13 = ssub.s32 %s8, 1
      %s14 = ssub.s32 %s8, 2
      %s21 = sadd.s32 1, %s16
      %p22 = scmp.ge.s32.totalorder %s21, 2
      %s23 = scalar_select %p22, 0, %s21
      %s24 = sadd.s32 1, %s15
      %s25 = scalar_select %p22, %s24, %s15
      %p26 = scmp.ge.s32.totalorder %s25, 1
      %s27 = scalar_select %p26, 0, %s25
      %s28 = ssub.s32 %s16, %s23
      %p29 = scmp.eq.s32.totalorder %s28, 0
      %s31 = sadd.s32 %s30, 1
      %s32 = scalar_select %p29, %s30, %s31
      %p35 = pneg %p29
      %p36 = scmp.eq.s32.totalorder %s8, 1
      %p37 = por %p35, %p36
      %p38 = scmp.ne.s32.totalorder %s30, %s33
      %p39 = scmp.eq.s32.totalorder %s8, 0
      %p40 = por %p38, %p39
      %p41 = scmp.ne.s32.totalorder %s30, %s33
      %p42 = scmp.eq.s32.totalorder %s13, 1
      %p43 = por %p41, %p42
      %p44 = scmp.ne.s32.totalorder %s33, %s34
      %p45 = scmp.eq.s32.totalorder %s13, 0
      %p46 = por %p44, %p45
      %p47 = scmp.ne.s32.totalorder %s33, %s34
      %p48 = scmp.eq.s32.totalorder %s14, 1
      %p49 = por %p47, %p48
      %p51 = scmp.ne.s32.totalorder %s34, %s50
      %p52 = scmp.eq.s32.totalorder %s14, 0
      %p53 = por %p51, %p52
      %s54 = ssub.s32 %s15, %s27
      %p55 = scmp.eq.s32.totalorder %s54, 0
      %s57 = sadd.s32 %s56, 1
      %s58 = scalar_select %p55, %s56, %s57
      %p61 = pneg %p55
      %p62 = scmp.eq.s32.totalorder %s8, 1
      %p63 = por %p61, %p62
      %p64 = scmp.ne.s32.totalorder %s56, %s59
      %p65 = scmp.eq.s32.totalorder %s8, 0
      %p66 = por %p64, %p65
      %p67 = scmp.ne.s32.totalorder %s56, %s59
      %p68 = scmp.eq.s32.totalorder %s13, 1
      %p69 = por %p67, %p68
      %p70 = scmp.ne.s32.totalorder %s59, %s60
      %p71 = scmp.eq.s32.totalorder %s13, 0
      %p72 = por %p70, %p71
      %p73 = scmp.ne.s32.totalorder %s59, %s60
      %p74 = scmp.eq.s32.totalorder %s14, 1
      %p75 = por %p73, %p74
      %p77 = scmp.ne.s32.totalorder %s60, %s76
      %p78 = scmp.eq.s32.totalorder %s14, 0
      %p79 = por %p77, %p78
      %s80 = ssub.s32 %s15, %s27
      %s81 = ssub.s32 %s16, %s23
      %s82 = sor.u32 %s80, %s81
      %p83 = scmp.eq.s32.totalorder %s82, 0
      %s85 = sadd.s32 %s84, 1
      %s86 = scalar_select %p83, %s84, %s85
      %p89 = pneg %p83
      %p90 = scmp.eq.s32.totalorder %s8, 1
      %p91 = por %p89, %p90
      %p92 = scmp.ne.s32.totalorder %s84, %s87
      %p93 = scmp.eq.s32.totalorder %s8, 0
      %p94 = por %p92, %p93
      %p95 = scmp.ne.s32.totalorder %s84, %s87
      %p96 = scmp.eq.s32.totalorder %s13, 1
      %p97 = por %p95, %p96
      %p98 = scmp.ne.s32.totalorder %s87, %s88
      %p99 = scmp.eq.s32.totalorder %s13, 0
      %p100 = por %p98, %p99
      %p101 = scmp.ne.s32.totalorder %s87, %s88
      %p102 = scmp.eq.s32.totalorder %s14, 1
      %p103 = por %p101, %p102
      %p105 = scmp.ne.s32.totalorder %s88, %s104
      %p106 = scmp.eq.s32.totalorder %s14, 0
      %p107 = por %p105, %p106
      %p108 = scmp.le.s32.totalorder 1, %s8
      %p109 = scmp.lt.s32.totalorder %s8, 3
      %p110 = pnand %p108, %p109
      %p111 = pneg %p110
      // Predicated region
      $region9: #{neural_fourier_layer_forward.1} parent=5 // pred_check
        _
      $region10: #{neural_fourier_layer_forward.1} parent=5 // pred_check_branch
        %113 = sbr.rel (%p110) target = $region12
      $region11: #{neural_fourier_layer_forward.1} parent=5 // pred_region
        %s114 = ssub.s32 %s8, 1
        // Predicated region
        $region13: #{neural_fourier_layer_forward.1} parent=11 // pred_check
          %p115 = pneg %p72
        $region14: #{neural_fourier_layer_forward.1} parent=11 // pred_check_branch
          %117 = sbr.rel (%p115) target = $region16
        $region15: #{neural_fourier_layer_forward.1} parent=11 // pred_region
          %p118 = scmp.lt.s32.totalorder %s17, 0
          %s119 = scalar_select %p118, %s17, 0
          %s120 = smul.addr %s119, 4
          %s121 = smul.addr %s120, 2
          %s122 = scalar_lea.vmem %s1, %s121
        $region16: #{neural_fourier_layer_forward.1} parent=11 // pred_fallthru
          _
      $region12: #{neural_fourier_layer_forward.1} parent=5 // pred_fallthru
        _
      %p123 = scmp.lt.s32.totalorder %s8, 2
      // Predicated region
      $region17: #{neural_fourier_layer_forward.1} parent=5 // pred_check
        %p124 = pneg %p123
      $region18: #{neural_fourier_layer_forward.1} parent=5 // pred_check_branch
        %126 = sbr.rel (%p124) target = $region20
      $region19: #{neural_fourier_layer_forward.1} parent=5 // pred_region
        // Predicated region
        $region21: #{neural_fourier_layer_forward.1} parent=19 // pred_check
          %p127 = pneg %p40
        $region22: #{neural_fourier_layer_forward.1} parent=19 // pred_check_branch
          %129 = sbr.rel (%p127) target = $region24
        $region23: #{neural_fourier_layer_forward.1} parent=19 // pred_region
          %s130 = sand.u32 %s30, 1
          %s131 = sand.u32 %s30, 1
          %s132 = smul.addr %s131, 1536
          %s133 = scalar_lea.vmem [#allocation2], %s132
          %s134 = smul.u32 3, %s16
          %s135 = smul.addr %s134, 8
          %s136 = scalar_lea.vmem %s0, %s135
          // Predicated region
          $region25: #{neural_fourier_layer_forward.1} parent=23 // pred_check
            _
          $region26: #{neural_fourier_layer_forward.1} parent=23 // pred_check_branch
            %138 = sbr.rel (0) target = $region28
          $region27: #{neural_fourier_layer_forward.1} parent=23 // pred_region
            // Predicated region
            $region29: #{neural_fourier_layer_forward.1} parent=27 // pred_check
              _
            $region30: #{neural_fourier_layer_forward.1} parent=27 // pred_check_branch
              %140 = sbr.rel (0) target = $region32
            $region31: #{neural_fourier_layer_forward.1} parent=27 // pred_region
              loop: start=0, step=1, limit=1
              $region33: #{neural_fourier_layer_forward.1} parent=31 // loop_pre_header
                _
              $region34: #{neural_fourier_layer_forward.1} parent=31 // loop_header
                %s142 = sphi 0, %s146
                %p143 = scmp.ge.s32.totalorder %s142, 1
                %s147 = sphi %s136, %s136
                %s148 = sphi %s133, %s133
              $region35: #{neural_fourier_layer_forward.1} parent=31 // loop_header_branch
                %145 = sbr.rel (%p143) target = $region39
              $region36: #{neural_fourier_layer_forward.1} parent=31 // loop_body
                %v149 = vld [vmem:[%s147] sm:$0xff]
                %150 = vst [vmem:[%s148] sm:$0xff] %v149
                %v151 = vld [vmem:[%s147 + $0x8] sm:$0xff]
                %152 = vst [vmem:[%s148 + $0x8] sm:$0xff] %v151
                %v153 = vld [vmem:[%s147 + $0x10] sm:$0xff]
                %154 = vst [vmem:[%s148 + $0x10] sm:$0xff] %v153
                %v155 = vld [vmem:[%s147 + $0x30] sm:$0xff]
                %156 = vst [vmem:[%s148 + $0x18] sm:$0xff] %v155
                %v157 = vld [vmem:[%s147 + $0x38] sm:$0xff]
                %158 = vst [vmem:[%s148 + $0x20] sm:$0xff] %v157
                %v159 = vld [vmem:[%s147 + $0x40] sm:$0xff]
                %160 = vst [vmem:[%s148 + $0x28] sm:$0xff] %v159
                %v161 = vld [vmem:[%s147 + $0x60] sm:$0xff]
                %162 = vst [vmem:[%s148 + $0x30] sm:$0xff] %v161
                %v163 = vld [vmem:[%s147 + $0x68] sm:$0xff]
                %164 = vst [vmem:[%s148 + $0x38] sm:$0xff] %v163
                %v165 = vld [vmem:[%s147 + $0x70] sm:$0xff]
                %166 = vst [vmem:[%s148 + $0x40] sm:$0xff] %v165
                %v167 = vld [vmem:[%s147 + $0x90] sm:$0xff]
                %168 = vst [vmem:[%s148 + $0x48] sm:$0xff] %v167
                %v169 = vld [vmem:[%s147 + $0x98] sm:$0xff]
                %170 = vst [vmem:[%s148 + $0x50] sm:$0xff] %v169
                %v171 = vld [vmem:[%s147 + $0xa0] sm:$0xff]
                %172 = vst [vmem:[%s148 + $0x58] sm:$0xff] %v171
                %v173 = vld [vmem:[%s147 + $0xc0] sm:$0xff]
                %174 = vst [vmem:[%s148 + $0x60] sm:$0xff] %v173
                %v175 = vld [vmem:[%s147 + $0xc8] sm:$0xff]
                %176 = vst [vmem:[%s148 + $0x68] sm:$0xff] %v175
                %v177 = vld [vmem:[%s147 + $0xd0] sm:$0xff]
                %178 = vst [vmem:[%s148 + $0x70] sm:$0xff] %v177
                %v179 = vld [vmem:[%s147 + $0xf0] sm:$0xff]
                %180 = vst [vmem:[%s148 + $0x78] sm:$0xff] %v179
                %v181 = vld [vmem:[%s147 + $0xf8] sm:$0xff]
                %182 = vst [vmem:[%s148 + $0x80] sm:$0xff] %v181
                %v183 = vld [vmem:[%s147 + $0x100] sm:$0xff]
                %184 = vst [vmem:[%s148 + $0x88] sm:$0xff] %v183
                %v185 = vld [vmem:[%s147 + $0x120] sm:$0xff]
                %186 = vst [vmem:[%s148 + $0x90] sm:$0xff] %v185
                %v187 = vld [vmem:[%s147 + $0x128] sm:$0xff]
                %188 = vst [vmem:[%s148 + $0x98] sm:$0xff] %v187
                %v189 = vld [vmem:[%s147 + $0x130] sm:$0xff]
                %190 = vst [vmem:[%s148 + $0xa0] sm:$0xff] %v189
                %v191 = vld [vmem:[%s147 + $0x150] sm:$0xff]
                %192 = vst [vmem:[%s148 + $0xa8] sm:$0xff] %v191
                %v193 = vld [vmem:[%s147 + $0x158] sm:$0xff]
                %194 = vst [vmem:[%s148 + $0xb0] sm:$0xff] %v193
                %v195 = vld [vmem:[%s147 + $0x160] sm:$0xff]
                %196 = vst [vmem:[%s148 + $0xb8] sm:$0xff] %v195
                %v197 = vld [vmem:[%s147 + $0x180] sm:$0xff]
                %198 = vst [vmem:[%s148 + $0xc0] sm:$0xff] %v197
                %v199 = vld [vmem:[%s147 + $0x188] sm:$0xff]
                %200 = vst [vmem:[%s148 + $0xc8] sm:$0xff] %v199
                %v201 = vld [vmem:[%s147 + $0x190] sm:$0xff]
                %202 = vst [vmem:[%s148 + $0xd0] sm:$0xff] %v201
                %v203 = vld [vmem:[%s147 + $0x1b0] sm:$0xff]
                %204 = vst [vmem:[%s148 + $0xd8] sm:$0xff] %v203
                %v205 = vld [vmem:[%s147 + $0x1b8] sm:$0xff]
                %206 = vst [vmem:[%s148 + $0xe0] sm:$0xff] %v205
                %v207 = vld [vmem:[%s147 + $0x1c0] sm:$0xff]
                %208 = vst [vmem:[%s148 + $0xe8] sm:$0xff] %v207
                %v209 = vld [vmem:[%s147 + $0x1e0] sm:$0xff]
                %210 = vst [vmem:[%s148 + $0xf0] sm:$0xff] %v209
                %v211 = vld [vmem:[%s147 + $0x1e8] sm:$0xff]
                %212 = vst [vmem:[%s148 + $0xf8] sm:$0xff] %v211
                %v213 = vld [vmem:[%s147 + $0x1f0] sm:$0xff]
                %214 = vst [vmem:[%s148 + $0x100] sm:$0xff] %v213
                %v215 = vld [vmem:[%s147 + $0x210] sm:$0xff]
                %216 = vst [vmem:[%s148 + $0x108] sm:$0xff] %v215
                %v217 = vld [vmem:[%s147 + $0x218] sm:$0xff]
                %218 = vst [vmem:[%s148 + $0x110] sm:$0xff] %v217
                %v219 = vld [vmem:[%s147 + $0x220] sm:$0xff]
                %220 = vst [vmem:[%s148 + $0x118] sm:$0xff] %v219
                %v221 = vld [vmem:[%s147 + $0x240] sm:$0xff]
                %222 = vst [vmem:[%s148 + $0x120] sm:$0xff] %v221
                %v223 = vld [vmem:[%s147 + $0x248] sm:$0xff]
                %224 = vst [vmem:[%s148 + $0x128] sm:$0xff] %v223
                %v225 = vld [vmem:[%s147 + $0x250] sm:$0xff]
                %226 = vst [vmem:[%s148 + $0x130] sm:$0xff] %v225
                %v227 = vld [vmem:[%s147 + $0x270] sm:$0xff]
                %228 = vst [vmem:[%s148 + $0x138] sm:$0xff] %v227
                %v229 = vld [vmem:[%s147 + $0x278] sm:$0xff]
                %230 = vst [vmem:[%s148 + $0x140] sm:$0xff] %v229
                %v231 = vld [vmem:[%s147 + $0x280] sm:$0xff]
                %232 = vst [vmem:[%s148 + $0x148] sm:$0xff] %v231
                %v233 = vld [vmem:[%s147 + $0x2a0] sm:$0xff]
                %234 = vst [vmem:[%s148 + $0x150] sm:$0xff] %v233
                %v235 = vld [vmem:[%s147 + $0x2a8] sm:$0xff]
                %236 = vst [vmem:[%s148 + $0x158] sm:$0xff] %v235
                %v237 = vld [vmem:[%s147 + $0x2b0] sm:$0xff]
                %238 = vst [vmem:[%s148 + $0x160] sm:$0xff] %v237
                %v239 = vld [vmem:[%s147 + $0x2d0] sm:$0xff]
                %240 = vst [vmem:[%s148 + $0x168] sm:$0xff] %v239
                %v241 = vld [vmem:[%s147 + $0x2d8] sm:$0xff]
                %242 = vst [vmem:[%s148 + $0x170] sm:$0xff] %v241
                %v243 = vld [vmem:[%s147 + $0x2e0] sm:$0xff]
                %244 = vst [vmem:[%s148 + $0x178] sm:$0xff] %v243
                %v245 = vld [vmem:[%s147 + $0x300] sm:$0xff]
                %246 = vst [vmem:[%s148 + $0x180] sm:$0xff] %v245
                %v247 = vld [vmem:[%s147 + $0x308] sm:$0xff]
                %248 = vst [vmem:[%s148 + $0x188] sm:$0xff] %v247
                %v249 = vld [vmem:[%s147 + $0x310] sm:$0xff]
                %250 = vst [vmem:[%s148 + $0x190] sm:$0xff] %v249
                %v251 = vld [vmem:[%s147 + $0x330] sm:$0xff]
                %252 = vst [vmem:[%s148 + $0x198] sm:$0xff] %v251
                %v253 = vld [vmem:[%s147 + $0x338] sm:$0xff]
                %254 = vst [vmem:[%s148 + $0x1a0] sm:$0xff] %v253
                %v255 = vld [vmem:[%s147 + $0x340] sm:$0xff]
                %256 = vst [vmem:[%s148 + $0x1a8] sm:$0xff] %v255
                %v257 = vld [vmem:[%s147 + $0x360] sm:$0xff]
                %258 = vst [vmem:[%s148 + $0x1b0] sm:$0xff] %v257
                %v259 = vld [vmem:[%s147 + $0x368] sm:$0xff]
                %260 = vst [vmem:[%s148 + $0x1b8] sm:$0xff] %v259
                %v261 = vld [vmem:[%s147 + $0x370] sm:$0xff]
                %262 = vst [vmem:[%s148 + $0x1c0] sm:$0xff] %v261
                %v263 = vld [vmem:[%s147 + $0x390] sm:$0xff]
                %264 = vst [vmem:[%s148 + $0x1c8] sm:$0xff] %v263
                %v265 = vld [vmem:[%s147 + $0x398] sm:$0xff]
                %266 = vst [vmem:[%s148 + $0x1d0] sm:$0xff] %v265
                %v267 = vld [vmem:[%s147 + $0x3a0] sm:$0xff]
                %268 = vst [vmem:[%s148 + $0x1d8] sm:$0xff] %v267
                %v269 = vld [vmem:[%s147 + $0x3c0] sm:$0xff]
                %270 = vst [vmem:[%s148 + $0x1e0] sm:$0xff] %v269
                %v271 = vld [vmem:[%s147 + $0x3c8] sm:$0xff]
                %272 = vst [vmem:[%s148 + $0x1e8] sm:$0xff] %v271
                %v273 = vld [vmem:[%s147 + $0x3d0] sm:$0xff]
                %274 = vst [vmem:[%s148 + $0x1f0] sm:$0xff] %v273
                %v275 = vld [vmem:[%s147 + $0x3f0] sm:$0xff]
                %276 = vst [vmem:[%s148 + $0x1f8] sm:$0xff] %v275
                %v277 = vld [vmem:[%s147 + $0x3f8] sm:$0xff]
                %278 = vst [vmem:[%s148 + $0x200] sm:$0xff] %v277
                %v279 = vld [vmem:[%s147 + $0x400] sm:$0xff]
                %280 = vst [vmem:[%s148 + $0x208] sm:$0xff] %v279
                %v281 = vld [vmem:[%s147 + $0x420] sm:$0xff]
                %282 = vst [vmem:[%s148 + $0x210] sm:$0xff] %v281
                %v283 = vld [vmem:[%s147 + $0x428] sm:$0xff]
                %284 = vst [vmem:[%s148 + $0x218] sm:$0xff] %v283
                %v285 = vld [vmem:[%s147 + $0x430] sm:$0xff]
                %286 = vst [vmem:[%s148 + $0x220] sm:$0xff] %v285
                %v287 = vld [vmem:[%s147 + $0x450] sm:$0xff]
                %288 = vst [vmem:[%s148 + $0x228] sm:$0xff] %v287
                %v289 = vld [vmem:[%s147 + $0x458] sm:$0xff]
                %290 = vst [vmem:[%s148 + $0x230] sm:$0xff] %v289
                %v291 = vld [vmem:[%s147 + $0x460] sm:$0xff]
                %292 = vst [vmem:[%s148 + $0x238] sm:$0xff] %v291
                %v293 = vld [vmem:[%s147 + $0x480] sm:$0xff]
                %294 = vst [vmem:[%s148 + $0x240] sm:$0xff] %v293
                %v295 = vld [vmem:[%s147 + $0x488] sm:$0xff]
                %296 = vst [vmem:[%s148 + $0x248] sm:$0xff] %v295
                %v297 = vld [vmem:[%s147 + $0x490] sm:$0xff]
                %298 = vst [vmem:[%s148 + $0x250] sm:$0xff] %v297
                %v299 = vld [vmem:[%s147 + $0x4b0] sm:$0xff]
                %300 = vst [vmem:[%s148 + $0x258] sm:$0xff] %v299
                %v301 = vld [vmem:[%s147 + $0x4b8] sm:$0xff]
                %302 = vst [vmem:[%s148 + $0x260] sm:$0xff] %v301
                %v303 = vld [vmem:[%s147 + $0x4c0] sm:$0xff]
                %304 = vst [vmem:[%s148 + $0x268] sm:$0xff] %v303
                %v305 = vld [vmem:[%s147 + $0x4e0] sm:$0xff]
                %306 = vst [vmem:[%s148 + $0x270] sm:$0xff] %v305
                %v307 = vld [vmem:[%s147 + $0x4e8] sm:$0xff]
                %308 = vst [vmem:[%s148 + $0x278] sm:$0xff] %v307
                %v309 = vld [vmem:[%s147 + $0x4f0] sm:$0xff]
                %310 = vst [vmem:[%s148 + $0x280] sm:$0xff] %v309
                %v311 = vld [vmem:[%s147 + $0x510] sm:$0xff]
                %312 = vst [vmem:[%s148 + $0x288] sm:$0xff] %v311
                %v313 = vld [vmem:[%s147 + $0x518] sm:$0xff]
                %314 = vst [vmem:[%s148 + $0x290] sm:$0xff] %v313
                %v315 = vld [vmem:[%s147 + $0x520] sm:$0xff]
                %316 = vst [vmem:[%s148 + $0x298] sm:$0xff] %v315
                %v317 = vld [vmem:[%s147 + $0x540] sm:$0xff]
                %318 = vst [vmem:[%s148 + $0x2a0] sm:$0xff] %v317
                %v319 = vld [vmem:[%s147 + $0x548] sm:$0xff]
                %320 = vst [vmem:[%s148 + $0x2a8] sm:$0xff] %v319
                %v321 = vld [vmem:[%s147 + $0x550] sm:$0xff]
                %322 = vst [vmem:[%s148 + $0x2b0] sm:$0xff] %v321
                %v323 = vld [vmem:[%s147 + $0x570] sm:$0xff]
                %324 = vst [vmem:[%s148 + $0x2b8] sm:$0xff] %v323
                %v325 = vld [vmem:[%s147 + $0x578] sm:$0xff]
                %326 = vst [vmem:[%s148 + $0x2c0] sm:$0xff] %v325
                %v327 = vld [vmem:[%s147 + $0x580] sm:$0xff]
                %328 = vst [vmem:[%s148 + $0x2c8] sm:$0xff] %v327
                %v329 = vld [vmem:[%s147 + $0x5a0] sm:$0xff]
                %330 = vst [vmem:[%s148 + $0x2d0] sm:$0xff] %v329
                %v331 = vld [vmem:[%s147 + $0x5a8] sm:$0xff]
                %332 = vst [vmem:[%s148 + $0x2d8] sm:$0xff] %v331
                %v333 = vld [vmem:[%s147 + $0x5b0] sm:$0xff]
                %334 = vst [vmem:[%s148 + $0x2e0] sm:$0xff] %v333
                %v335 = vld [vmem:[%s147 + $0x5d0] sm:$0xff]
                %336 = vst [vmem:[%s148 + $0x2e8] sm:$0xff] %v335
                %v337 = vld [vmem:[%s147 + $0x5d8] sm:$0xff]
                %338 = vst [vmem:[%s148 + $0x2f0] sm:$0xff] %v337
                %v339 = vld [vmem:[%s147 + $0x5e0] sm:$0xff]
                %340 = vst [vmem:[%s148 + $0x2f8] sm:$0xff] %v339
                %v341 = vld [vmem:[%s147 + $0x600] sm:$0xff]
                %342 = vst [vmem:[%s148 + $0x300] sm:$0xff] %v341
                %v343 = vld [vmem:[%s147 + $0x608] sm:$0xff]
                %344 = vst [vmem:[%s148 + $0x308] sm:$0xff] %v343
                %v345 = vld [vmem:[%s147 + $0x610] sm:$0xff]
                %346 = vst [vmem:[%s148 + $0x310] sm:$0xff] %v345
                %v347 = vld [vmem:[%s147 + $0x630] sm:$0xff]
                %348 = vst [vmem:[%s148 + $0x318] sm:$0xff] %v347
                %v349 = vld [vmem:[%s147 + $0x638] sm:$0xff]
                %350 = vst [vmem:[%s148 + $0x320] sm:$0xff] %v349
                %v351 = vld [vmem:[%s147 + $0x640] sm:$0xff]
                %352 = vst [vmem:[%s148 + $0x328] sm:$0xff] %v351
                %v353 = vld [vmem:[%s147 + $0x660] sm:$0xff]
                %354 = vst [vmem:[%s148 + $0x330] sm:$0xff] %v353
                %v355 = vld [vmem:[%s147 + $0x668] sm:$0xff]
                %356 = vst [vmem:[%s148 + $0x338] sm:$0xff] %v355
                %v357 = vld [vmem:[%s147 + $0x670] sm:$0xff]
                %358 = vst [vmem:[%s148 + $0x340] sm:$0xff] %v357
                %v359 = vld [vmem:[%s147 + $0x690] sm:$0xff]
                %360 = vst [vmem:[%s148 + $0x348] sm:$0xff] %v359
                %v361 = vld [vmem:[%s147 + $0x698] sm:$0xff]
                %362 = vst [vmem:[%s148 + $0x350] sm:$0xff] %v361
                %v363 = vld [vmem:[%s147 + $0x6a0] sm:$0xff]
                %364 = vst [vmem:[%s148 + $0x358] sm:$0xff] %v363
                %v365 = vld [vmem:[%s147 + $0x6c0] sm:$0xff]
                %366 = vst [vmem:[%s148 + $0x360] sm:$0xff] %v365
                %v367 = vld [vmem:[%s147 + $0x6c8] sm:$0xff]
                %368 = vst [vmem:[%s148 + $0x368] sm:$0xff] %v367
                %v369 = vld [vmem:[%s147 + $0x6d0] sm:$0xff]
                %370 = vst [vmem:[%s148 + $0x370] sm:$0xff] %v369
                %v371 = vld [vmem:[%s147 + $0x6f0] sm:$0xff]
                %372 = vst [vmem:[%s148 + $0x378] sm:$0xff] %v371
                %v373 = vld [vmem:[%s147 + $0x6f8] sm:$0xff]
                %374 = vst [vmem:[%s148 + $0x380] sm:$0xff] %v373
                %v375 = vld [vmem:[%s147 + $0x700] sm:$0xff]
                %376 = vst [vmem:[%s148 + $0x388] sm:$0xff] %v375
                %v377 = vld [vmem:[%s147 + $0x720] sm:$0xff]
                %378 = vst [vmem:[%s148 + $0x390] sm:$0xff] %v377
                %v379 = vld [vmem:[%s147 + $0x728] sm:$0xff]
                %380 = vst [vmem:[%s148 + $0x398] sm:$0xff] %v379
                %v381 = vld [vmem:[%s147 + $0x730] sm:$0xff]
                %382 = vst [vmem:[%s148 + $0x3a0] sm:$0xff] %v381
                %v383 = vld [vmem:[%s147 + $0x750] sm:$0xff]
                %384 = vst [vmem:[%s148 + $0x3a8] sm:$0xff] %v383
                %v385 = vld [vmem:[%s147 + $0x758] sm:$0xff]
                %386 = vst [vmem:[%s148 + $0x3b0] sm:$0xff] %v385
                %v387 = vld [vmem:[%s147 + $0x760] sm:$0xff]
                %388 = vst [vmem:[%s148 + $0x3b8] sm:$0xff] %v387
                %v389 = vld [vmem:[%s147 + $0x780] sm:$0xff]
                %390 = vst [vmem:[%s148 + $0x3c0] sm:$0xff] %v389
                %v391 = vld [vmem:[%s147 + $0x788] sm:$0xff]
                %392 = vst [vmem:[%s148 + $0x3c8] sm:$0xff] %v391
                %v393 = vld [vmem:[%s147 + $0x790] sm:$0xff]
                %394 = vst [vmem:[%s148 + $0x3d0] sm:$0xff] %v393
                %v395 = vld [vmem:[%s147 + $0x7b0] sm:$0xff]
                %396 = vst [vmem:[%s148 + $0x3d8] sm:$0xff] %v395
                %v397 = vld [vmem:[%s147 + $0x7b8] sm:$0xff]
                %398 = vst [vmem:[%s148 + $0x3e0] sm:$0xff] %v397
                %v399 = vld [vmem:[%s147 + $0x7c0] sm:$0xff]
                %400 = vst [vmem:[%s148 + $0x3e8] sm:$0xff] %v399
                %v401 = vld [vmem:[%s147 + $0x7e0] sm:$0xff]
                %402 = vst [vmem:[%s148 + $0x3f0] sm:$0xff] %v401
                %v403 = vld [vmem:[%s147 + $0x7e8] sm:$0xff]
                %404 = vst [vmem:[%s148 + $0x3f8] sm:$0xff] %v403
                %v405 = vld [vmem:[%s147 + $0x7f0] sm:$0xff]
                %406 = vst [vmem:[%s148 + $0x400] sm:$0xff] %v405
                %v407 = vld [vmem:[%s147 + $0x810] sm:$0xff]
                %408 = vst [vmem:[%s148 + $0x408] sm:$0xff] %v407
                %v409 = vld [vmem:[%s147 + $0x818] sm:$0xff]
                %410 = vst [vmem:[%s148 + $0x410] sm:$0xff] %v409
                %v411 = vld [vmem:[%s147 + $0x820] sm:$0xff]
                %412 = vst [vmem:[%s148 + $0x418] sm:$0xff] %v411
                %v413 = vld [vmem:[%s147 + $0x840] sm:$0xff]
                %414 = vst [vmem:[%s148 + $0x420] sm:$0xff] %v413
                %v415 = vld [vmem:[%s147 + $0x848] sm:$0xff]
                %416 = vst [vmem:[%s148 + $0x428] sm:$0xff] %v415
                %v417 = vld [vmem:[%s147 + $0x850] sm:$0xff]
                %418 = vst [vmem:[%s148 + $0x430] sm:$0xff] %v417
                %v419 = vld [vmem:[%s147 + $0x870] sm:$0xff]
                %420 = vst [vmem:[%s148 + $0x438] sm:$0xff] %v419
                %v421 = vld [vmem:[%s147 + $0x878] sm:$0xff]
                %422 = vst [vmem:[%s148 + $0x440] sm:$0xff] %v421
                %v423 = vld [vmem:[%s147 + $0x880] sm:$0xff]
                %424 = vst [vmem:[%s148 + $0x448] sm:$0xff] %v423
                %v425 = vld [vmem:[%s147 + $0x8a0] sm:$0xff]
                %426 = vst [vmem:[%s148 + $0x450] sm:$0xff] %v425
                %v427 = vld [vmem:[%s147 + $0x8a8] sm:$0xff]
                %428 = vst [vmem:[%s148 + $0x458] sm:$0xff] %v427
                %v429 = vld [vmem:[%s147 + $0x8b0] sm:$0xff]
                %430 = vst [vmem:[%s148 + $0x460] sm:$0xff] %v429
                %v431 = vld [vmem:[%s147 + $0x8d0] sm:$0xff]
                %432 = vst [vmem:[%s148 + $0x468] sm:$0xff] %v431
                %v433 = vld [vmem:[%s147 + $0x8d8] sm:$0xff]
                %434 = vst [vmem:[%s148 + $0x470] sm:$0xff] %v433
                %v435 = vld [vmem:[%s147 + $0x8e0] sm:$0xff]
                %436 = vst [vmem:[%s148 + $0x478] sm:$0xff] %v435
                %v437 = vld [vmem:[%s147 + $0x900] sm:$0xff]
                %438 = vst [vmem:[%s148 + $0x480] sm:$0xff] %v437
                %v439 = vld [vmem:[%s147 + $0x908] sm:$0xff]
                %440 = vst [vmem:[%s148 + $0x488] sm:$0xff] %v439
                %v441 = vld [vmem:[%s147 + $0x910] sm:$0xff]
                %442 = vst [vmem:[%s148 + $0x490] sm:$0xff] %v441
                %v443 = vld [vmem:[%s147 + $0x930] sm:$0xff]
                %444 = vst [vmem:[%s148 + $0x498] sm:$0xff] %v443
                %v445 = vld [vmem:[%s147 + $0x938] sm:$0xff]
                %446 = vst [vmem:[%s148 + $0x4a0] sm:$0xff] %v445
                %v447 = vld [vmem:[%s147 + $0x940] sm:$0xff]
                %448 = vst [vmem:[%s148 + $0x4a8] sm:$0xff] %v447
                %v449 = vld [vmem:[%s147 + $0x960] sm:$0xff]
                %450 = vst [vmem:[%s148 + $0x4b0] sm:$0xff] %v449
                %v451 = vld [vmem:[%s147 + $0x968] sm:$0xff]
                %452 = vst [vmem:[%s148 + $0x4b8] sm:$0xff] %v451
                %v453 = vld [vmem:[%s147 + $0x970] sm:$0xff]
                %454 = vst [vmem:[%s148 + $0x4c0] sm:$0xff] %v453
                %v455 = vld [vmem:[%s147 + $0x990] sm:$0xff]
                %456 = vst [vmem:[%s148 + $0x4c8] sm:$0xff] %v455
                %v457 = vld [vmem:[%s147 + $0x998] sm:$0xff]
                %458 = vst [vmem:[%s148 + $0x4d0] sm:$0xff] %v457
                %v459 = vld [vmem:[%s147 + $0x9a0] sm:$0xff]
                %460 = vst [vmem:[%s148 + $0x4d8] sm:$0xff] %v459
                %v461 = vld [vmem:[%s147 + $0x9c0] sm:$0xff]
                %462 = vst [vmem:[%s148 + $0x4e0] sm:$0xff] %v461
                %v463 = vld [vmem:[%s147 + $0x9c8] sm:$0xff]
                %464 = vst [vmem:[%s148 + $0x4e8] sm:$0xff] %v463
                %v465 = vld [vmem:[%s147 + $0x9d0] sm:$0xff]
                %466 = vst [vmem:[%s148 + $0x4f0] sm:$0xff] %v465
                %v467 = vld [vmem:[%s147 + $0x9f0] sm:$0xff]
                %468 = vst [vmem:[%s148 + $0x4f8] sm:$0xff] %v467
                %v469 = vld [vmem:[%s147 + $0x9f8] sm:$0xff]
                %470 = vst [vmem:[%s148 + $0x500] sm:$0xff] %v469
                %v471 = vld [vmem:[%s147 + $0xa00] sm:$0xff]
                %472 = vst [vmem:[%s148 + $0x508] sm:$0xff] %v471
                %v473 = vld [vmem:[%s147 + $0xa20] sm:$0xff]
                %474 = vst [vmem:[%s148 + $0x510] sm:$0xff] %v473
                %v475 = vld [vmem:[%s147 + $0xa28] sm:$0xff]
                %476 = vst [vmem:[%s148 + $0x518] sm:$0xff] %v475
                %v477 = vld [vmem:[%s147 + $0xa30] sm:$0xff]
                %478 = vst [vmem:[%s148 + $0x520] sm:$0xff] %v477
                %v479 = vld [vmem:[%s147 + $0xa50] sm:$0xff]
                %480 = vst [vmem:[%s148 + $0x528] sm:$0xff] %v479
                %v481 = vld [vmem:[%s147 + $0xa58] sm:$0xff]
                %482 = vst [vmem:[%s148 + $0x530] sm:$0xff] %v481
                %v483 = vld [vmem:[%s147 + $0xa60] sm:$0xff]
                %484 = vst [vmem:[%s148 + $0x538] sm:$0xff] %v483
                %v485 = vld [vmem:[%s147 + $0xa80] sm:$0xff]
                %486 = vst [vmem:[%s148 + $0x540] sm:$0xff] %v485
                %v487 = vld [vmem:[%s147 + $0xa88] sm:$0xff]
                %488 = vst [vmem:[%s148 + $0x548] sm:$0xff] %v487
                %v489 = vld [vmem:[%s147 + $0xa90] sm:$0xff]
                %490 = vst [vmem:[%s148 + $0x550] sm:$0xff] %v489
                %v491 = vld [vmem:[%s147 + $0xab0] sm:$0xff]
                %492 = vst [vmem:[%s148 + $0x558] sm:$0xff] %v491
                %v493 = vld [vmem:[%s147 + $0xab8] sm:$0xff]
                %494 = vst [vmem:[%s148 + $0x560] sm:$0xff] %v493
                %v495 = vld [vmem:[%s147 + $0xac0] sm:$0xff]
                %496 = vst [vmem:[%s148 + $0x568] sm:$0xff] %v495
                %v497 = vld [vmem:[%s147 + $0xae0] sm:$0xff]
                %498 = vst [vmem:[%s148 + $0x570] sm:$0xff] %v497
                %v499 = vld [vmem:[%s147 + $0xae8] sm:$0xff]
                %500 = vst [vmem:[%s148 + $0x578] sm:$0xff] %v499
                %v501 = vld [vmem:[%s147 + $0xaf0] sm:$0xff]
                %502 = vst [vmem:[%s148 + $0x580] sm:$0xff] %v501
                %v503 = vld [vmem:[%s147 + $0xb10] sm:$0xff]
                %504 = vst [vmem:[%s148 + $0x588] sm:$0xff] %v503
                %v505 = vld [vmem:[%s147 + $0xb18] sm:$0xff]
                %506 = vst [vmem:[%s148 + $0x590] sm:$0xff] %v505
                %v507 = vld [vmem:[%s147 + $0xb20] sm:$0xff]
                %508 = vst [vmem:[%s148 + $0x598] sm:$0xff] %v507
                %v509 = vld [vmem:[%s147 + $0xb40] sm:$0xff]
                %510 = vst [vmem:[%s148 + $0x5a0] sm:$0xff] %v509
                %v511 = vld [vmem:[%s147 + $0xb48] sm:$0xff]
                %512 = vst [vmem:[%s148 + $0x5a8] sm:$0xff] %v511
                %v513 = vld [vmem:[%s147 + $0xb50] sm:$0xff]
                %514 = vst [vmem:[%s148 + $0x5b0] sm:$0xff] %v513
                %v515 = vld [vmem:[%s147 + $0xb70] sm:$0xff]
                %516 = vst [vmem:[%s148 + $0x5b8] sm:$0xff] %v515
                %v517 = vld [vmem:[%s147 + $0xb78] sm:$0xff]
                %518 = vst [vmem:[%s148 + $0x5c0] sm:$0xff] %v517
                %v519 = vld [vmem:[%s147 + $0xb80] sm:$0xff]
                %520 = vst [vmem:[%s148 + $0x5c8] sm:$0xff] %v519
                %v521 = vld [vmem:[%s147 + $0xba0] sm:$0xff]
                %522 = vst [vmem:[%s148 + $0x5d0] sm:$0xff] %v521
                %v523 = vld [vmem:[%s147 + $0xba8] sm:$0xff]
                %524 = vst [vmem:[%s148 + $0x5d8] sm:$0xff] %v523
                %v525 = vld [vmem:[%s147 + $0xbb0] sm:$0xff]
                %526 = vst [vmem:[%s148 + $0x5e0] sm:$0xff] %v525
                %v527 = vld [vmem:[%s147 + $0xbd0] sm:$0xff]
                %528 = vst [vmem:[%s148 + $0x5e8] sm:$0xff] %v527
                %v529 = vld [vmem:[%s147 + $0xbd8] sm:$0xff]
                %530 = vst [vmem:[%s148 + $0x5f0] sm:$0xff] %v529
                %v531 = vld [vmem:[%s147 + $0xbe0] sm:$0xff]
                %532 = vst [vmem:[%s148 + $0x5f8] sm:$0xff] %v531
              $region37: #{neural_fourier_layer_forward.1} parent=31 // loop_footer
                %s146 = sadd.s32 1, %s142
              $region38: #{neural_fourier_layer_forward.1} parent=31 // loop_footer_branch
                %141 = sbr.rel target = $region34
              $region39: #{neural_fourier_layer_forward.1} parent=31 // loop_exit
                _
            $region32: #{neural_fourier_layer_forward.1} parent=27 // pred_fallthru
              _
            // Predicated region
            $region40: #{neural_fourier_layer_forward.1} parent=27 // pred_check
              _
            $region41: #{neural_fourier_layer_forward.1} parent=27 // pred_check_branch
              %534 = sbr.rel target = $region43
            $region42: #{neural_fourier_layer_forward.1} parent=27 // pred_region
              _
            $region43: #{neural_fourier_layer_forward.1} parent=27 // pred_fallthru
              _
          $region28: #{neural_fourier_layer_forward.1} parent=23 // pred_fallthru
            _
          %535 = vnop
        $region24: #{neural_fourier_layer_forward.1} parent=19 // pred_fallthru
          _
      $region20: #{neural_fourier_layer_forward.1} parent=5 // pred_fallthru
        _
      %p536 = scmp.le.s32.totalorder 1, %s8
      %p537 = scmp.lt.s32.totalorder %s8, 3
      %p538 = pnand %p536, %p537
      %p539 = pneg %p538
      // Predicated region
      $region44: #{neural_fourier_layer_forward.1} parent=5 // pred_check
        _
      $region45: #{neural_fourier_layer_forward.1} parent=5 // pred_check_branch
        %541 = sbr.rel (%p538) target = $region47
      $region46: #{neural_fourier_layer_forward.1} parent=5 // pred_region
        %s542 = ssub.s32 %s8, 1
        %s543 = sand.u32 %s33, 1
        %s544 = sand.u32 %s33, 1
        %s545 = smul.addr %s544, 1536
        %s546 = scalar_lea.vmem [#allocation2], %s545
        // Predicated region
        $region48: #{neural_fourier_layer_forward.1} parent=46 // pred_check
          %p547 = pneg %p46
        $region49: #{neural_fourier_layer_forward.1} parent=46 // pred_check_branch
          %549 = sbr.rel (%p547) target = $region51
        $region50: #{neural_fourier_layer_forward.1} parent=46 // pred_region
          _
        $region51: #{neural_fourier_layer_forward.1} parent=46 // pred_fallthru
          _
        %s550 = sand.u32 %s33, 1
        %s551 = sand.u32 %s33, 1
        %s552 = smul.addr %s551, 1536
        %s553 = scalar_lea.vmem [#allocation2], %s552
        %p554 = pneg %p46
        %p555 = pneg %p43
        %p556 = scmp.lt.s32.totalorder %s17, 0
        %s557 = scalar_select %p556, %s17, 0
        %s558 = smul.addr %s557, 4
        %s559 = smul.addr %s558, 2
        %s560 = scalar_lea.vmem %s1, %s559
        %p561 = pneg %p72
        %p562 = pneg %p69
        %p563 = pneg %p100
        %p564 = pneg %p97
        %s565 = smul.u32 3, %s18
        %p566 = scmp.lt.s32.totalorder %s17, 0
        %s567 = scalar_select %p566, %s17, 0
        %p568 = scmp.lt.s32.totalorder %s565, 5
        %s569 = scalar_select %p568, %s565, 5
        %s570 = smul.addr %s567, 6
        %s571 = sadd.s32 %s569, %s570
        %s572 = smul.addr %s571, 2
        %s573 = scalar_lea.vmem %s2, %s572
        %s574 = smul.u32 3, %s18
        %p575 = scmp.lt.s32.totalorder %s17, 0
        %s576 = scalar_select %p575, %s17, 0
        %s577 = smul.addr %s576, 4
        %s578 = smul.addr %s577, 2
        %s579 = scalar_lea.vmem %s1, %s578
        %s580 = smul.u32 3, %s18
        %p581 = scmp.lt.s32.totalorder %s17, 0
        %s582 = scalar_select %p581, %s17, 0
        %p583 = scmp.lt.s32.totalorder %s580, 5
        %s584 = scalar_select %p583, %s580, 5
        %s585 = smul.addr %s582, 6
        %s586 = sadd.s32 %s584, %s585
        %s587 = smul.addr %s586, 2
        %s588 = scalar_lea.vmem %s2, %s587
        %s589 = smul.u32 3, %s18
        %v590 = vld [vmem:[%s579] sm:$0xff]
        %v591 = vld [vmem:[%s546] sm:$0xff]
        %v592 = vld [vmem:[%s546 + $0x8] sm:$0xff]
        %v593 = vld [vmem:[%s546 + $0x10] sm:$0xff]
        %v594 = vld [vmem:[%s546 + $0x18] sm:$0xff]
        %v595 = vld [vmem:[%s546 + $0x20] sm:$0xff]
        %v596 = vld [vmem:[%s546 + $0x28] sm:$0xff]
        %v597 = vld [vmem:[%s546 + $0x30] sm:$0xff]
        %v598 = vld [vmem:[%s546 + $0x38] sm:$0xff]
        %v599 = vld [vmem:[%s546 + $0x40] sm:$0xff]
        %v600 = vld [vmem:[%s546 + $0x48] sm:$0xff]
        %v601 = vld [vmem:[%s546 + $0x50] sm:$0xff]
        %v602 = vld [vmem:[%s546 + $0x58] sm:$0xff]
        %v603 = vld [vmem:[%s546 + $0x60] sm:$0xff]
        %v604 = vld [vmem:[%s546 + $0x68] sm:$0xff]
        %v605 = vld [vmem:[%s546 + $0x70] sm:$0xff]
        %v606 = vld [vmem:[%s546 + $0x78] sm:$0xff]
        %v607 = vld [vmem:[%s546 + $0x80] sm:$0xff]
        %v608 = vld [vmem:[%s546 + $0x88] sm:$0xff]
        %v609 = vld [vmem:[%s546 + $0x90] sm:$0xff]
        %v610 = vld [vmem:[%s546 + $0x98] sm:$0xff]
        %v611 = vld [vmem:[%s546 + $0xa0] sm:$0xff]
        %v612 = vld [vmem:[%s546 + $0xa8] sm:$0xff]
        %v613 = vld [vmem:[%s546 + $0xb0] sm:$0xff]
        %v614 = vld [vmem:[%s546 + $0xb8] sm:$0xff]
        %v615 = vld [vmem:[%s546 + $0xc0] sm:$0xff]
        %v616 = vld [vmem:[%s546 + $0xc8] sm:$0xff]
        %v617 = vld [vmem:[%s546 + $0xd0] sm:$0xff]
        %v618 = vld [vmem:[%s546 + $0xd8] sm:$0xff]
        %v619 = vld [vmem:[%s546 + $0xe0] sm:$0xff]
        %v620 = vld [vmem:[%s546 + $0xe8] sm:$0xff]
        %v621 = vld [vmem:[%s546 + $0xf0] sm:$0xff]
        %v622 = vld [vmem:[%s546 + $0xf8] sm:$0xff]
        %v623 = vld [vmem:[%s546 + $0x100] sm:$0xff]
        %v624 = vld [vmem:[%s546 + $0x108] sm:$0xff]
        %v625 = vld [vmem:[%s546 + $0x110] sm:$0xff]
        %v626 = vld [vmem:[%s546 + $0x118] sm:$0xff]
        %v627 = vld [vmem:[%s546 + $0x120] sm:$0xff]
        %v628 = vld [vmem:[%s546 + $0x128] sm:$0xff]
        %v629 = vld [vmem:[%s546 + $0x130] sm:$0xff]
        %v630 = vld [vmem:[%s546 + $0x138] sm:$0xff]
        %v631 = vld [vmem:[%s546 + $0x140] sm:$0xff]
        %v632 = vld [vmem:[%s546 + $0x148] sm:$0xff]
        %v633 = vld [vmem:[%s546 + $0x150] sm:$0xff]
        %v634 = vld [vmem:[%s546 + $0x158] sm:$0xff]
        %v635 = vld [vmem:[%s546 + $0x160] sm:$0xff]
        %v636 = vld [vmem:[%s546 + $0x168] sm:$0xff]
        %v637 = vld [vmem:[%s546 + $0x170] sm:$0xff]
        %v638 = vld [vmem:[%s546 + $0x178] sm:$0xff]
        %v639 = vld [vmem:[%s546 + $0x180] sm:$0xff]
        %v640 = vld [vmem:[%s546 + $0x188] sm:$0xff]
        %v641 = vld [vmem:[%s546 + $0x190] sm:$0xff]
        %v642 = vld [vmem:[%s546 + $0x198] sm:$0xff]
        %v643 = vld [vmem:[%s546 + $0x1a0] sm:$0xff]
        %v644 = vld [vmem:[%s546 + $0x1a8] sm:$0xff]
        %v645 = vld [vmem:[%s546 + $0x1b0] sm:$0xff]
        %v646 = vld [vmem:[%s546 + $0x1b8] sm:$0xff]
        %v647 = vld [vmem:[%s546 + $0x1c0] sm:$0xff]
        %v648 = vld [vmem:[%s546 + $0x1c8] sm:$0xff]
        %v649 = vld [vmem:[%s546 + $0x1d0] sm:$0xff]
        %v650 = vld [vmem:[%s546 + $0x1d8] sm:$0xff]
        %v651 = vld [vmem:[%s546 + $0x1e0] sm:$0xff]
        %v652 = vld [vmem:[%s546 + $0x1e8] sm:$0xff]
        %v653 = vld [vmem:[%s546 + $0x1f0] sm:$0xff]
        %v654 = vld [vmem:[%s546 + $0x1f8] sm:$0xff]
        %v655 = vld [vmem:[%s546 + $0x200] sm:$0xff]
        %v656 = vld [vmem:[%s546 + $0x208] sm:$0xff]
        %v657 = vld [vmem:[%s546 + $0x210] sm:$0xff]
        %v658 = vld [vmem:[%s546 + $0x218] sm:$0xff]
        %v659 = vld [vmem:[%s546 + $0x220] sm:$0xff]
        %v660 = vld [vmem:[%s546 + $0x228] sm:$0xff]
        %v661 = vld [vmem:[%s546 + $0x230] sm:$0xff]
        %v662 = vld [vmem:[%s546 + $0x238] sm:$0xff]
        %v663 = vld [vmem:[%s546 + $0x240] sm:$0xff]
        %v664 = vld [vmem:[%s546 + $0x248] sm:$0xff]
        %v665 = vld [vmem:[%s546 + $0x250] sm:$0xff]
        %v666 = vld [vmem:[%s546 + $0x258] sm:$0xff]
        %v667 = vld [vmem:[%s546 + $0x260] sm:$0xff]
        %v668 = vld [vmem:[%s546 + $0x268] sm:$0xff]
        %v669 = vld [vmem:[%s546 + $0x270] sm:$0xff]
        %v670 = vld [vmem:[%s546 + $0x278] sm:$0xff]
        %v671 = vld [vmem:[%s546 + $0x280] sm:$0xff]
        %v672 = vld [vmem:[%s546 + $0x288] sm:$0xff]
        %v673 = vld [vmem:[%s546 + $0x290] sm:$0xff]
        %v674 = vld [vmem:[%s546 + $0x298] sm:$0xff]
        %v675 = vld [vmem:[%s546 + $0x2a0] sm:$0xff]
        %v676 = vld [vmem:[%s546 + $0x2a8] sm:$0xff]
        %v677 = vld [vmem:[%s546 + $0x2b0] sm:$0xff]
        %v678 = vld [vmem:[%s546 + $0x2b8] sm:$0xff]
        %v679 = vld [vmem:[%s546 + $0x2c0] sm:$0xff]
        %v680 = vld [vmem:[%s546 + $0x2c8] sm:$0xff]
        %v681 = vld [vmem:[%s546 + $0x2d0] sm:$0xff]
        %v682 = vld [vmem:[%s546 + $0x2d8] sm:$0xff]
        %v683 = vld [vmem:[%s546 + $0x2e0] sm:$0xff]
        %v684 = vld [vmem:[%s546 + $0x2e8] sm:$0xff]
        %v685 = vld [vmem:[%s546 + $0x2f0] sm:$0xff]
        %v686 = vld [vmem:[%s546 + $0x2f8] sm:$0xff]
        %v687 = vld [vmem:[%s546 + $0x300] sm:$0xff]
        %v688 = vld [vmem:[%s546 + $0x308] sm:$0xff]
        %v689 = vld [vmem:[%s546 + $0x310] sm:$0xff]
        %v690 = vld [vmem:[%s546 + $0x318] sm:$0xff]
        %v691 = vld [vmem:[%s546 + $0x320] sm:$0xff]
        %v692 = vld [vmem:[%s546 + $0x328] sm:$0xff]
        %v693 = vld [vmem:[%s546 + $0x330] sm:$0xff]
        %v694 = vld [vmem:[%s546 + $0x338] sm:$0xff]
        %v695 = vld [vmem:[%s546 + $0x340] sm:$0xff]
        %v696 = vld [vmem:[%s546 + $0x348] sm:$0xff]
        %v697 = vld [vmem:[%s546 + $0x350] sm:$0xff]
        %v698 = vld [vmem:[%s546 + $0x358] sm:$0xff]
        %v699 = vld [vmem:[%s546 + $0x360] sm:$0xff]
        %v700 = vld [vmem:[%s546 + $0x368] sm:$0xff]
        %v701 = vld [vmem:[%s546 + $0x370] sm:$0xff]
        %v702 = vld [vmem:[%s546 + $0x378] sm:$0xff]
        %v703 = vld [vmem:[%s546 + $0x380] sm:$0xff]
        %v704 = vld [vmem:[%s546 + $0x388] sm:$0xff]
        %v705 = vld [vmem:[%s546 + $0x390] sm:$0xff]
        %v706 = vld [vmem:[%s546 + $0x398] sm:$0xff]
        %v707 = vld [vmem:[%s546 + $0x3a0] sm:$0xff]
        %v708 = vld [vmem:[%s546 + $0x3a8] sm:$0xff]
        %v709 = vld [vmem:[%s546 + $0x3b0] sm:$0xff]
        %v710 = vld [vmem:[%s546 + $0x3b8] sm:$0xff]
        %v711 = vld [vmem:[%s546 + $0x3c0] sm:$0xff]
        %v712 = vld [vmem:[%s546 + $0x3c8] sm:$0xff]
        %v713 = vld [vmem:[%s546 + $0x3d0] sm:$0xff]
        %v714 = vld [vmem:[%s546 + $0x3d8] sm:$0xff]
        %v715 = vld [vmem:[%s546 + $0x3e0] sm:$0xff]
        %v716 = vld [vmem:[%s546 + $0x3e8] sm:$0xff]
        %v717 = vld [vmem:[%s546 + $0x3f0] sm:$0xff]
        %v718 = vld [vmem:[%s546 + $0x3f8] sm:$0xff]
        %v719 = vld [vmem:[%s546 + $0x400] sm:$0xff]
        %v720 = vld [vmem:[%s546 + $0x408] sm:$0xff]
        %v721 = vld [vmem:[%s546 + $0x410] sm:$0xff]
        %v722 = vld [vmem:[%s546 + $0x418] sm:$0xff]
        %v723 = vld [vmem:[%s546 + $0x420] sm:$0xff]
        %v724 = vld [vmem:[%s546 + $0x428] sm:$0xff]
        %v725 = vld [vmem:[%s546 + $0x430] sm:$0xff]
        %v726 = vld [vmem:[%s546 + $0x438] sm:$0xff]
        %v727 = vld [vmem:[%s546 + $0x440] sm:$0xff]
        %v728 = vld [vmem:[%s546 + $0x448] sm:$0xff]
        %v729 = vld [vmem:[%s546 + $0x450] sm:$0xff]
        %v730 = vld [vmem:[%s546 + $0x458] sm:$0xff]
        %v731 = vld [vmem:[%s546 + $0x460] sm:$0xff]
        %v732 = vld [vmem:[%s546 + $0x468] sm:$0xff]
        %v733 = vld [vmem:[%s546 + $0x470] sm:$0xff]
        %v734 = vld [vmem:[%s546 + $0x478] sm:$0xff]
        %v735 = vld [vmem:[%s546 + $0x480] sm:$0xff]
        %v736 = vld [vmem:[%s546 + $0x488] sm:$0xff]
        %v737 = vld [vmem:[%s546 + $0x490] sm:$0xff]
        %v738 = vld [vmem:[%s546 + $0x498] sm:$0xff]
        %v739 = vld [vmem:[%s546 + $0x4a0] sm:$0xff]
        %v740 = vld [vmem:[%s546 + $0x4a8] sm:$0xff]
        %v741 = vld [vmem:[%s546 + $0x4b0] sm:$0xff]
        %v742 = vld [vmem:[%s546 + $0x4b8] sm:$0xff]
        %v743 = vld [vmem:[%s546 + $0x4c0] sm:$0xff]
        %v744 = vld [vmem:[%s546 + $0x4c8] sm:$0xff]
        %v745 = vld [vmem:[%s546 + $0x4d0] sm:$0xff]
        %v746 = vld [vmem:[%s546 + $0x4d8] sm:$0xff]
        %v747 = vld [vmem:[%s546 + $0x4e0] sm:$0xff]
        %v748 = vld [vmem:[%s546 + $0x4e8] sm:$0xff]
        %v749 = vld [vmem:[%s546 + $0x4f0] sm:$0xff]
        %v750 = vld [vmem:[%s546 + $0x4f8] sm:$0xff]
        %v751 = vld [vmem:[%s546 + $0x500] sm:$0xff]
        %v752 = vld [vmem:[%s546 + $0x508] sm:$0xff]
        %v753 = vld [vmem:[%s546 + $0x510] sm:$0xff]
        %v754 = vld [vmem:[%s546 + $0x518] sm:$0xff]
        %v755 = vld [vmem:[%s546 + $0x520] sm:$0xff]
        %v756 = vld [vmem:[%s546 + $0x528] sm:$0xff]
        %v757 = vld [vmem:[%s546 + $0x530] sm:$0xff]
        %v758 = vld [vmem:[%s546 + $0x538] sm:$0xff]
        %v759 = vld [vmem:[%s546 + $0x540] sm:$0xff]
        %v760 = vld [vmem:[%s546 + $0x548] sm:$0xff]
        %v761 = vld [vmem:[%s546 + $0x550] sm:$0xff]
        %v762 = vld [vmem:[%s546 + $0x558] sm:$0xff]
        %v763 = vld [vmem:[%s546 + $0x560] sm:$0xff]
        %v764 = vld [vmem:[%s546 + $0x568] sm:$0xff]
        %v765 = vld [vmem:[%s546 + $0x570] sm:$0xff]
        %v766 = vld [vmem:[%s546 + $0x578] sm:$0xff]
        %v767 = vld [vmem:[%s546 + $0x580] sm:$0xff]
        %v768 = vld [vmem:[%s546 + $0x588] sm:$0xff]
        %v769 = vld [vmem:[%s546 + $0x590] sm:$0xff]
        %v770 = vld [vmem:[%s546 + $0x598] sm:$0xff]
        %v771 = vld [vmem:[%s546 + $0x5a0] sm:$0xff]
        %v772 = vld [vmem:[%s546 + $0x5a8] sm:$0xff]
        %v773 = vld [vmem:[%s546 + $0x5b0] sm:$0xff]
        %v774 = vld [vmem:[%s546 + $0x5b8] sm:$0xff]
        %v775 = vld [vmem:[%s546 + $0x5c0] sm:$0xff]
        %v776 = vld [vmem:[%s546 + $0x5c8] sm:$0xff]
        %v777 = vld [vmem:[%s546 + $0x5d0] sm:$0xff]
        %v778 = vld [vmem:[%s546 + $0x5d8] sm:$0xff]
        %v779 = vld [vmem:[%s546 + $0x5e0] sm:$0xff]
        %v780 = vld [vmem:[%s546 + $0x5e8] sm:$0xff]
        %v781 = vld [vmem:[%s546 + $0x5f0] sm:$0xff]
        %v782 = vld [vmem:[%s546 + $0x5f8] sm:$0xff]
        %v784 = vcombine.high %v590, %v590
        %v786 = vunpack.c.l.s4 1983009808
        %v787 = vunpack.c.0.s8 %v786
        %v788 = vlaneseq
        %v789 = vshrl.u32 %v788, 7
        %v790 = vsub.s32 %v787, %v789
        %v791 = vrot.slane %v590, %v790
        %v793 = vunpack.c.l.s4 1983009808
        %v794 = vunpack.c.0.s8 %v793
        %v795 = vlaneseq
        %v796 = vshrl.u32 %v795, 7
        %v797 = vsub.s32 %v794, %v796
        %v798 = vrot.slane %v784, %v797
        %v799 = vcombine.high %v791, %v791
        %v800 = vcombine.high %v798, %v798
        %v805 = vand.u32 %v592, 4294901760
        %806 = vmatprep.subr.mxu0 %v805
        %v807 = vand.u32 %v591, 4294901760
        %808 = vmatpush1.msra.mxu0 %v807
        %v809 = vand.u32 %v595, 4294901760
        %810 = vmatprep.subr.mxu0 %v809
        %v811 = vand.u32 %v594, 4294901760
        %812 = vmatpush1.msra.mxu0 %v811
        %v813 = vand.u32 %v598, 4294901760
        %814 = vmatprep.subr.mxu0 %v813
        %v815 = vand.u32 %v597, 4294901760
        %816 = vmatpush1.msra.mxu0 %v815
        %v817 = vand.u32 %v601, 4294901760
        %818 = vmatprep.subr.mxu0 %v817
        %v819 = vand.u32 %v600, 4294901760
        %820 = vmatpush1.msra.mxu0 %v819
        %v821 = vand.u32 %v604, 4294901760
        %822 = vmatprep.subr.mxu0 %v821
        %v823 = vand.u32 %v603, 4294901760
        %824 = vmatpush1.msra.mxu0 %v823
        %v825 = vand.u32 %v607, 4294901760
        %826 = vmatprep.subr.mxu0 %v825
        %v827 = vand.u32 %v606, 4294901760
        %828 = vmatpush1.msra.mxu0 %v827
        %v829 = vand.u32 %v610, 4294901760
        %830 = vmatprep.subr.mxu0 %v829
        %v831 = vand.u32 %v609, 4294901760
        %832 = vmatpush1.msra.mxu0 %v831
        %v833 = vand.u32 %v613, 4294901760
        %834 = vmatprep.subr.mxu0 %v833
        %v835 = vand.u32 %v612, 4294901760
        %836 = vmatpush1.msra.mxu0 %v835
        %v837 = vand.u32 %v616, 4294901760
        %838 = vmatprep.subr.mxu0 %v837
        %v839 = vand.u32 %v615, 4294901760
        %840 = vmatpush1.msra.mxu0 %v839
        %v841 = vand.u32 %v619, 4294901760
        %842 = vmatprep.subr.mxu0 %v841
        %v843 = vand.u32 %v618, 4294901760
        %844 = vmatpush1.msra.mxu0 %v843
        %v845 = vand.u32 %v622, 4294901760
        %846 = vmatprep.subr.mxu0 %v845
        %v847 = vand.u32 %v621, 4294901760
        %848 = vmatpush1.msra.mxu0 %v847
        %v849 = vand.u32 %v625, 4294901760
        %850 = vmatprep.subr.mxu0 %v849
        %v851 = vand.u32 %v624, 4294901760
        %852 = vmatpush1.msra.mxu0 %v851
        %v853 = vand.u32 %v628, 4294901760
        %854 = vmatprep.subr.mxu0 %v853
        %v855 = vand.u32 %v627, 4294901760
        %856 = vmatpush1.msra.mxu0 %v855
        %v857 = vand.u32 %v631, 4294901760
        %858 = vmatprep.subr.mxu0 %v857
        %v859 = vand.u32 %v630, 4294901760
        %860 = vmatpush1.msra.mxu0 %v859
        %v861 = vand.u32 %v634, 4294901760
        %862 = vmatprep.subr.mxu0 %v861
        %v863 = vand.u32 %v633, 4294901760
        %864 = vmatpush1.msra.mxu0 %v863
        %v865 = vand.u32 %v637, 4294901760
        %866 = vmatprep.subr.mxu0 %v865
        %v867 = vand.u32 %v636, 4294901760
        %868 = vmatpush1.msra.mxu0 %v867
        %v869 = vand.u32 %v640, 4294901760
        %870 = vmatprep.subr.mxu0 %v869
        %v871 = vand.u32 %v639, 4294901760
        %872 = vmatpush1.msra.mxu0 %v871
        %v873 = vand.u32 %v643, 4294901760
        %874 = vmatprep.subr.mxu0 %v873
        %v875 = vand.u32 %v642, 4294901760
        %876 = vmatpush1.msra.mxu0 %v875
        %v877 = vand.u32 %v646, 4294901760
        %878 = vmatprep.subr.mxu0 %v877
        %v879 = vand.u32 %v645, 4294901760
        %880 = vmatpush1.msra.mxu0 %v879
        %v881 = vand.u32 %v649, 4294901760
        %882 = vmatprep.subr.mxu0 %v881
        %v883 = vand.u32 %v648, 4294901760
        %884 = vmatpush1.msra.mxu0 %v883
        %v885 = vand.u32 %v652, 4294901760
        %886 = vmatprep.subr.mxu0 %v885
        %v887 = vand.u32 %v651, 4294901760
        %888 = vmatpush1.msra.mxu0 %v887
        %v889 = vand.u32 %v655, 4294901760
        %890 = vmatprep.subr.mxu0 %v889
        %v891 = vand.u32 %v654, 4294901760
        %892 = vmatpush1.msra.mxu0 %v891
        %v893 = vand.u32 %v658, 4294901760
        %894 = vmatprep.subr.mxu0 %v893
        %v895 = vand.u32 %v657, 4294901760
        %896 = vmatpush1.msra.mxu0 %v895
        %v897 = vand.u32 %v661, 4294901760
        %898 = vmatprep.subr.mxu0 %v897
        %v899 = vand.u32 %v660, 4294901760
        %900 = vmatpush1.msra.mxu0 %v899
        %v901 = vand.u32 %v664, 4294901760
        %902 = vmatprep.subr.mxu0 %v901
        %v903 = vand.u32 %v663, 4294901760
        %904 = vmatpush1.msra.mxu0 %v903
        %v905 = vand.u32 %v667, 4294901760
        %906 = vmatprep.subr.mxu0 %v905
        %v907 = vand.u32 %v666, 4294901760
        %908 = vmatpush1.msra.mxu0 %v907
        %v909 = vand.u32 %v670, 4294901760
        %910 = vmatprep.subr.mxu0 %v909
        %v911 = vand.u32 %v669, 4294901760
        %912 = vmatpush1.msra.mxu0 %v911
        %v913 = vand.u32 %v673, 4294901760
        %914 = vmatprep.subr.mxu0 %v913
        %v915 = vand.u32 %v672, 4294901760
        %916 = vmatpush1.msra.mxu0 %v915
        %v917 = vand.u32 %v676, 4294901760
        %918 = vmatprep.subr.mxu0 %v917
        %v919 = vand.u32 %v675, 4294901760
        %920 = vmatpush1.msra.mxu0 %v919
        %v921 = vand.u32 %v679, 4294901760
        %922 = vmatprep.subr.mxu0 %v921
        %v923 = vand.u32 %v678, 4294901760
        %924 = vmatpush1.msra.mxu0 %v923
        %v925 = vand.u32 %v682, 4294901760
        %926 = vmatprep.subr.mxu0 %v925
        %v927 = vand.u32 %v681, 4294901760
        %928 = vmatpush1.msra.mxu0 %v927
        %v929 = vand.u32 %v685, 4294901760
        %930 = vmatprep.subr.mxu0 %v929
        %v931 = vand.u32 %v684, 4294901760
        %932 = vmatpush1.msra.mxu0 %v931
        %v933 = vand.u32 %v799, 4294901760
        %v934 = vsub.f32 %v799, %v933
        %v935 = vand.u32 %v934, 4294901760
        %v936 = vsub.f32 %v934, %v935
        %v937 = vand.u32 %v936, 4294901760
        %938 = vmatprep.mubr.f32.mxu0 %v937
        %v939 = vand.u32 %v791, 4294901760
        %v940 = vsub.f32 %v791, %v939
        %v941 = vand.u32 %v940, 4294901760
        %v942 = vsub.f32 %v940, %v941
        %v943 = vand.u32 %v942, 4294901760
        %944 = vmatmul.mubr.f32.gmra.mrb[0].mxu0 %v943
        %v945 = vpop.f32.mrb[0].mxu0
        %v946 = vadd.f32 0.0, %v945
        %v947 = vpop.f32.mrb[0].mxu0
        %v948 = vadd.f32 0.0, %v947
        %949 = vdwg.mxu0
        %v950 = vand.u32 %v592, 4294901760
        %v951 = vsub.f32 %v592, %v950
        %v952 = vand.u32 %v951, 4294901760
        %v953 = vsub.f32 %v951, %v952
        %v954 = vand.u32 %v953, 4294901760
        %955 = vmatprep.subr.mxu0 %v954
        %v956 = vand.u32 %v591, 4294901760
        %v957 = vsub.f32 %v591, %v956
        %v958 = vand.u32 %v957, 4294901760
        %v959 = vsub.f32 %v957, %v958
        %v960 = vand.u32 %v959, 4294901760
        %961 = vmatpush1.msra.mxu0 %v960
        %v962 = vand.u32 %v595, 4294901760
        %v963 = vsub.f32 %v595, %v962
        %v964 = vand.u32 %v963, 4294901760
        %v965 = vsub.f32 %v963, %v964
        %v966 = vand.u32 %v965, 4294901760
        %967 = vmatprep.subr.mxu0 %v966
        %v968 = vand.u32 %v594, 4294901760
        %v969 = vsub.f32 %v594, %v968
        %v970 = vand.u32 %v969, 4294901760
        %v971 = vsub.f32 %v969, %v970
        %v972 = vand.u32 %v971, 4294901760
        %973 = vmatpush1.msra.mxu0 %v972
        %v974 = vand.u32 %v598, 4294901760
        %v975 = vsub.f32 %v598, %v974
        %v976 = vand.u32 %v975, 4294901760
        %v977 = vsub.f32 %v975, %v976
        %v978 = vand.u32 %v977, 4294901760
        %979 = vmatprep.subr.mxu0 %v978
        %v980 = vand.u32 %v597, 4294901760
        %v981 = vsub.f32 %v597, %v980
        %v982 = vand.u32 %v981, 4294901760
        %v983 = vsub.f32 %v981, %v982
        %v984 = vand.u32 %v983, 4294901760
        %985 = vmatpush1.msra.mxu0 %v984
        %v986 = vand.u32 %v601, 4294901760
        %v987 = vsub.f32 %v601, %v986
        %v988 = vand.u32 %v987, 4294901760
        %v989 = vsub.f32 %v987, %v988
        %v990 = vand.u32 %v989, 4294901760
        %991 = vmatprep.subr.mxu0 %v990
        %v992 = vand.u32 %v600, 4294901760
        %v993 = vsub.f32 %v600, %v992
        %v994 = vand.u32 %v993, 4294901760
        %v995 = vsub.f32 %v993, %v994
        %v996 = vand.u32 %v995, 4294901760
        %997 = vmatpush1.msra.mxu0 %v996
        %v998 = vand.u32 %v604, 4294901760
        %v999 = vsub.f32 %v604, %v998
        %v1000 = vand.u32 %v999, 4294901760
        %v1001 = vsub.f32 %v999, %v1000
        %v1002 = vand.u32 %v1001, 4294901760
        %1003 = vmatprep.subr.mxu0 %v1002
        %v1004 = vand.u32 %v603, 4294901760
        %v1005 = vsub.f32 %v603, %v1004
        %v1006 = vand.u32 %v1005, 4294901760
        %v1007 = vsub.f32 %v1005, %v1006
        %v1008 = vand.u32 %v1007, 4294901760
        %1009 = vmatpush1.msra.mxu0 %v1008
        %v1010 = vand.u32 %v607, 4294901760
        %v1011 = vsub.f32 %v607, %v1010
        %v1012 = vand.u32 %v1011, 4294901760
        %v1013 = vsub.f32 %v1011, %v1012
        %v1014 = vand.u32 %v1013, 4294901760
        %1015 = vmatprep.subr.mxu0 %v1014
        %v1016 = vand.u32 %v606, 4294901760
        %v1017 = vsub.f32 %v606, %v1016
        %v1018 = vand.u32 %v1017, 4294901760
        %v1019 = vsub.f32 %v1017, %v1018
        %v1020 = vand.u32 %v1019, 4294901760
        %1021 = vmatpush1.msra.mxu0 %v1020
        %v1022 = vand.u32 %v610, 4294901760
        %v1023 = vsub.f32 %v610, %v1022
        %v1024 = vand.u32 %v1023, 4294901760
        %v1025 = vsub.f32 %v1023, %v1024
        %v1026 = vand.u32 %v1025, 4294901760
        %1027 = vmatprep.subr.mxu0 %v1026
        %v1028 = vand.u32 %v609, 4294901760
        %v1029 = vsub.f32 %v609, %v1028
        %v1030 = vand.u32 %v1029, 4294901760
        %v1031 = vsub.f32 %v1029, %v1030
        %v1032 = vand.u32 %v1031, 4294901760
        %1033 = vmatpush1.msra.mxu0 %v1032
        %v1034 = vand.u32 %v613, 4294901760
        %v1035 = vsub.f32 %v613, %v1034
        %v1036 = vand.u32 %v1035, 4294901760
        %v1037 = vsub.f32 %v1035, %v1036
        %v1038 = vand.u32 %v1037, 4294901760
        %1039 = vmatprep.subr.mxu0 %v1038
        %v1040 = vand.u32 %v612, 4294901760
        %v1041 = vsub.f32 %v612, %v1040
        %v1042 = vand.u32 %v1041, 4294901760
        %v1043 = vsub.f32 %v1041, %v1042
        %v1044 = vand.u32 %v1043, 4294901760
        %1045 = vmatpush1.msra.mxu0 %v1044
        %v1046 = vand.u32 %v616, 4294901760
        %v1047 = vsub.f32 %v616, %v1046
        %v1048 = vand.u32 %v1047, 4294901760
        %v1049 = vsub.f32 %v1047, %v1048
        %v1050 = vand.u32 %v1049, 4294901760
        %1051 = vmatprep.subr.mxu0 %v1050
        %v1052 = vand.u32 %v615, 4294901760
        %v1053 = vsub.f32 %v615, %v1052
        %v1054 = vand.u32 %v1053, 4294901760
        %v1055 = vsub.f32 %v1053, %v1054
        %v1056 = vand.u32 %v1055, 4294901760
        %1057 = vmatpush1.msra.mxu0 %v1056
        %v1058 = vand.u32 %v619, 4294901760
        %v1059 = vsub.f32 %v619, %v1058
        %v1060 = vand.u32 %v1059, 4294901760
        %v1061 = vsub.f32 %v1059, %v1060
        %v1062 = vand.u32 %v1061, 4294901760
        %1063 = vmatprep.subr.mxu0 %v1062
        %v1064 = vand.u32 %v618, 4294901760
        %v1065 = vsub.f32 %v618, %v1064
        %v1066 = vand.u32 %v1065, 4294901760
        %v1067 = vsub.f32 %v1065, %v1066
        %v1068 = vand.u32 %v1067, 4294901760
        %1069 = vmatpush1.msra.mxu0 %v1068
        %v1070 = vand.u32 %v622, 4294901760
        %v1071 = vsub.f32 %v622, %v1070
        %v1072 = vand.u32 %v1071, 4294901760
        %v1073 = vsub.f32 %v1071, %v1072
        %v1074 = vand.u32 %v1073, 4294901760
        %1075 = vmatprep.subr.mxu0 %v1074
        %v1076 = vand.u32 %v621, 4294901760
        %v1077 = vsub.f32 %v621, %v1076
        %v1078 = vand.u32 %v1077, 4294901760
        %v1079 = vsub.f32 %v1077, %v1078
        %v1080 = vand.u32 %v1079, 4294901760
        %1081 = vmatpush1.msra.mxu0 %v1080
        %v1082 = vand.u32 %v625, 4294901760
        %v1083 = vsub.f32 %v625, %v1082
        %v1084 = vand.u32 %v1083, 4294901760
        %v1085 = vsub.f32 %v1083, %v1084
        %v1086 = vand.u32 %v1085, 4294901760
        %1087 = vmatprep.subr.mxu0 %v1086
        %v1088 = vand.u32 %v624, 4294901760
        %v1089 = vsub.f32 %v624, %v1088
        %v1090 = vand.u32 %v1089, 4294901760
        %v1091 = vsub.f32 %v1089, %v1090
        %v1092 = vand.u32 %v1091, 4294901760
        %1093 = vmatpush1.msra.mxu0 %v1092
        %v1094 = vand.u32 %v628, 4294901760
        %v1095 = vsub.f32 %v628, %v1094
        %v1096 = vand.u32 %v1095, 4294901760
        %v1097 = vsub.f32 %v1095, %v1096
        %v1098 = vand.u32 %v1097, 4294901760
        %1099 = vmatprep.subr.mxu0 %v1098
        %v1100 = vand.u32 %v627, 4294901760
        %v1101 = vsub.f32 %v627, %v1100
        %v1102 = vand.u32 %v1101, 4294901760
        %v1103 = vsub.f32 %v1101, %v1102
        %v1104 = vand.u32 %v1103, 4294901760
        %1105 = vmatpush1.msra.mxu0 %v1104
        %v1106 = vand.u32 %v631, 4294901760
        %v1107 = vsub.f32 %v631, %v1106
        %v1108 = vand.u32 %v1107, 4294901760
        %v1109 = vsub.f32 %v1107, %v1108
        %v1110 = vand.u32 %v1109, 4294901760
        %1111 = vmatprep.subr.mxu0 %v1110
        %v1112 = vand.u32 %v630, 4294901760
        %v1113 = vsub.f32 %v630, %v1112
        %v1114 = vand.u32 %v1113, 4294901760
        %v1115 = vsub.f32 %v1113, %v1114
        %v1116 = vand.u32 %v1115, 4294901760
        %1117 = vmatpush1.msra.mxu0 %v1116
        %v1118 = vand.u32 %v634, 4294901760
        %v1119 = vsub.f32 %v634, %v1118
        %v1120 = vand.u32 %v1119, 4294901760
        %v1121 = vsub.f32 %v1119, %v1120
        %v1122 = vand.u32 %v1121, 4294901760
        %1123 = vmatprep.subr.mxu0 %v1122
        %v1124 = vand.u32 %v633, 4294901760
        %v1125 = vsub.f32 %v633, %v1124
        %v1126 = vand.u32 %v1125, 4294901760
        %v1127 = vsub.f32 %v1125, %v1126
        %v1128 = vand.u32 %v1127, 4294901760
        %1129 = vmatpush1.msra.mxu0 %v1128
        %v1130 = vand.u32 %v637, 4294901760
        %v1131 = vsub.f32 %v637, %v1130
        %v1132 = vand.u32 %v1131, 4294901760
        %v1133 = vsub.f32 %v1131, %v1132
        %v1134 = vand.u32 %v1133, 4294901760
        %1135 = vmatprep.subr.mxu0 %v1134
        %v1136 = vand.u32 %v636, 4294901760
        %v1137 = vsub.f32 %v636, %v1136
        %v1138 = vand.u32 %v1137, 4294901760
        %v1139 = vsub.f32 %v1137, %v1138
        %v1140 = vand.u32 %v1139, 4294901760
        %1141 = vmatpush1.msra.mxu0 %v1140
        %v1142 = vand.u32 %v640, 4294901760
        %v1143 = vsub.f32 %v640, %v1142
        %v1144 = vand.u32 %v1143, 4294901760
        %v1145 = vsub.f32 %v1143, %v1144
        %v1146 = vand.u32 %v1145, 4294901760
        %1147 = vmatprep.subr.mxu0 %v1146
        %v1148 = vand.u32 %v639, 4294901760
        %v1149 = vsub.f32 %v639, %v1148
        %v1150 = vand.u32 %v1149, 4294901760
        %v1151 = vsub.f32 %v1149, %v1150
        %v1152 = vand.u32 %v1151, 4294901760
        %1153 = vmatpush1.msra.mxu0 %v1152
        %v1154 = vand.u32 %v643, 4294901760
        %v1155 = vsub.f32 %v643, %v1154
        %v1156 = vand.u32 %v1155, 4294901760
        %v1157 = vsub.f32 %v1155, %v1156
        %v1158 = vand.u32 %v1157, 4294901760
        %1159 = vmatprep.subr.mxu0 %v1158
        %v1160 = vand.u32 %v642, 4294901760
        %v1161 = vsub.f32 %v642, %v1160
        %v1162 = vand.u32 %v1161, 4294901760
        %v1163 = vsub.f32 %v1161, %v1162
        %v1164 = vand.u32 %v1163, 4294901760
        %1165 = vmatpush1.msra.mxu0 %v1164
        %v1166 = vand.u32 %v646, 4294901760
        %v1167 = vsub.f32 %v646, %v1166
        %v1168 = vand.u32 %v1167, 4294901760
        %v1169 = vsub.f32 %v1167, %v1168
        %v1170 = vand.u32 %v1169, 4294901760
        %1171 = vmatprep.subr.mxu0 %v1170
        %v1172 = vand.u32 %v645, 4294901760
        %v1173 = vsub.f32 %v645, %v1172
        %v1174 = vand.u32 %v1173, 4294901760
        %v1175 = vsub.f32 %v1173, %v1174
        %v1176 = vand.u32 %v1175, 4294901760
        %1177 = vmatpush1.msra.mxu0 %v1176
        %v1178 = vand.u32 %v649, 4294901760
        %v1179 = vsub.f32 %v649, %v1178
        %v1180 = vand.u32 %v1179, 4294901760
        %v1181 = vsub.f32 %v1179, %v1180
        %v1182 = vand.u32 %v1181, 4294901760
        %1183 = vmatprep.subr.mxu0 %v1182
        %v1184 = vand.u32 %v648, 4294901760
        %v1185 = vsub.f32 %v648, %v1184
        %v1186 = vand.u32 %v1185, 4294901760
        %v1187 = vsub.f32 %v1185, %v1186
        %v1188 = vand.u32 %v1187, 4294901760
        %1189 = vmatpush1.msra.mxu0 %v1188
        %v1190 = vand.u32 %v652, 4294901760
        %v1191 = vsub.f32 %v652, %v1190
        %v1192 = vand.u32 %v1191, 4294901760
        %v1193 = vsub.f32 %v1191, %v1192
        %v1194 = vand.u32 %v1193, 4294901760
        %1195 = vmatprep.subr.mxu0 %v1194
        %v1196 = vand.u32 %v651, 4294901760
        %v1197 = vsub.f32 %v651, %v1196
        %v1198 = vand.u32 %v1197, 4294901760
        %v1199 = vsub.f32 %v1197, %v1198
        %v1200 = vand.u32 %v1199, 4294901760
        %1201 = vmatpush1.msra.mxu0 %v1200
        %v1202 = vand.u32 %v655, 4294901760
        %v1203 = vsub.f32 %v655, %v1202
        %v1204 = vand.u32 %v1203, 4294901760
        %v1205 = vsub.f32 %v1203, %v1204
        %v1206 = vand.u32 %v1205, 4294901760
        %1207 = vmatprep.subr.mxu0 %v1206
        %v1208 = vand.u32 %v654, 4294901760
        %v1209 = vsub.f32 %v654, %v1208
        %v1210 = vand.u32 %v1209, 4294901760
        %v1211 = vsub.f32 %v1209, %v1210
        %v1212 = vand.u32 %v1211, 4294901760
        %1213 = vmatpush1.msra.mxu0 %v1212
        %v1214 = vand.u32 %v658, 4294901760
        %v1215 = vsub.f32 %v658, %v1214
        %v1216 = vand.u32 %v1215, 4294901760
        %v1217 = vsub.f32 %v1215, %v1216
        %v1218 = vand.u32 %v1217, 4294901760
        %1219 = vmatprep.subr.mxu0 %v1218
        %v1220 = vand.u32 %v657, 4294901760
        %v1221 = vsub.f32 %v657, %v1220
        %v1222 = vand.u32 %v1221, 4294901760
        %v1223 = vsub.f32 %v1221, %v1222
        %v1224 = vand.u32 %v1223, 4294901760
        %1225 = vmatpush1.msra.mxu0 %v1224
        %v1226 = vand.u32 %v661, 4294901760
        %v1227 = vsub.f32 %v661, %v1226
        %v1228 = vand.u32 %v1227, 4294901760
        %v1229 = vsub.f32 %v1227, %v1228
        %v1230 = vand.u32 %v1229, 4294901760
        %1231 = vmatprep.subr.mxu0 %v1230
        %v1232 = vand.u32 %v660, 4294901760
        %v1233 = vsub.f32 %v660, %v1232
        %v1234 = vand.u32 %v1233, 4294901760
        %v1235 = vsub.f32 %v1233, %v1234
        %v1236 = vand.u32 %v1235, 4294901760
        %1237 = vmatpush1.msra.mxu0 %v1236
        %v1238 = vand.u32 %v664, 4294901760
        %v1239 = vsub.f32 %v664, %v1238
        %v1240 = vand.u32 %v1239, 4294901760
        %v1241 = vsub.f32 %v1239, %v1240
        %v1242 = vand.u32 %v1241, 4294901760
        %1243 = vmatprep.subr.mxu0 %v1242
        %v1244 = vand.u32 %v663, 4294901760
        %v1245 = vsub.f32 %v663, %v1244
        %v1246 = vand.u32 %v1245, 4294901760
        %v1247 = vsub.f32 %v1245, %v1246
        %v1248 = vand.u32 %v1247, 4294901760
        %1249 = vmatpush1.msra.mxu0 %v1248
        %v1250 = vand.u32 %v667, 4294901760
        %v1251 = vsub.f32 %v667, %v1250
        %v1252 = vand.u32 %v1251, 4294901760
        %v1253 = vsub.f32 %v1251, %v1252
        %v1254 = vand.u32 %v1253, 4294901760
        %1255 = vmatprep.subr.mxu0 %v1254
        %v1256 = vand.u32 %v666, 4294901760
        %v1257 = vsub.f32 %v666, %v1256
        %v1258 = vand.u32 %v1257, 4294901760
        %v1259 = vsub.f32 %v1257, %v1258
        %v1260 = vand.u32 %v1259, 4294901760
        %1261 = vmatpush1.msra.mxu0 %v1260
        %v1262 = vand.u32 %v670, 4294901760
        %v1263 = vsub.f32 %v670, %v1262
        %v1264 = vand.u32 %v1263, 4294901760
        %v1265 = vsub.f32 %v1263, %v1264
        %v1266 = vand.u32 %v1265, 4294901760
        %1267 = vmatprep.subr.mxu0 %v1266
        %v1268 = vand.u32 %v669, 4294901760
        %v1269 = vsub.f32 %v669, %v1268
        %v1270 = vand.u32 %v1269, 4294901760
        %v1271 = vsub.f32 %v1269, %v1270
        %v1272 = vand.u32 %v1271, 4294901760
        %1273 = vmatpush1.msra.mxu0 %v1272
        %v1274 = vand.u32 %v673, 4294901760
        %v1275 = vsub.f32 %v673, %v1274
        %v1276 = vand.u32 %v1275, 4294901760
        %v1277 = vsub.f32 %v1275, %v1276
        %v1278 = vand.u32 %v1277, 4294901760
        %1279 = vmatprep.subr.mxu0 %v1278
        %v1280 = vand.u32 %v672, 4294901760
        %v1281 = vsub.f32 %v672, %v1280
        %v1282 = vand.u32 %v1281, 4294901760
        %v1283 = vsub.f32 %v1281, %v1282
        %v1284 = vand.u32 %v1283, 4294901760
        %1285 = vmatpush1.msra.mxu0 %v1284
        %v1286 = vand.u32 %v676, 4294901760
        %v1287 = vsub.f32 %v676, %v1286
        %v1288 = vand.u32 %v1287, 4294901760
        %v1289 = vsub.f32 %v1287, %v1288
        %v1290 = vand.u32 %v1289, 4294901760
        %1291 = vmatprep.subr.mxu0 %v1290
        %v1292 = vand.u32 %v675, 4294901760
        %v1293 = vsub.f32 %v675, %v1292
        %v1294 = vand.u32 %v1293, 4294901760
        %v1295 = vsub.f32 %v1293, %v1294
        %v1296 = vand.u32 %v1295, 4294901760
        %1297 = vmatpush1.msra.mxu0 %v1296
        %v1298 = vand.u32 %v679, 4294901760
        %v1299 = vsub.f32 %v679, %v1298
        %v1300 = vand.u32 %v1299, 4294901760
        %v1301 = vsub.f32 %v1299, %v1300
        %v1302 = vand.u32 %v1301, 4294901760
        %1303 = vmatprep.subr.mxu0 %v1302
        %v1304 = vand.u32 %v678, 4294901760
        %v1305 = vsub.f32 %v678, %v1304
        %v1306 = vand.u32 %v1305, 4294901760
        %v1307 = vsub.f32 %v1305, %v1306
        %v1308 = vand.u32 %v1307, 4294901760
        %1309 = vmatpush1.msra.mxu0 %v1308
        %v1310 = vand.u32 %v682, 4294901760
        %v1311 = vsub.f32 %v682, %v1310
        %v1312 = vand.u32 %v1311, 4294901760
        %v1313 = vsub.f32 %v1311, %v1312
        %v1314 = vand.u32 %v1313, 4294901760
        %1315 = vmatprep.subr.mxu0 %v1314
        %v1316 = vand.u32 %v681, 4294901760
        %v1317 = vsub.f32 %v681, %v1316
        %v1318 = vand.u32 %v1317, 4294901760
        %v1319 = vsub.f32 %v1317, %v1318
        %v1320 = vand.u32 %v1319, 4294901760
        %1321 = vmatpush1.msra.mxu0 %v1320
        %v1322 = vand.u32 %v685, 4294901760
        %v1323 = vsub.f32 %v685, %v1322
        %v1324 = vand.u32 %v1323, 4294901760
        %v1325 = vsub.f32 %v1323, %v1324
        %v1326 = vand.u32 %v1325, 4294901760
        %1327 = vmatprep.subr.mxu0 %v1326
        %v1328 = vand.u32 %v684, 4294901760
        %v1329 = vsub.f32 %v684, %v1328
        %v1330 = vand.u32 %v1329, 4294901760
        %v1331 = vsub.f32 %v1329, %v1330
        %v1332 = vand.u32 %v1331, 4294901760
        %1333 = vmatpush1.msra.mxu0 %v1332
        %v1334 = vand.u32 %v799, 4294901760
        %1335 = vmatprep.mubr.f32.mxu0 %v1334
        %v1336 = vand.u32 %v791, 4294901760
        %1337 = vmatmul.mubr.f32.gmra.mrb[0].mxu0 %v1336
        %v1338 = vpop.f32.mrb[0].mxu0
        %v1339 = vadd.f32 %v946, %v1338
        %v1340 = vpop.f32.mrb[0].mxu0
        %v1341 = vadd.f32 %v948, %v1340
        %1342 = vdwg.mxu0
        %v1343 = vand.u32 %v592, 4294901760
        %v1344 = vsub.f32 %v592, %v1343
        %1345 = vmatprep.subr.mxu0 %v1344
        %v1346 = vand.u32 %v591, 4294901760
        %v1347 = vsub.f32 %v591, %v1346
        %1348 = vmatpush1.msra.mxu0 %v1347
        %v1349 = vand.u32 %v595, 4294901760
        %v1350 = vsub.f32 %v595, %v1349
        %1351 = vmatprep.subr.mxu0 %v1350
        %v1352 = vand.u32 %v594, 4294901760
        %v1353 = vsub.f32 %v594, %v1352
        %1354 = vmatpush1.msra.mxu0 %v1353
        %v1355 = vand.u32 %v598, 4294901760
        %v1356 = vsub.f32 %v598, %v1355
        %1357 = vmatprep.subr.mxu0 %v1356
        %v1358 = vand.u32 %v597, 4294901760
        %v1359 = vsub.f32 %v597, %v1358
        %1360 = vmatpush1.msra.mxu0 %v1359
        %v1361 = vand.u32 %v601, 4294901760
        %v1362 = vsub.f32 %v601, %v1361
        %1363 = vmatprep.subr.mxu0 %v1362
        %v1364 = vand.u32 %v600, 4294901760
        %v1365 = vsub.f32 %v600, %v1364
        %1366 = vmatpush1.msra.mxu0 %v1365
        %v1367 = vand.u32 %v604, 4294901760
        %v1368 = vsub.f32 %v604, %v1367
        %1369 = vmatprep.subr.mxu0 %v1368
        %v1370 = vand.u32 %v603, 4294901760
        %v1371 = vsub.f32 %v603, %v1370
        %1372 = vmatpush1.msra.mxu0 %v1371
        %v1373 = vand.u32 %v607, 4294901760
        %v1374 = vsub.f32 %v607, %v1373
        %1375 = vmatprep.subr.mxu0 %v1374
        %v1376 = vand.u32 %v606, 4294901760
        %v1377 = vsub.f32 %v606, %v1376
        %1378 = vmatpush1.msra.mxu0 %v1377
        %v1379 = vand.u32 %v610, 4294901760
        %v1380 = vsub.f32 %v610, %v1379
        %1381 = vmatprep.subr.mxu0 %v1380
        %v1382 = vand.u32 %v609, 4294901760
        %v1383 = vsub.f32 %v609, %v1382
        %1384 = vmatpush1.msra.mxu0 %v1383
        %v1385 = vand.u32 %v613, 4294901760
        %v1386 = vsub.f32 %v613, %v1385
        %1387 = vmatprep.subr.mxu0 %v1386
        %v1388 = vand.u32 %v612, 4294901760
        %v1389 = vsub.f32 %v612, %v1388
        %1390 = vmatpush1.msra.mxu0 %v1389
        %v1391 = vand.u32 %v616, 4294901760
        %v1392 = vsub.f32 %v616, %v1391
        %1393 = vmatprep.subr.mxu0 %v1392
        %v1394 = vand.u32 %v615, 4294901760
        %v1395 = vsub.f32 %v615, %v1394
        %1396 = vmatpush1.msra.mxu0 %v1395
        %v1397 = vand.u32 %v619, 4294901760
        %v1398 = vsub.f32 %v619, %v1397
        %1399 = vmatprep.subr.mxu0 %v1398
        %v1400 = vand.u32 %v618, 4294901760
        %v1401 = vsub.f32 %v618, %v1400
        %1402 = vmatpush1.msra.mxu0 %v1401
        %v1403 = vand.u32 %v622, 4294901760
        %v1404 = vsub.f32 %v622, %v1403
        %1405 = vmatprep.subr.mxu0 %v1404
        %v1406 = vand.u32 %v621, 4294901760
        %v1407 = vsub.f32 %v621, %v1406
        %1408 = vmatpush1.msra.mxu0 %v1407
        %v1409 = vand.u32 %v625, 4294901760
        %v1410 = vsub.f32 %v625, %v1409
        %1411 = vmatprep.subr.mxu0 %v1410
        %v1412 = vand.u32 %v624, 4294901760
        %v1413 = vsub.f32 %v624, %v1412
        %1414 = vmatpush1.msra.mxu0 %v1413
        %v1415 = vand.u32 %v628, 4294901760
        %v1416 = vsub.f32 %v628, %v1415
        %1417 = vmatprep.subr.mxu0 %v1416
        %v1418 = vand.u32 %v627, 4294901760
        %v1419 = vsub.f32 %v627, %v1418
        %1420 = vmatpush1.msra.mxu0 %v1419
        %v1421 = vand.u32 %v631, 4294901760
        %v1422 = vsub.f32 %v631, %v1421
        %1423 = vmatprep.subr.mxu0 %v1422
        %v1424 = vand.u32 %v630, 4294901760
        %v1425 = vsub.f32 %v630, %v1424
        %1426 = vmatpush1.msra.mxu0 %v1425
        %v1427 = vand.u32 %v634, 4294901760
        %v1428 = vsub.f32 %v634, %v1427
        %1429 = vmatprep.subr.mxu0 %v1428
        %v1430 = vand.u32 %v633, 4294901760
        %v1431 = vsub.f32 %v633, %v1430
        %1432 = vmatpush1.msra.mxu0 %v1431
        %v1433 = vand.u32 %v637, 4294901760
        %v1434 = vsub.f32 %v637, %v1433
        %1435 = vmatprep.subr.mxu0 %v1434
        %v1436 = vand.u32 %v636, 4294901760
        %v1437 = vsub.f32 %v636, %v1436
        %1438 = vmatpush1.msra.mxu0 %v1437
        %v1439 = vand.u32 %v640, 4294901760
        %v1440 = vsub.f32 %v640, %v1439
        %1441 = vmatprep.subr.mxu0 %v1440
        %v1442 = vand.u32 %v639, 4294901760
        %v1443 = vsub.f32 %v639, %v1442
        %1444 = vmatpush1.msra.mxu0 %v1443
        %v1445 = vand.u32 %v643, 4294901760
        %v1446 = vsub.f32 %v643, %v1445
        %1447 = vmatprep.subr.mxu0 %v1446
        %v1448 = vand.u32 %v642, 4294901760
        %v1449 = vsub.f32 %v642, %v1448
        %1450 = vmatpush1.msra.mxu0 %v1449
        %v1451 = vand.u32 %v646, 4294901760
        %v1452 = vsub.f32 %v646, %v1451
        %1453 = vmatprep.subr.mxu0 %v1452
        %v1454 = vand.u32 %v645, 4294901760
        %v1455 = vsub.f32 %v645, %v1454
        %1456 = vmatpush1.msra.mxu0 %v1455
        %v1457 = vand.u32 %v649, 4294901760
        %v1458 = vsub.f32 %v649, %v1457
        %1459 = vmatprep.subr.mxu0 %v1458
        %v1460 = vand.u32 %v648, 4294901760
        %v1461 = vsub.f32 %v648, %v1460
        %1462 = vmatpush1.msra.mxu0 %v1461
        %v1463 = vand.u32 %v652, 4294901760
        %v1464 = vsub.f32 %v652, %v1463
        %1465 = vmatprep.subr.mxu0 %v1464
        %v1466 = vand.u32 %v651, 4294901760
        %v1467 = vsub.f32 %v651, %v1466
        %1468 = vmatpush1.msra.mxu0 %v1467
        %v1469 = vand.u32 %v655, 4294901760
        %v1470 = vsub.f32 %v655, %v1469
        %1471 = vmatprep.subr.mxu0 %v1470
        %v1472 = vand.u32 %v654, 4294901760
        %v1473 = vsub.f32 %v654, %v1472
        %1474 = vmatpush1.msra.mxu0 %v1473
        %v1475 = vand.u32 %v658, 4294901760
        %v1476 = vsub.f32 %v658, %v1475
        %1477 = vmatprep.subr.mxu0 %v1476
        %v1478 = vand.u32 %v657, 4294901760
        %v1479 = vsub.f32 %v657, %v1478
        %1480 = vmatpush1.msra.mxu0 %v1479
        %v1481 = vand.u32 %v661, 4294901760
        %v1482 = vsub.f32 %v661, %v1481
        %1483 = vmatprep.subr.mxu0 %v1482
        %v1484 = vand.u32 %v660, 4294901760
        %v1485 = vsub.f32 %v660, %v1484
        %1486 = vmatpush1.msra.mxu0 %v1485
        %v1487 = vand.u32 %v664, 4294901760
        %v1488 = vsub.f32 %v664, %v1487
        %1489 = vmatprep.subr.mxu0 %v1488
        %v1490 = vand.u32 %v663, 4294901760
        %v1491 = vsub.f32 %v663, %v1490
        %1492 = vmatpush1.msra.mxu0 %v1491
        %v1493 = vand.u32 %v667, 4294901760
        %v1494 = vsub.f32 %v667, %v1493
        %1495 = vmatprep.subr.mxu0 %v1494
        %v1496 = vand.u32 %v666, 4294901760
        %v1497 = vsub.f32 %v666, %v1496
        %1498 = vmatpush1.msra.mxu0 %v1497
        %v1499 = vand.u32 %v670, 4294901760
        %v1500 = vsub.f32 %v670, %v1499
        %1501 = vmatprep.subr.mxu0 %v1500
        %v1502 = vand.u32 %v669, 4294901760
        %v1503 = vsub.f32 %v669, %v1502
        %1504 = vmatpush1.msra.mxu0 %v1503
        %v1505 = vand.u32 %v673, 4294901760
        %v1506 = vsub.f32 %v673, %v1505
        %1507 = vmatprep.subr.mxu0 %v1506
        %v1508 = vand.u32 %v672, 4294901760
        %v1509 = vsub.f32 %v672, %v1508
        %1510 = vmatpush1.msra.mxu0 %v1509
        %v1511 = vand.u32 %v676, 4294901760
        %v1512 = vsub.f32 %v676, %v1511
        %1513 = vmatprep.subr.mxu0 %v1512
        %v1514 = vand.u32 %v675, 4294901760
        %v1515 = vsub.f32 %v675, %v1514
        %1516 = vmatpush1.msra.mxu0 %v1515
        %v1517 = vand.u32 %v679, 4294901760
        %v1518 = vsub.f32 %v679, %v1517
        %1519 = vmatprep.subr.mxu0 %v1518
        %v1520 = vand.u32 %v678, 4294901760
        %v1521 = vsub.f32 %v678, %v1520
        %1522 = vmatpush1.msra.mxu0 %v1521
        %v1523 = vand.u32 %v682, 4294901760
        %v1524 = vsub.f32 %v682, %v1523
        %1525 = vmatprep.subr.mxu0 %v1524
        %v1526 = vand.u32 %v681, 4294901760
        %v1527 = vsub.f32 %v681, %v1526
        %1528 = vmatpush1.msra.mxu0 %v1527
        %v1529 = vand.u32 %v685, 4294901760
        %v1530 = vsub.f32 %v685, %v1529
        %1531 = vmatprep.subr.mxu0 %v1530
        %v1532 = vand.u32 %v684, 4294901760
        %v1533 = vsub.f32 %v684, %v1532
        %1534 = vmatpush1.msra.mxu0 %v1533
        %v1535 = vand.u32 %v799, 4294901760
        %v1536 = vsub.f32 %v799, %v1535
        %1537 = vmatprep.mubr.f32.mxu0 %v1536
        %v1538 = vand.u32 %v791, 4294901760
        %v1539 = vsub.f32 %v791, %v1538
        %1540 = vmatmul.mubr.f32.gmra.mrb[0].mxu0 %v1539
        %v1541 = vpop.f32.mrb[0].mxu0
        %v1542 = vadd.f32 %v1339, %v1541
        %v1543 = vpop.f32.mrb[0].mxu0
        %v1544 = vadd.f32 %v1341, %v1543
        %1545 = vdwg.mxu0
        %v1546 = vand.u32 %v592, 4294901760
        %1547 = vmatprep.subr.mxu0 %v1546
        %v1548 = vand.u32 %v591, 4294901760
        %1549 = vmatpush1.msra.mxu0 %v1548
        %v1550 = vand.u32 %v595, 4294901760
        %1551 = vmatprep.subr.mxu0 %v1550
        %v1552 = vand.u32 %v594, 4294901760
        %1553 = vmatpush1.msra.mxu0 %v1552
        %v1554 = vand.u32 %v598, 4294901760
        %1555 = vmatprep.subr.mxu0 %v1554
        %v1556 = vand.u32 %v597, 4294901760
        %1557 = vmatpush1.msra.mxu0 %v1556
        %v1558 = vand.u32 %v601, 4294901760
        %1559 = vmatprep.subr.mxu0 %v1558
        %v1560 = vand.u32 %v600, 4294901760
        %1561 = vmatpush1.msra.mxu0 %v1560
        %v1562 = vand.u32 %v604, 4294901760
        %1563 = vmatprep.subr.mxu0 %v1562
        %v1564 = vand.u32 %v603, 4294901760
        %1565 = vmatpush1.msra.mxu0 %v1564
        %v1566 = vand.u32 %v607, 4294901760
        %1567 = vmatprep.subr.mxu0 %v1566
        %v1568 = vand.u32 %v606, 4294901760
        %1569 = vmatpush1.msra.mxu0 %v1568
        %v1570 = vand.u32 %v610, 4294901760
        %1571 = vmatprep.subr.mxu0 %v1570
        %v1572 = vand.u32 %v609, 4294901760
        %1573 = vmatpush1.msra.mxu0 %v1572
        %v1574 = vand.u32 %v613, 4294901760
        %1575 = vmatprep.subr.mxu0 %v1574
        %v1576 = vand.u32 %v612, 4294901760
        %1577 = vmatpush1.msra.mxu0 %v1576
        %v1578 = vand.u32 %v616, 4294901760
        %1579 = vmatprep.subr.mxu0 %v1578
        %v1580 = vand.u32 %v615, 4294901760
        %1581 = vmatpush1.msra.mxu0 %v1580
        %v1582 = vand.u32 %v619, 4294901760
        %1583 = vmatprep.subr.mxu0 %v1582
        %v1584 = vand.u32 %v618, 4294901760
        %1585 = vmatpush1.msra.mxu0 %v1584
        %v1586 = vand.u32 %v622, 4294901760
        %1587 = vmatprep.subr.mxu0 %v1586
        %v1588 = vand.u32 %v621, 4294901760
        %1589 = vmatpush1.msra.mxu0 %v1588
        %v1590 = vand.u32 %v625, 4294901760
        %1591 = vmatprep.subr.mxu0 %v1590
        %v1592 = vand.u32 %v624, 4294901760
        %1593 = vmatpush1.msra.mxu0 %v1592
        %v1594 = vand.u32 %v628, 4294901760
        %1595 = vmatprep.subr.mxu0 %v1594
        %v1596 = vand.u32 %v627, 4294901760
        %1597 = vmatpush1.msra.mxu0 %v1596
        %v1598 = vand.u32 %v631, 4294901760
        %1599 = vmatprep.subr.mxu0 %v1598
        %v1600 = vand.u32 %v630, 4294901760
        %1601 = vmatpush1.msra.mxu0 %v1600
        %v1602 = vand.u32 %v634, 4294901760
        %1603 = vmatprep.subr.mxu0 %v1602
        %v1604 = vand.u32 %v633, 4294901760
        %1605 = vmatpush1.msra.mxu0 %v1604
        %v1606 = vand.u32 %v637, 4294901760
        %1607 = vmatprep.subr.mxu0 %v1606
        %v1608 = vand.u32 %v636, 4294901760
        %1609 = vmatpush1.msra.mxu0 %v1608
        %v1610 = vand.u32 %v640, 4294901760
        %1611 = vmatprep.subr.mxu0 %v1610
        %v1612 = vand.u32 %v639, 4294901760
        %1613 = vmatpush1.msra.mxu0 %v1612
        %v1614 = vand.u32 %v643, 4294901760
        %1615 = vmatprep.subr.mxu0 %v1614
        %v1616 = vand.u32 %v642, 4294901760
        %1617 = vmatpush1.msra.mxu0 %v1616
        %v1618 = vand.u32 %v646, 4294901760
        %1619 = vmatprep.subr.mxu0 %v1618
        %v1620 = vand.u32 %v645, 4294901760
        %1621 = vmatpush1.msra.mxu0 %v1620
        %v1622 = vand.u32 %v649, 4294901760
        %1623 = vmatprep.subr.mxu0 %v1622
        %v1624 = vand.u32 %v648, 4294901760
        %1625 = vmatpush1.msra.mxu0 %v1624
        %v1626 = vand.u32 %v652, 4294901760
        %1627 = vmatprep.subr.mxu0 %v1626
        %v1628 = vand.u32 %v651, 4294901760
        %1629 = vmatpush1.msra.mxu0 %v1628
        %v1630 = vand.u32 %v655, 4294901760
        %1631 = vmatprep.subr.mxu0 %v1630
        %v1632 = vand.u32 %v654, 4294901760
        %1633 = vmatpush1.msra.mxu0 %v1632
        %v1634 = vand.u32 %v658, 4294901760
        %1635 = vmatprep.subr.mxu0 %v1634
        %v1636 = vand.u32 %v657, 4294901760
        %1637 = vmatpush1.msra.mxu0 %v1636
        %v1638 = vand.u32 %v661, 4294901760
        %1639 = vmatprep.subr.mxu0 %v1638
        %v1640 = vand.u32 %v660, 4294901760
        %1641 = vmatpush1.msra.mxu0 %v1640
        %v1642 = vand.u32 %v664, 4294901760
        %1643 = vmatprep.subr.mxu0 %v1642
        %v1644 = vand.u32 %v663, 4294901760
        %1645 = vmatpush1.msra.mxu0 %v1644
        %v1646 = vand.u32 %v667, 4294901760
        %1647 = vmatprep.subr.mxu0 %v1646
        %v1648 = vand.u32 %v666, 4294901760
        %1649 = vmatpush1.msra.mxu0 %v1648
        %v1650 = vand.u32 %v670, 4294901760
        %1651 = vmatprep.subr.mxu0 %v1650
        %v1652 = vand.u32 %v669, 4294901760
        %1653 = vmatpush1.msra.mxu0 %v1652
        %v1654 = vand.u32 %v673, 4294901760
        %1655 = vmatprep.subr.mxu0 %v1654
        %v1656 = vand.u32 %v672, 4294901760
        %1657 = vmatpush1.msra.mxu0 %v1656
        %v1658 = vand.u32 %v676, 4294901760
        %1659 = vmatprep.subr.mxu0 %v1658
        %v1660 = vand.u32 %v675, 4294901760
        %1661 = vmatpush1.msra.mxu0 %v1660
        %v1662 = vand.u32 %v679, 4294901760
        %1663 = vmatprep.subr.mxu0 %v1662
        %v1664 = vand.u32 %v678, 4294901760
        %1665 = vmatpush1.msra.mxu0 %v1664
        %v1666 = vand.u32 %v682, 4294901760
        %1667 = vmatprep.subr.mxu0 %v1666
        %v1668 = vand.u32 %v681, 4294901760
        %1669 = vmatpush1.msra.mxu0 %v1668
        %v1670 = vand.u32 %v685, 4294901760
        %1671 = vmatprep.subr.mxu0 %v1670
        %v1672 = vand.u32 %v684, 4294901760
        %1673 = vmatpush1.msra.mxu0 %v1672
        %v1674 = vand.u32 %v799, 4294901760
        %v1675 = vsub.f32 %v799, %v1674
        %v1676 = vand.u32 %v1675, 4294901760
        %1677 = vmatprep.mubr.f32.mxu0 %v1676
        %v1678 = vand.u32 %v791, 4294901760
        %v1679 = vsub.f32 %v791, %v1678
        %v1680 = vand.u32 %v1679, 4294901760
        %1681 = vmatmul.mubr.f32.gmra.mrb[0].mxu0 %v1680
        %v1682 = vpop.f32.mrb[0].mxu0
        %v1683 = vadd.f32 %v1542, %v1682
        %v1684 = vpop.f32.mrb[0].mxu0
        %v1685 = vadd.f32 %v1544, %v1684
        %1686 = vdwg.mxu0
        %v1687 = vand.u32 %v592, 4294901760
        %v1688 = vsub.f32 %v592, %v1687
        %v1689 = vand.u32 %v1688, 4294901760
        %1690 = vmatprep.subr.mxu0 %v1689
        %v1691 = vand.u32 %v591, 4294901760
        %v1692 = vsub.f32 %v591, %v1691
        %v1693 = vand.u32 %v1692, 4294901760
        %1694 = vmatpush1.msra.mxu0 %v1693
        %v1695 = vand.u32 %v595, 4294901760
        %v1696 = vsub.f32 %v595, %v1695
        %v1697 = vand.u32 %v1696, 4294901760
        %1698 = vmatprep.subr.mxu0 %v1697
        %v1699 = vand.u32 %v594, 4294901760
        %v1700 = vsub.f32 %v594, %v1699
        %v1701 = vand.u32 %v1700, 4294901760
        %1702 = vmatpush1.msra.mxu0 %v1701
        %v1703 = vand.u32 %v598, 4294901760
        %v1704 = vsub.f32 %v598, %v1703
        %v1705 = vand.u32 %v1704, 4294901760
        %1706 = vmatprep.subr.mxu0 %v1705
        %v1707 = vand.u32 %v597, 4294901760
        %v1708 = vsub.f32 %v597, %v1707
        %v1709 = vand.u32 %v1708, 4294901760
        %1710 = vmatpush1.msra.mxu0 %v1709
        %v1711 = vand.u32 %v601, 4294901760
        %v1712 = vsub.f32 %v601, %v1711
        %v1713 = vand.u32 %v1712, 4294901760
        %1714 = vmatprep.subr.mxu0 %v1713
        %v1715 = vand.u32 %v600, 4294901760
        %v1716 = vsub.f32 %v600, %v1715
        %v1717 = vand.u32 %v1716, 4294901760
        %1718 = vmatpush1.msra.mxu0 %v1717
        %v1719 = vand.u32 %v604, 4294901760
        %v1720 = vsub.f32 %v604, %v1719
        %v1721 = vand.u32 %v1720, 4294901760
        %1722 = vmatprep.subr.mxu0 %v1721
        %v1723 = vand.u32 %v603, 4294901760
        %v1724 = vsub.f32 %v603, %v1723
        %v1725 = vand.u32 %v1724, 4294901760
        %1726 = vmatpush1.msra.mxu0 %v1725
        %v1727 = vand.u32 %v607, 4294901760
        %v1728 = vsub.f32 %v607, %v1727
        %v1729 = vand.u32 %v1728, 4294901760
        %1730 = vmatprep.subr.mxu0 %v1729
        %v1731 = vand.u32 %v606, 4294901760
        %v1732 = vsub.f32 %v606, %v1731
        %v1733 = vand.u32 %v1732, 4294901760
        %1734 = vmatpush1.msra.mxu0 %v1733
        %v1735 = vand.u32 %v610, 4294901760
        %v1736 = vsub.f32 %v610, %v1735
        %v1737 = vand.u32 %v1736, 4294901760
        %1738 = vmatprep.subr.mxu0 %v1737
        %v1739 = vand.u32 %v609, 4294901760
        %v1740 = vsub.f32 %v609, %v1739
        %v1741 = vand.u32 %v1740, 4294901760
        %1742 = vmatpush1.msra.mxu0 %v1741
        %v1743 = vand.u32 %v613, 4294901760
        %v1744 = vsub.f32 %v613, %v1743
        %v1745 = vand.u32 %v1744, 4294901760
        %1746 = vmatprep.subr.mxu0 %v1745
        %v1747 = vand.u32 %v612, 4294901760
        %v1748 = vsub.f32 %v612, %v1747
        %v1749 = vand.u32 %v1748, 4294901760
        %1750 = vmatpush1.msra.mxu0 %v1749
        %v1751 = vand.u32 %v616, 4294901760
        %v1752 = vsub.f32 %v616, %v1751
        %v1753 = vand.u32 %v1752, 4294901760
        %1754 = vmatprep.subr.mxu0 %v1753
        %v1755 = vand.u32 %v615, 4294901760
        %v1756 = vsub.f32 %v615, %v1755
        %v1757 = vand.u32 %v1756, 4294901760
        %1758 = vmatpush1.msra.mxu0 %v1757
        %v1759 = vand.u32 %v619, 4294901760
        %v1760 = vsub.f32 %v619, %v1759
        %v1761 = vand.u32 %v1760, 4294901760
        %1762 = vmatprep.subr.mxu0 %v1761
        %v1763 = vand.u32 %v618, 4294901760
        %v1764 = vsub.f32 %v618, %v1763
        %v1765 = vand.u32 %v1764, 4294901760
        %1766 = vmatpush1.msra.mxu0 %v1765
        %v1767 = vand.u32 %v622, 4294901760
        %v1768 = vsub.f32 %v622, %v1767
        %v1769 = vand.u32 %v1768, 4294901760
        %1770 = vmatprep.subr.mxu0 %v1769
        %v1771 = vand.u32 %v621, 4294901760
        %v1772 = vsub.f32 %v621, %v1771
        %v1773 = vand.u32 %v1772, 4294901760
        %1774 = vmatpush1.msra.mxu0 %v1773
        %v1775 = vand.u32 %v625, 4294901760
        %v1776 = vsub.f32 %v625, %v1775
        %v1777 = vand.u32 %v1776, 4294901760
        %1778 = vmatprep.subr.mxu0 %v1777
        %v1779 = vand.u32 %v624, 4294901760
        %v1780 = vsub.f32 %v624, %v1779
        %v1781 = vand.u32 %v1780, 4294901760
        %1782 = vmatpush1.msra.mxu0 %v1781
        %v1783 = vand.u32 %v628, 4294901760
        %v1784 = vsub.f32 %v628, %v1783
        %v1785 = vand.u32 %v1784, 4294901760
        %1786 = vmatprep.subr.mxu0 %v1785
        %v1787 = vand.u32 %v627, 4294901760
        %v1788 = vsub.f32 %v627, %v1787
        %v1789 = vand.u32 %v1788, 4294901760
        %1790 = vmatpush1.msra.mxu0 %v1789
        %v1791 = vand.u32 %v631, 4294901760
        %v1792 = vsub.f32 %v631, %v1791
        %v1793 = vand.u32 %v1792, 4294901760
        %1794 = vmatprep.subr.mxu0 %v1793
        %v1795 = vand.u32 %v630, 4294901760
        %v1796 = vsub.f32 %v630, %v1795
        %v1797 = vand.u32 %v1796, 4294901760
        %1798 = vmatpush1.msra.mxu0 %v1797
        %v1799 = vand.u32 %v634, 4294901760
        %v1800 = vsub.f32 %v634, %v1799
        %v1801 = vand.u32 %v1800, 4294901760
        %1802 = vmatprep.subr.mxu0 %v1801
        %v1803 = vand.u32 %v633, 4294901760
        %v1804 = vsub.f32 %v633, %v1803
        %v1805 = vand.u32 %v1804, 4294901760
        %1806 = vmatpush1.msra.mxu0 %v1805
        %v1807 = vand.u32 %v637, 4294901760
        %v1808 = vsub.f32 %v637, %v1807
        %v1809 = vand.u32 %v1808, 4294901760
        %1810 = vmatprep.subr.mxu0 %v1809
        %v1811 = vand.u32 %v636, 4294901760
        %v1812 = vsub.f32 %v636, %v1811
        %v1813 = vand.u32 %v1812, 4294901760
        %1814 = vmatpush1.msra.mxu0 %v1813
        %v1815 = vand.u32 %v640, 4294901760
        %v1816 = vsub.f32 %v640, %v1815
        %v1817 = vand.u32 %v1816, 4294901760
        %1818 = vmatprep.subr.mxu0 %v1817
        %v1819 = vand.u32 %v639, 4294901760
        %v1820 = vsub.f32 %v639, %v1819
        %v1821 = vand.u32 %v1820, 4294901760
        %1822 = vmatpush1.msra.mxu0 %v1821
        %v1823 = vand.u32 %v643, 4294901760
        %v1824 = vsub.f32 %v643, %v1823
        %v1825 = vand.u32 %v1824, 4294901760
        %1826 = vmatprep.subr.mxu0 %v1825
        %v1827 = vand.u32 %v642, 4294901760
        %v1828 = vsub.f32 %v642, %v1827
        %v1829 = vand.u32 %v1828, 4294901760
        %1830 = vmatpush1.msra.mxu0 %v1829
        %v1831 = vand.u32 %v646, 4294901760
        %v1832 = vsub.f32 %v646, %v1831
        %v1833 = vand.u32 %v1832, 4294901760
        %1834 = vmatprep.subr.mxu0 %v1833
        %v1835 = vand.u32 %v645, 4294901760
        %v1836 = vsub.f32 %v645, %v1835
        %v1837 = vand.u32 %v1836, 4294901760
        %1838 = vmatpush1.msra.mxu0 %v1837
        %v1839 = vand.u32 %v649, 4294901760
        %v1840 = vsub.f32 %v649, %v1839
        %v1841 = vand.u32 %v1840, 4294901760
        %1842 = vmatprep.subr.mxu0 %v1841
        %v1843 = vand.u32 %v648, 4294901760
        %v1844 = vsub.f32 %v648, %v1843
        %v1845 = vand.u32 %v1844, 4294901760
        %1846 = vmatpush1.msra.mxu0 %v1845
        %v1847 = vand.u32 %v652, 4294901760
        %v1848 = vsub.f32 %v652, %v1847
        %v1849 = vand.u32 %v1848, 4294901760
        %1850 = vmatprep.subr.mxu0 %v1849
        %v1851 = vand.u32 %v651, 4294901760
        %v1852 = vsub.f32 %v651, %v1851
        %v1853 = vand.u32 %v1852, 4294901760
        %1854 = vmatpush1.msra.mxu0 %v1853
        %v1855 = vand.u32 %v655, 4294901760
        %v1856 = vsub.f32 %v655, %v1855
        %v1857 = vand.u32 %v1856, 4294901760
        %1858 = vmatprep.subr.mxu0 %v1857
        %v1859 = vand.u32 %v654, 4294901760
        %v1860 = vsub.f32 %v654, %v1859
        %v1861 = vand.u32 %v1860, 4294901760
        %1862 = vmatpush1.msra.mxu0 %v1861
        %v1863 = vand.u32 %v658, 4294901760
        %v1864 = vsub.f32 %v658, %v1863
        %v1865 = vand.u32 %v1864, 4294901760
        %1866 = vmatprep.subr.mxu0 %v1865
        %v1867 = vand.u32 %v657, 4294901760
        %v1868 = vsub.f32 %v657, %v1867
        %v1869 = vand.u32 %v1868, 4294901760
        %1870 = vmatpush1.msra.mxu0 %v1869
        %v1871 = vand.u32 %v661, 4294901760
        %v1872 = vsub.f32 %v661, %v1871
        %v1873 = vand.u32 %v1872, 4294901760
        %1874 = vmatprep.subr.mxu0 %v1873
        %v1875 = vand.u32 %v660, 4294901760
        %v1876 = vsub.f32 %v660, %v1875
        %v1877 = vand.u32 %v1876, 4294901760
        %1878 = vmatpush1.msra.mxu0 %v1877
        %v1879 = vand.u32 %v664, 4294901760
        %v1880 = vsub.f32 %v664, %v1879
        %v1881 = vand.u32 %v1880, 4294901760
        %1882 = vmatprep.subr.mxu0 %v1881
        %v1883 = vand.u32 %v663, 4294901760
        %v1884 = vsub.f32 %v663, %v1883
        %v1885 = vand.u32 %v1884, 4294901760
        %1886 = vmatpush1.msra.mxu0 %v1885
        %v1887 = vand.u32 %v667, 4294901760
        %v1888 = vsub.f32 %v667, %v1887
        %v1889 = vand.u32 %v1888, 4294901760
        %1890 = vmatprep.subr.mxu0 %v1889
        %v1891 = vand.u32 %v666, 4294901760
        %v1892 = vsub.f32 %v666, %v1891
        %v1893 = vand.u32 %v1892, 4294901760
        %1894 = vmatpush1.msra.mxu0 %v1893
        %v1895 = vand.u32 %v670, 4294901760
        %v1896 = vsub.f32 %v670, %v1895
        %v1897 = vand.u32 %v1896, 4294901760
        %1898 = vmatprep.subr.mxu0 %v1897
        %v1899 = vand.u32 %v669, 4294901760
        %v1900 = vsub.f32 %v669, %v1899
        %v1901 = vand.u32 %v1900, 4294901760
        %1902 = vmatpush1.msra.mxu0 %v1901
        %v1903 = vand.u32 %v673, 4294901760
        %v1904 = vsub.f32 %v673, %v1903
        %v1905 = vand.u32 %v1904, 4294901760
        %1906 = vmatprep.subr.mxu0 %v1905
        %v1907 = vand.u32 %v672, 4294901760
        %v1908 = vsub.f32 %v672, %v1907
        %v1909 = vand.u32 %v1908, 4294901760
        %1910 = vmatpush1.msra.mxu0 %v1909
        %v1911 = vand.u32 %v676, 4294901760
        %v1912 = vsub.f32 %v676, %v1911
        %v1913 = vand.u32 %v1912, 4294901760
        %1914 = vmatprep.subr.mxu0 %v1913
        %v1915 = vand.u32 %v675, 4294901760
        %v1916 = vsub.f32 %v675, %v1915
        %v1917 = vand.u32 %v1916, 4294901760
        %1918 = vmatpush1.msra.mxu0 %v1917
        %v1919 = vand.u32 %v679, 4294901760
        %v1920 = vsub.f32 %v679, %v1919
        %v1921 = vand.u32 %v1920, 4294901760
        %1922 = vmatprep.subr.mxu0 %v1921
        %v1923 = vand.u32 %v678, 4294901760
        %v1924 = vsub.f32 %v678, %v1923
        %v1925 = vand.u32 %v1924, 4294901760
        %1926 = vmatpush1.msra.mxu0 %v1925
        %v1927 = vand.u32 %v682, 4294901760
        %v1928 = vsub.f32 %v682, %v1927
        %v1929 = vand.u32 %v1928, 4294901760
        %1930 = vmatprep.subr.mxu0 %v1929
        %v1931 = vand.u32 %v681, 4294901760
        %v1932 = vsub.f32 %v681, %v1931
        %v1933 = vand.u32 %v1932, 4294901760
        %1934 = vmatpush1.msra.mxu0 %v1933
        %v1935 = vand.u32 %v685, 4294901760
        %v1936 = vsub.f32 %v685, %v1935
        %v1937 = vand.u32 %v1936, 4294901760
        %1938 = vmatprep.subr.mxu0 %v1937
        %v1939 = vand.u32 %v684, 4294901760
        %v1940 = vsub.f32 %v684, %v1939
        %v1941 = vand.u32 %v1940, 4294901760
        %1942 = vmatpush1.msra.mxu0 %v1941
        %v1943 = vand.u32 %v799, 4294901760
        %1944 = vmatprep.mubr.f32.mxu0 %v1943
        %v1945 = vand.u32 %v791, 4294901760
        %1946 = vmatmul.mubr.f32.gmra.mrb[0].mxu0 %v1945
        %v1947 = vpop.f32.mrb[0].mxu0
        %v1948 = vadd.f32 %v1683, %v1947
        %v1949 = vpop.f32.mrb[0].mxu0
        %v1950 = vadd.f32 %v1685, %v1949
        %1951 = vdwg.mxu0
        %v1952 = vand.u32 %v592, 4294901760
        %1953 = vmatprep.subr.mxu0 %v1952
        %v1954 = vand.u32 %v591, 4294901760
        %1955 = vmatpush1.msra.mxu0 %v1954
        %v1956 = vand.u32 %v595, 4294901760
        %1957 = vmatprep.subr.mxu0 %v1956
        %v1958 = vand.u32 %v594, 4294901760
        %1959 = vmatpush1.msra.mxu0 %v1958
        %v1960 = vand.u32 %v598, 4294901760
        %1961 = vmatprep.subr.mxu0 %v1960
        %v1962 = vand.u32 %v597, 4294901760
        %1963 = vmatpush1.msra.mxu0 %v1962
        %v1964 = vand.u32 %v601, 4294901760
        %1965 = vmatprep.subr.mxu0 %v1964
        %v1966 = vand.u32 %v600, 4294901760
        %1967 = vmatpush1.msra.mxu0 %v1966
        %v1968 = vand.u32 %v604, 4294901760
        %1969 = vmatprep.subr.mxu0 %v1968
        %v1970 = vand.u32 %v603, 4294901760
        %1971 = vmatpush1.msra.mxu0 %v1970
        %v1972 = vand.u32 %v607, 4294901760
        %1973 = vmatprep.subr.mxu0 %v1972
        %v1974 = vand.u32 %v606, 4294901760
        %1975 = vmatpush1.msra.mxu0 %v1974
        %v1976 = vand.u32 %v610, 4294901760
        %1977 = vmatprep.subr.mxu0 %v1976
        %v1978 = vand.u32 %v609, 4294901760
        %1979 = vmatpush1.msra.mxu0 %v1978
        %v1980 = vand.u32 %v613, 4294901760
        %1981 = vmatprep.subr.mxu0 %v1980
        %v1982 = vand.u32 %v612, 4294901760
        %1983 = vmatpush1.msra.mxu0 %v1982
        %v1984 = vand.u32 %v616, 4294901760
        %1985 = vmatprep.subr.mxu0 %v1984
        %v1986 = vand.u32 %v615, 4294901760
        %1987 = vmatpush1.msra.mxu0 %v1986
        %v1988 = vand.u32 %v619, 4294901760
        %1989 = vmatprep.subr.mxu0 %v1988
        %v1990 = vand.u32 %v618, 4294901760
        %1991 = vmatpush1.msra.mxu0 %v1990
        %v1992 = vand.u32 %v622, 4294901760
        %1993 = vmatprep.subr.mxu0 %v1992
        %v1994 = vand.u32 %v621, 4294901760
        %1995 = vmatpush1.msra.mxu0 %v1994
        %v1996 = vand.u32 %v625, 4294901760
        %1997 = vmatprep.subr.mxu0 %v1996
        %v1998 = vand.u32 %v624, 4294901760
        %1999 = vmatpush1.msra.mxu0 %v1998
        %v2000 = vand.u32 %v628, 4294901760
        %2001 = vmatprep.subr.mxu0 %v2000
        %v2002 = vand.u32 %v627, 4294901760
        %2003 = vmatpush1.msra.mxu0 %v2002
        %v2004 = vand.u32 %v631, 4294901760
        %2005 = vmatprep.subr.mxu0 %v2004
        %v2006 = vand.u32 %v630, 4294901760
        %2007 = vmatpush1.msra.mxu0 %v2006
        %v2008 = vand.u32 %v634, 4294901760
        %2009 = vmatprep.subr.mxu0 %v2008
        %v2010 = vand.u32 %v633, 4294901760
        %2011 = vmatpush1.msra.mxu0 %v2010
        %v2012 = vand.u32 %v637, 4294901760
        %2013 = vmatprep.subr.mxu0 %v2012
        %v2014 = vand.u32 %v636, 4294901760
        %2015 = vmatpush1.msra.mxu0 %v2014
        %v2016 = vand.u32 %v640, 4294901760
        %2017 = vmatprep.subr.mxu0 %v2016
        %v2018 = vand.u32 %v639, 4294901760
        %2019 = vmatpush1.msra.mxu0 %v2018
        %v2020 = vand.u32 %v643, 4294901760
        %2021 = vmatprep.subr.mxu0 %v2020
        %v2022 = vand.u32 %v642, 4294901760
        %2023 = vmatpush1.msra.mxu0 %v2022
        %v2024 = vand.u32 %v646, 4294901760
        %2025 = vmatprep.subr.mxu0 %v2024
        %v2026 = vand.u32 %v645, 4294901760
        %2027 = vmatpush1.msra.mxu0 %v2026
        %v2028 = vand.u32 %v649, 4294901760
        %2029 = vmatprep.subr.mxu0 %v2028
        %v2030 = vand.u32 %v648, 4294901760
        %2031 = vmatpush1.msra.mxu0 %v2030
        %v2032 = vand.u32 %v652, 4294901760
        %2033 = vmatprep.subr.mxu0 %v2032
        %v2034 = vand.u32 %v651, 4294901760
        %2035 = vmatpush1.msra.mxu0 %v2034
        %v2036 = vand.u32 %v655, 4294901760
        %2037 = vmatprep.subr.mxu0 %v2036
        %v2038 = vand.u32 %v654, 4294901760
        %2039 = vmatpush1.msra.mxu0 %v2038
        %v2040 = vand.u32 %v658, 4294901760
        %2041 = vmatprep.subr.mxu0 %v2040
        %v2042 = vand.u32 %v657, 4294901760
        %2043 = vmatpush1.msra.mxu0 %v2042
        %v2044 = vand.u32 %v661, 4294901760
        %2045 = vmatprep.subr.mxu0 %v2044
        %v2046 = vand.u32 %v660, 4294901760
        %2047 = vmatpush1.msra.mxu0 %v2046
        %v2048 = vand.u32 %v664, 4294901760
        %2049 = vmatprep.subr.mxu0 %v2048
        %v2050 = vand.u32 %v663, 4294901760
        %2051 = vmatpush1.msra.mxu0 %v2050
        %v2052 = vand.u32 %v667, 4294901760
        %2053 = vmatprep.subr.mxu0 %v2052
        %v2054 = vand.u32 %v666, 4294901760
        %2055 = vmatpush1.msra.mxu0 %v2054
        %v2056 = vand.u32 %v670, 4294901760
        %2057 = vmatprep.subr.mxu0 %v2056
        %v2058 = vand.u32 %v669, 4294901760
        %2059 = vmatpush1.msra.mxu0 %v2058
        %v2060 = vand.u32 %v673, 4294901760
        %2061 = vmatprep.subr.mxu0 %v2060
        %v2062 = vand.u32 %v672, 4294901760
        %2063 = vmatpush1.msra.mxu0 %v2062
        %v2064 = vand.u32 %v676, 4294901760
        %2065 = vmatprep.subr.mxu0 %v2064
        %v2066 = vand.u32 %v675, 4294901760
        %2067 = vmatpush1.msra.mxu0 %v2066
        %v2068 = vand.u32 %v679, 4294901760
        %2069 = vmatprep.subr.mxu0 %v2068
        %v2070 = vand.u32 %v678, 4294901760
        %2071 = vmatpush1.msra.mxu0 %v2070
        %v2072 = vand.u32 %v682, 4294901760
        %2073 = vmatprep.subr.mxu0 %v2072
        %v2074 = vand.u32 %v681, 4294901760
        %2075 = vmatpush1.msra.mxu0 %v2074
        %v2076 = vand.u32 %v685, 4294901760
        %2077 = vmatprep.subr.mxu0 %v2076
        %v2078 = vand.u32 %v684, 4294901760
        %2079 = vmatpush1.msra.mxu0 %v2078
        %v2080 = vand.u32 %v799, 4294901760
        %2081 = vmatprep.mubr.f32.mxu0 %v2080
        %v2082 = vand.u32 %v791, 4294901760
        %2083 = vmatmul.mubr.f32.gmra.mrb[0].mxu0 %v2082
        %v2084 = vpop.f32.mrb[0].mxu0
        %v2085 = vadd.f32 %v1948, %v2084
        %v2086 = vpop.f32.mrb[0].mxu0
        %v2087 = vadd.f32 %v1950, %v2086
        %2088 = vdwg.mxu0
        %v2089 = vand.u32 %v688, 4294901760
        %2090 = vmatprep.subr.mxu0 %v2089
        %v2091 = vand.u32 %v687, 4294901760
        %2092 = vmatpush1.msra.mxu0 %v2091
        %v2093 = vand.u32 %v691, 4294901760
        %2094 = vmatprep.subr.mxu0 %v2093
        %v2095 = vand.u32 %v690, 4294901760
        %2096 = vmatpush1.msra.mxu0 %v2095
        %v2097 = vand.u32 %v694, 4294901760
        %2098 = vmatprep.subr.mxu0 %v2097
        %v2099 = vand.u32 %v693, 4294901760
        %2100 = vmatpush1.msra.mxu0 %v2099
        %v2101 = vand.u32 %v697, 4294901760
        %2102 = vmatprep.subr.mxu0 %v2101
        %v2103 = vand.u32 %v696, 4294901760
        %2104 = vmatpush1.msra.mxu0 %v2103
        %v2105 = vand.u32 %v700, 4294901760
        %2106 = vmatprep.subr.mxu0 %v2105
        %v2107 = vand.u32 %v699, 4294901760
        %2108 = vmatpush1.msra.mxu0 %v2107
        %v2109 = vand.u32 %v703, 4294901760
        %2110 = vmatprep.subr.mxu0 %v2109
        %v2111 = vand.u32 %v702, 4294901760
        %2112 = vmatpush1.msra.mxu0 %v2111
        %v2113 = vand.u32 %v706, 4294901760
        %2114 = vmatprep.subr.mxu0 %v2113
        %v2115 = vand.u32 %v705, 4294901760
        %2116 = vmatpush1.msra.mxu0 %v2115
        %v2117 = vand.u32 %v709, 4294901760
        %2118 = vmatprep.subr.mxu0 %v2117
        %v2119 = vand.u32 %v708, 4294901760
        %2120 = vmatpush1.msra.mxu0 %v2119
        %v2121 = vand.u32 %v712, 4294901760
        %2122 = vmatprep.subr.mxu0 %v2121
        %v2123 = vand.u32 %v711, 4294901760
        %2124 = vmatpush1.msra.mxu0 %v2123
        %v2125 = vand.u32 %v715, 4294901760
        %2126 = vmatprep.subr.mxu0 %v2125
        %v2127 = vand.u32 %v714, 4294901760
        %2128 = vmatpush1.msra.mxu0 %v2127
        %v2129 = vand.u32 %v718, 4294901760
        %2130 = vmatprep.subr.mxu0 %v2129
        %v2131 = vand.u32 %v717, 4294901760
        %2132 = vmatpush1.msra.mxu0 %v2131
        %v2133 = vand.u32 %v721, 4294901760
        %2134 = vmatprep.subr.mxu0 %v2133
        %v2135 = vand.u32 %v720, 4294901760
        %2136 = vmatpush1.msra.mxu0 %v2135
        %v2137 = vand.u32 %v724, 4294901760
        %2138 = vmatprep.subr.mxu0 %v2137
        %v2139 = vand.u32 %v723, 4294901760
        %2140 = vmatpush1.msra.mxu0 %v2139
        %v2141 = vand.u32 %v727, 4294901760
        %2142 = vmatprep.subr.mxu0 %v2141
        %v2143 = vand.u32 %v726, 4294901760
        %2144 = vmatpush1.msra.mxu0 %v2143
        %v2145 = vand.u32 %v730, 4294901760
        %2146 = vmatprep.subr.mxu0 %v2145
        %v2147 = vand.u32 %v729, 4294901760
        %2148 = vmatpush1.msra.mxu0 %v2147
        %v2149 = vand.u32 %v733, 4294901760
        %2150 = vmatprep.subr.mxu0 %v2149
        %v2151 = vand.u32 %v732, 4294901760
        %2152 = vmatpush1.msra.mxu0 %v2151
        %v2153 = vand.u32 %v736, 4294901760
        %2154 = vmatprep.subr.mxu0 %v2153
        %v2155 = vand.u32 %v735, 4294901760
        %2156 = vmatpush1.msra.mxu0 %v2155
        %v2157 = vand.u32 %v739, 4294901760
        %2158 = vmatprep.subr.mxu0 %v2157
        %v2159 = vand.u32 %v738, 4294901760
        %2160 = vmatpush1.msra.mxu0 %v2159
        %v2161 = vand.u32 %v742, 4294901760
        %2162 = vmatprep.subr.mxu0 %v2161
        %v2163 = vand.u32 %v741, 4294901760
        %2164 = vmatpush1.msra.mxu0 %v2163
        %v2165 = vand.u32 %v745, 4294901760
        %2166 = vmatprep.subr.mxu0 %v2165
        %v2167 = vand.u32 %v744, 4294901760
        %2168 = vmatpush1.msra.mxu0 %v2167
        %v2169 = vand.u32 %v748, 4294901760
        %2170 = vmatprep.subr.mxu0 %v2169
        %v2171 = vand.u32 %v747, 4294901760
        %2172 = vmatpush1.msra.mxu0 %v2171
        %v2173 = vand.u32 %v751, 4294901760
        %2174 = vmatprep.subr.mxu0 %v2173
        %v2175 = vand.u32 %v750, 4294901760
        %2176 = vmatpush1.msra.mxu0 %v2175
        %v2177 = vand.u32 %v754, 4294901760
        %2178 = vmatprep.subr.mxu0 %v2177
        %v2179 = vand.u32 %v753, 4294901760
        %2180 = vmatpush1.msra.mxu0 %v2179
        %v2181 = vand.u32 %v757, 4294901760
        %2182 = vmatprep.subr.mxu0 %v2181
        %v2183 = vand.u32 %v756, 4294901760
        %2184 = vmatpush1.msra.mxu0 %v2183
        %v2185 = vand.u32 %v760, 4294901760
        %2186 = vmatprep.subr.mxu0 %v2185
        %v2187 = vand.u32 %v759, 4294901760
        %2188 = vmatpush1.msra.mxu0 %v2187
        %v2189 = vand.u32 %v763, 4294901760
        %2190 = vmatprep.subr.mxu0 %v2189
        %v2191 = vand.u32 %v762, 4294901760
        %2192 = vmatpush1.msra.mxu0 %v2191
        %v2193 = vand.u32 %v766, 4294901760
        %2194 = vmatprep.subr.mxu0 %v2193
        %v2195 = vand.u32 %v765, 4294901760
        %2196 = vmatpush1.msra.mxu0 %v2195
        %v2197 = vand.u32 %v769, 4294901760
        %2198 = vmatprep.subr.mxu0 %v2197
        %v2199 = vand.u32 %v768, 4294901760
        %2200 = vmatpush1.msra.mxu0 %v2199
        %v2201 = vand.u32 %v772, 4294901760
        %2202 = vmatprep.subr.mxu0 %v2201
        %v2203 = vand.u32 %v771, 4294901760
        %2204 = vmatpush1.msra.mxu0 %v2203
        %v2205 = vand.u32 %v775, 4294901760
        %2206 = vmatprep.subr.mxu0 %v2205
        %v2207 = vand.u32 %v774, 4294901760
        %2208 = vmatpush1.msra.mxu0 %v2207
        %v2209 = vand.u32 %v778, 4294901760
        %2210 = vmatprep.subr.mxu0 %v2209
        %v2211 = vand.u32 %v777, 4294901760
        %2212 = vmatpush1.msra.mxu0 %v2211
        %v2213 = vand.u32 %v781, 4294901760
        %2214 = vmatprep.subr.mxu0 %v2213
        %v2215 = vand.u32 %v780, 4294901760
        %2216 = vmatpush1.msra.mxu0 %v2215
        %v2217 = vand.u32 %v800, 4294901760
        %v2218 = vsub.f32 %v800, %v2217
        %v2219 = vand.u32 %v2218, 4294901760
        %v2220 = vsub.f32 %v2218, %v2219
        %v2221 = vand.u32 %v2220, 4294901760
        %2222 = vmatprep.mubr.f32.mxu0 %v2221
        %v2223 = vand.u32 %v798, 4294901760
        %v2224 = vsub.f32 %v798, %v2223
        %v2225 = vand.u32 %v2224, 4294901760
        %v2226 = vsub.f32 %v2224, %v2225
        %v2227 = vand.u32 %v2226, 4294901760
        %2228 = vmatmul.mubr.f32.gmra.mrb[0].mxu0 %v2227
        %v2229 = vpop.f32.mrb[0].mxu0
        %v2230 = vadd.f32 %v2085, %v2229
        %v2231 = vpop.f32.mrb[0].mxu0
        %v2232 = vadd.f32 %v2087, %v2231
        %2233 = vdwg.mxu0
        %v2234 = vand.u32 %v688, 4294901760
        %v2235 = vsub.f32 %v688, %v2234
        %v2236 = vand.u32 %v2235, 4294901760
        %v2237 = vsub.f32 %v2235, %v2236
        %v2238 = vand.u32 %v2237, 4294901760
        %2239 = vmatprep.subr.mxu0 %v2238
        %v2240 = vand.u32 %v687, 4294901760
        %v2241 = vsub.f32 %v687, %v2240
        %v2242 = vand.u32 %v2241, 4294901760
        %v2243 = vsub.f32 %v2241, %v2242
        %v2244 = vand.u32 %v2243, 4294901760
        %2245 = vmatpush1.msra.mxu0 %v2244
        %v2246 = vand.u32 %v691, 4294901760
        %v2247 = vsub.f32 %v691, %v2246
        %v2248 = vand.u32 %v2247, 4294901760
        %v2249 = vsub.f32 %v2247, %v2248
        %v2250 = vand.u32 %v2249, 4294901760
        %2251 = vmatprep.subr.mxu0 %v2250
        %v2252 = vand.u32 %v690, 4294901760
        %v2253 = vsub.f32 %v690, %v2252
        %v2254 = vand.u32 %v2253, 4294901760
        %v2255 = vsub.f32 %v2253, %v2254
        %v2256 = vand.u32 %v2255, 4294901760
        %2257 = vmatpush1.msra.mxu0 %v2256
        %v2258 = vand.u32 %v694, 4294901760
        %v2259 = vsub.f32 %v694, %v2258
        %v2260 = vand.u32 %v2259, 4294901760
        %v2261 = vsub.f32 %v2259, %v2260
        %v2262 = vand.u32 %v2261, 4294901760
        %2263 = vmatprep.subr.mxu0 %v2262
        %v2264 = vand.u32 %v693, 4294901760
        %v2265 = vsub.f32 %v693, %v2264
        %v2266 = vand.u32 %v2265, 4294901760
        %v2267 = vsub.f32 %v2265, %v2266
        %v2268 = vand.u32 %v2267, 4294901760
        %2269 = vmatpush1.msra.mxu0 %v2268
        %v2270 = vand.u32 %v697, 4294901760
        %v2271 = vsub.f32 %v697, %v2270
        %v2272 = vand.u32 %v2271, 4294901760
        %v2273 = vsub.f32 %v2271, %v2272
        %v2274 = vand.u32 %v2273, 4294901760
        %2275 = vmatprep.subr.mxu0 %v2274
        %v2276 = vand.u32 %v696, 4294901760
        %v2277 = vsub.f32 %v696, %v2276
        %v2278 = vand.u32 %v2277, 4294901760
        %v2279 = vsub.f32 %v2277, %v2278
        %v2280 = vand.u32 %v2279, 4294901760
        %2281 = vmatpush1.msra.mxu0 %v2280
        %v2282 = vand.u32 %v700, 4294901760
        %v2283 = vsub.f32 %v700, %v2282
        %v2284 = vand.u32 %v2283, 4294901760
        %v2285 = vsub.f32 %v2283, %v2284
        %v2286 = vand.u32 %v2285, 4294901760
        %2287 = vmatprep.subr.mxu0 %v2286
        %v2288 = vand.u32 %v699, 4294901760
        %v2289 = vsub.f32 %v699, %v2288
        %v2290 = vand.u32 %v2289, 4294901760
        %v2291 = vsub.f32 %v2289, %v2290
        %v2292 = vand.u32 %v2291, 4294901760
        %2293 = vmatpush1.msra.mxu0 %v2292
        %v2294 = vand.u32 %v703, 4294901760
        %v2295 = vsub.f32 %v703, %v2294
        %v2296 = vand.u32 %v2295, 4294901760
        %v2297 = vsub.f32 %v2295, %v2296
        %v2298 = vand.u32 %v2297, 4294901760
        %2299 = vmatprep.subr.mxu0 %v2298
        %v2300 = vand.u32 %v702, 4294901760
        %v2301 = vsub.f32 %v702, %v2300
        %v2302 = vand.u32 %v2301, 4294901760
        %v2303 = vsub.f32 %v2301, %v2302
        %v2304 = vand.u32 %v2303, 4294901760
        %2305 = vmatpush1.msra.mxu0 %v2304
        %v2306 = vand.u32 %v706, 4294901760
        %v2307 = vsub.f32 %v706, %v2306
        %v2308 = vand.u32 %v2307, 4294901760
        %v2309 = vsub.f32 %v2307, %v2308
        %v2310 = vand.u32 %v2309, 4294901760
        %2311 = vmatprep.subr.mxu0 %v2310
        %v2312 = vand.u32 %v705, 4294901760
        %v2313 = vsub.f32 %v705, %v2312
        %v2314 = vand.u32 %v2313, 4294901760
        %v2315 = vsub.f32 %v2313, %v2314
        %v2316 = vand.u32 %v2315, 4294901760
        %2317 = vmatpush1.msra.mxu0 %v2316
        %v2318 = vand.u32 %v709, 4294901760
        %v2319 = vsub.f32 %v709, %v2318
        %v2320 = vand.u32 %v2319, 4294901760
        %v2321 = vsub.f32 %v2319, %v2320
        %v2322 = vand.u32 %v2321, 4294901760
        %2323 = vmatprep.subr.mxu0 %v2322
        %v2324 = vand.u32 %v708, 4294901760
        %v2325 = vsub.f32 %v708, %v2324
        %v2326 = vand.u32 %v2325, 4294901760
        %v2327 = vsub.f32 %v2325, %v2326
        %v2328 = vand.u32 %v2327, 4294901760
        %2329 = vmatpush1.msra.mxu0 %v2328
        %v2330 = vand.u32 %v712, 4294901760
        %v2331 = vsub.f32 %v712, %v2330
        %v2332 = vand.u32 %v2331, 4294901760
        %v2333 = vsub.f32 %v2331, %v2332
        %v2334 = vand.u32 %v2333, 4294901760
        %2335 = vmatprep.subr.mxu0 %v2334
        %v2336 = vand.u32 %v711, 4294901760
        %v2337 = vsub.f32 %v711, %v2336
        %v2338 = vand.u32 %v2337, 4294901760
        %v2339 = vsub.f32 %v2337, %v2338
        %v2340 = vand.u32 %v2339, 4294901760
        %2341 = vmatpush1.msra.mxu0 %v2340
        %v2342 = vand.u32 %v715, 4294901760
        %v2343 = vsub.f32 %v715, %v2342
        %v2344 = vand.u32 %v2343, 4294901760
        %v2345 = vsub.f32 %v2343, %v2344
        %v2346 = vand.u32 %v2345, 4294901760
        %2347 = vmatprep.subr.mxu0 %v2346
        %v2348 = vand.u32 %v714, 4294901760
        %v2349 = vsub.f32 %v714, %v2348
        %v2350 = vand.u32 %v2349, 4294901760
        %v2351 = vsub.f32 %v2349, %v2350
        %v2352 = vand.u32 %v2351, 4294901760
        %2353 = vmatpush1.msra.mxu0 %v2352
        %v2354 = vand.u32 %v718, 4294901760
        %v2355 = vsub.f32 %v718, %v2354
        %v2356 = vand.u32 %v2355, 4294901760
        %v2357 = vsub.f32 %v2355, %v2356
        %v2358 = vand.u32 %v2357, 4294901760
        %2359 = vmatprep.subr.mxu0 %v2358
        %v2360 = vand.u32 %v717, 4294901760
        %v2361 = vsub.f32 %v717, %v2360
        %v2362 = vand.u32 %v2361, 4294901760
        %v2363 = vsub.f32 %v2361, %v2362
        %v2364 = vand.u32 %v2363, 4294901760
        %2365 = vmatpush1.msra.mxu0 %v2364
        %v2366 = vand.u32 %v721, 4294901760
        %v2367 = vsub.f32 %v721, %v2366
        %v2368 = vand.u32 %v2367, 4294901760
        %v2369 = vsub.f32 %v2367, %v2368
        %v2370 = vand.u32 %v2369, 4294901760
        %2371 = vmatprep.subr.mxu0 %v2370
        %v2372 = vand.u32 %v720, 4294901760
        %v2373 = vsub.f32 %v720, %v2372
        %v2374 = vand.u32 %v2373, 4294901760
        %v2375 = vsub.f32 %v2373, %v2374
        %v2376 = vand.u32 %v2375, 4294901760
        %2377 = vmatpush1.msra.mxu0 %v2376
        %v2378 = vand.u32 %v724, 4294901760
        %v2379 = vsub.f32 %v724, %v2378
        %v2380 = vand.u32 %v2379, 4294901760
        %v2381 = vsub.f32 %v2379, %v2380
        %v2382 = vand.u32 %v2381, 4294901760
        %2383 = vmatprep.subr.mxu0 %v2382
        %v2384 = vand.u32 %v723, 4294901760
        %v2385 = vsub.f32 %v723, %v2384
        %v2386 = vand.u32 %v2385, 4294901760
        %v2387 = vsub.f32 %v2385, %v2386
        %v2388 = vand.u32 %v2387, 4294901760
        %2389 = vmatpush1.msra.mxu0 %v2388
        %v2390 = vand.u32 %v727, 4294901760
        %v2391 = vsub.f32 %v727, %v2390
        %v2392 = vand.u32 %v2391, 4294901760
        %v2393 = vsub.f32 %v2391, %v2392
        %v2394 = vand.u32 %v2393, 4294901760
        %2395 = vmatprep.subr.mxu0 %v2394
        %v2396 = vand.u32 %v726, 4294901760
        %v2397 = vsub.f32 %v726, %v2396
        %v2398 = vand.u32 %v2397, 4294901760
        %v2399 = vsub.f32 %v2397, %v2398
        %v2400 = vand.u32 %v2399, 4294901760
        %2401 = vmatpush1.msra.mxu0 %v2400
        %v2402 = vand.u32 %v730, 4294901760
        %v2403 = vsub.f32 %v730, %v2402
        %v2404 = vand.u32 %v2403, 4294901760
        %v2405 = vsub.f32 %v2403, %v2404
        %v2406 = vand.u32 %v2405, 4294901760
        %2407 = vmatprep.subr.mxu0 %v2406
        %v2408 = vand.u32 %v729, 4294901760
        %v2409 = vsub.f32 %v729, %v2408
        %v2410 = vand.u32 %v2409, 4294901760
        %v2411 = vsub.f32 %v2409, %v2410
        %v2412 = vand.u32 %v2411, 4294901760
        %2413 = vmatpush1.msra.mxu0 %v2412
        %v2414 = vand.u32 %v733, 4294901760
        %v2415 = vsub.f32 %v733, %v2414
        %v2416 = vand.u32 %v2415, 4294901760
        %v2417 = vsub.f32 %v2415, %v2416
        %v2418 = vand.u32 %v2417, 4294901760
        %2419 = vmatprep.subr.mxu0 %v2418
        %v2420 = vand.u32 %v732, 4294901760
        %v2421 = vsub.f32 %v732, %v2420
        %v2422 = vand.u32 %v2421, 4294901760
        %v2423 = vsub.f32 %v2421, %v2422
        %v2424 = vand.u32 %v2423, 4294901760
        %2425 = vmatpush1.msra.mxu0 %v2424
        %v2426 = vand.u32 %v736, 4294901760
        %v2427 = vsub.f32 %v736, %v2426
        %v2428 = vand.u32 %v2427, 4294901760
        %v2429 = vsub.f32 %v2427, %v2428
        %v2430 = vand.u32 %v2429, 4294901760
        %2431 = vmatprep.subr.mxu0 %v2430
        %v2432 = vand.u32 %v735, 4294901760
        %v2433 = vsub.f32 %v735, %v2432
        %v2434 = vand.u32 %v2433, 4294901760
        %v2435 = vsub.f32 %v2433, %v2434
        %v2436 = vand.u32 %v2435, 4294901760
        %2437 = vmatpush1.msra.mxu0 %v2436
        %v2438 = vand.u32 %v739, 4294901760
        %v2439 = vsub.f32 %v739, %v2438
        %v2440 = vand.u32 %v2439, 4294901760
        %v2441 = vsub.f32 %v2439, %v2440
        %v2442 = vand.u32 %v2441, 4294901760
        %2443 = vmatprep.subr.mxu0 %v2442
        %v2444 = vand.u32 %v738, 4294901760
        %v2445 = vsub.f32 %v738, %v2444
        %v2446 = vand.u32 %v2445, 4294901760
        %v2447 = vsub.f32 %v2445, %v2446
        %v2448 = vand.u32 %v2447, 4294901760
        %2449 = vmatpush1.msra.mxu0 %v2448
        %v2450 = vand.u32 %v742, 4294901760
        %v2451 = vsub.f32 %v742, %v2450
        %v2452 = vand.u32 %v2451, 4294901760
        %v2453 = vsub.f32 %v2451, %v2452
        %v2454 = vand.u32 %v2453, 4294901760
        %2455 = vmatprep.subr.mxu0 %v2454
        %v2456 = vand.u32 %v741, 4294901760
        %v2457 = vsub.f32 %v741, %v2456
        %v2458 = vand.u32 %v2457, 4294901760
        %v2459 = vsub.f32 %v2457, %v2458
        %v2460 = vand.u32 %v2459, 4294901760
        %2461 = vmatpush1.msra.mxu0 %v2460
        %v2462 = vand.u32 %v745, 4294901760
        %v2463 = vsub.f32 %v745, %v2462
        %v2464 = vand.u32 %v2463, 4294901760
        %v2465 = vsub.f32 %v2463, %v2464
        %v2466 = vand.u32 %v2465, 4294901760
        %2467 = vmatprep.subr.mxu0 %v2466
        %v2468 = vand.u32 %v744, 4294901760
        %v2469 = vsub.f32 %v744, %v2468
        %v2470 = vand.u32 %v2469, 4294901760
        %v2471 = vsub.f32 %v2469, %v2470
        %v2472 = vand.u32 %v2471, 4294901760
        %2473 = vmatpush1.msra.mxu0 %v2472
        %v2474 = vand.u32 %v748, 4294901760
        %v2475 = vsub.f32 %v748, %v2474
        %v2476 = vand.u32 %v2475, 4294901760
        %v2477 = vsub.f32 %v2475, %v2476
        %v2478 = vand.u32 %v2477, 4294901760
        %2479 = vmatprep.subr.mxu0 %v2478
        %v2480 = vand.u32 %v747, 4294901760
        %v2481 = vsub.f32 %v747, %v2480
        %v2482 = vand.u32 %v2481, 4294901760
        %v2483 = vsub.f32 %v2481, %v2482
        %v2484 = vand.u32 %v2483, 4294901760
        %2485 = vmatpush1.msra.mxu0 %v2484
        %v2486 = vand.u32 %v751, 4294901760
        %v2487 = vsub.f32 %v751, %v2486
        %v2488 = vand.u32 %v2487, 4294901760
        %v2489 = vsub.f32 %v2487, %v2488
        %v2490 = vand.u32 %v2489, 4294901760
        %2491 = vmatprep.subr.mxu0 %v2490
        %v2492 = vand.u32 %v750, 4294901760
        %v2493 = vsub.f32 %v750, %v2492
        %v2494 = vand.u32 %v2493, 4294901760
        %v2495 = vsub.f32 %v2493, %v2494
        %v2496 = vand.u32 %v2495, 4294901760
        %2497 = vmatpush1.msra.mxu0 %v2496
        %v2498 = vand.u32 %v754, 4294901760
        %v2499 = vsub.f32 %v754, %v2498
        %v2500 = vand.u32 %v2499, 4294901760
        %v2501 = vsub.f32 %v2499, %v2500
        %v2502 = vand.u32 %v2501, 4294901760
        %2503 = vmatprep.subr.mxu0 %v2502
        %v2504 = vand.u32 %v753, 4294901760
        %v2505 = vsub.f32 %v753, %v2504
        %v2506 = vand.u32 %v2505, 4294901760
        %v2507 = vsub.f32 %v2505, %v2506
        %v2508 = vand.u32 %v2507, 4294901760
        %2509 = vmatpush1.msra.mxu0 %v2508
        %v2510 = vand.u32 %v757, 4294901760
        %v2511 = vsub.f32 %v757, %v2510
        %v2512 = vand.u32 %v2511, 4294901760
        %v2513 = vsub.f32 %v2511, %v2512
        %v2514 = vand.u32 %v2513, 4294901760
        %2515 = vmatprep.subr.mxu0 %v2514
        %v2516 = vand.u32 %v756, 4294901760
        %v2517 = vsub.f32 %v756, %v2516
        %v2518 = vand.u32 %v2517, 4294901760
        %v2519 = vsub.f32 %v2517, %v2518
        %v2520 = vand.u32 %v2519, 4294901760
        %2521 = vmatpush1.msra.mxu0 %v2520
        %v2522 = vand.u32 %v760, 4294901760
        %v2523 = vsub.f32 %v760, %v2522
        %v2524 = vand.u32 %v2523, 4294901760
        %v2525 = vsub.f32 %v2523, %v2524
        %v2526 = vand.u32 %v2525, 4294901760
        %2527 = vmatprep.subr.mxu0 %v2526
        %v2528 = vand.u32 %v759, 4294901760
        %v2529 = vsub.f32 %v759, %v2528
        %v2530 = vand.u32 %v2529, 4294901760
        %v2531 = vsub.f32 %v2529, %v2530
        %v2532 = vand.u32 %v2531, 4294901760
        %2533 = vmatpush1.msra.mxu0 %v2532
        %v2534 = vand.u32 %v763, 4294901760
        %v2535 = vsub.f32 %v763, %v2534
        %v2536 = vand.u32 %v2535, 4294901760
        %v2537 = vsub.f32 %v2535, %v2536
        %v2538 = vand.u32 %v2537, 4294901760
        %2539 = vmatprep.subr.mxu0 %v2538
        %v2540 = vand.u32 %v762, 4294901760
        %v2541 = vsub.f32 %v762, %v2540
        %v2542 = vand.u32 %v2541, 4294901760
        %v2543 = vsub.f32 %v2541, %v2542
        %v2544 = vand.u32 %v2543, 4294901760
        %2545 = vmatpush1.msra.mxu0 %v2544
        %v2546 = vand.u32 %v766, 4294901760
        %v2547 = vsub.f32 %v766, %v2546
        %v2548 = vand.u32 %v2547, 4294901760
        %v2549 = vsub.f32 %v2547, %v2548
        %v2550 = vand.u32 %v2549, 4294901760
        %2551 = vmatprep.subr.mxu0 %v2550
        %v2552 = vand.u32 %v765, 4294901760
        %v2553 = vsub.f32 %v765, %v2552
        %v2554 = vand.u32 %v2553, 4294901760
        %v2555 = vsub.f32 %v2553, %v2554
        %v2556 = vand.u32 %v2555, 4294901760
        %2557 = vmatpush1.msra.mxu0 %v2556
        %v2558 = vand.u32 %v769, 4294901760
        %v2559 = vsub.f32 %v769, %v2558
        %v2560 = vand.u32 %v2559, 4294901760
        %v2561 = vsub.f32 %v2559, %v2560
        %v2562 = vand.u32 %v2561, 4294901760
        %2563 = vmatprep.subr.mxu0 %v2562
        %v2564 = vand.u32 %v768, 4294901760
        %v2565 = vsub.f32 %v768, %v2564
        %v2566 = vand.u32 %v2565, 4294901760
        %v2567 = vsub.f32 %v2565, %v2566
        %v2568 = vand.u32 %v2567, 4294901760
        %2569 = vmatpush1.msra.mxu0 %v2568
        %v2570 = vand.u32 %v772, 4294901760
        %v2571 = vsub.f32 %v772, %v2570
        %v2572 = vand.u32 %v2571, 4294901760
        %v2573 = vsub.f32 %v2571, %v2572
        %v2574 = vand.u32 %v2573, 4294901760
        %2575 = vmatprep.subr.mxu0 %v2574
        %v2576 = vand.u32 %v771, 4294901760
        %v2577 = vsub.f32 %v771, %v2576
        %v2578 = vand.u32 %v2577, 4294901760
        %v2579 = vsub.f32 %v2577, %v2578
        %v2580 = vand.u32 %v2579, 4294901760
        %2581 = vmatpush1.msra.mxu0 %v2580
        %v2582 = vand.u32 %v775, 4294901760
        %v2583 = vsub.f32 %v775, %v2582
        %v2584 = vand.u32 %v2583, 4294901760
        %v2585 = vsub.f32 %v2583, %v2584
        %v2586 = vand.u32 %v2585, 4294901760
        %2587 = vmatprep.subr.mxu0 %v2586
        %v2588 = vand.u32 %v774, 4294901760
        %v2589 = vsub.f32 %v774, %v2588
        %v2590 = vand.u32 %v2589, 4294901760
        %v2591 = vsub.f32 %v2589, %v2590
        %v2592 = vand.u32 %v2591, 4294901760
        %2593 = vmatpush1.msra.mxu0 %v2592
        %v2594 = vand.u32 %v778, 4294901760
        %v2595 = vsub.f32 %v778, %v2594
        %v2596 = vand.u32 %v2595, 4294901760
        %v2597 = vsub.f32 %v2595, %v2596
        %v2598 = vand.u32 %v2597, 4294901760
        %2599 = vmatprep.subr.mxu0 %v2598
        %v2600 = vand.u32 %v777, 4294901760
        %v2601 = vsub.f32 %v777, %v2600
        %v2602 = vand.u32 %v2601, 4294901760
        %v2603 = vsub.f32 %v2601, %v2602
        %v2604 = vand.u32 %v2603, 4294901760
        %2605 = vmatpush1.msra.mxu0 %v2604
        %v2606 = vand.u32 %v781, 4294901760
        %v2607 = vsub.f32 %v781, %v2606
        %v2608 = vand.u32 %v2607, 4294901760
        %v2609 = vsub.f32 %v2607, %v2608
        %v2610 = vand.u32 %v2609, 4294901760
        %2611 = vmatprep.subr.mxu0 %v2610
        %v2612 = vand.u32 %v780, 4294901760
        %v2613 = vsub.f32 %v780, %v2612
        %v2614 = vand.u32 %v2613, 4294901760
        %v2615 = vsub.f32 %v2613, %v2614
        %v2616 = vand.u32 %v2615, 4294901760
        %2617 = vmatpush1.msra.mxu0 %v2616
        %v2618 = vand.u32 %v800, 4294901760
        %2619 = vmatprep.mubr.f32.mxu0 %v2618
        %v2620 = vand.u32 %v798, 4294901760
        %2621 = vmatmul.mubr.f32.gmra.mrb[0].mxu0 %v2620
        %v2622 = vpop.f32.mrb[0].mxu0
        %v2623 = vadd.f32 %v2230, %v2622
        %v2624 = vpop.f32.mrb[0].mxu0
        %v2625 = vadd.f32 %v2232, %v2624
        %2626 = vdwg.mxu0
        %v2627 = vand.u32 %v688, 4294901760
        %v2628 = vsub.f32 %v688, %v2627
        %2629 = vmatprep.subr.mxu0 %v2628
        %v2630 = vand.u32 %v687, 4294901760
        %v2631 = vsub.f32 %v687, %v2630
        %2632 = vmatpush1.msra.mxu0 %v2631
        %v2633 = vand.u32 %v691, 4294901760
        %v2634 = vsub.f32 %v691, %v2633
        %2635 = vmatprep.subr.mxu0 %v2634
        %v2636 = vand.u32 %v690, 4294901760
        %v2637 = vsub.f32 %v690, %v2636
        %2638 = vmatpush1.msra.mxu0 %v2637
        %v2639 = vand.u32 %v694, 4294901760
        %v2640 = vsub.f32 %v694, %v2639
        %2641 = vmatprep.subr.mxu0 %v2640
        %v2642 = vand.u32 %v693, 4294901760
        %v2643 = vsub.f32 %v693, %v2642
        %2644 = vmatpush1.msra.mxu0 %v2643
        %v2645 = vand.u32 %v697, 4294901760
        %v2646 = vsub.f32 %v697, %v2645
        %2647 = vmatprep.subr.mxu0 %v2646
        %v2648 = vand.u32 %v696, 4294901760
        %v2649 = vsub.f32 %v696, %v2648
        %2650 = vmatpush1.msra.mxu0 %v2649
        %v2651 = vand.u32 %v700, 4294901760
        %v2652 = vsub.f32 %v700, %v2651
        %2653 = vmatprep.subr.mxu0 %v2652
        %v2654 = vand.u32 %v699, 4294901760
        %v2655 = vsub.f32 %v699, %v2654
        %2656 = vmatpush1.msra.mxu0 %v2655
        %v2657 = vand.u32 %v703, 4294901760
        %v2658 = vsub.f32 %v703, %v2657
        %2659 = vmatprep.subr.mxu0 %v2658
        %v2660 = vand.u32 %v702, 4294901760
        %v2661 = vsub.f32 %v702, %v2660
        %2662 = vmatpush1.msra.mxu0 %v2661
        %v2663 = vand.u32 %v706, 4294901760
        %v2664 = vsub.f32 %v706, %v2663
        %2665 = vmatprep.subr.mxu0 %v2664
        %v2666 = vand.u32 %v705, 4294901760
        %v2667 = vsub.f32 %v705, %v2666
        %2668 = vmatpush1.msra.mxu0 %v2667
        %v2669 = vand.u32 %v709, 4294901760
        %v2670 = vsub.f32 %v709, %v2669
        %2671 = vmatprep.subr.mxu0 %v2670
        %v2672 = vand.u32 %v708, 4294901760
        %v2673 = vsub.f32 %v708, %v2672
        %2674 = vmatpush1.msra.mxu0 %v2673
        %v2675 = vand.u32 %v712, 4294901760
        %v2676 = vsub.f32 %v712, %v2675
        %2677 = vmatprep.subr.mxu0 %v2676
        %v2678 = vand.u32 %v711, 4294901760
        %v2679 = vsub.f32 %v711, %v2678
        %2680 = vmatpush1.msra.mxu0 %v2679
        %v2681 = vand.u32 %v715, 4294901760
        %v2682 = vsub.f32 %v715, %v2681
        %2683 = vmatprep.subr.mxu0 %v2682
        %v2684 = vand.u32 %v714, 4294901760
        %v2685 = vsub.f32 %v714, %v2684
        %2686 = vmatpush1.msra.mxu0 %v2685
        %v2687 = vand.u32 %v718, 4294901760
        %v2688 = vsub.f32 %v718, %v2687
        %2689 = vmatprep.subr.mxu0 %v2688
        %v2690 = vand.u32 %v717, 4294901760
        %v2691 = vsub.f32 %v717, %v2690
        %2692 = vmatpush1.msra.mxu0 %v2691
        %v2693 = vand.u32 %v721, 4294901760
        %v2694 = vsub.f32 %v721, %v2693
        %2695 = vmatprep.subr.mxu0 %v2694
        %v2696 = vand.u32 %v720, 4294901760
        %v2697 = vsub.f32 %v720, %v2696
        %2698 = vmatpush1.msra.mxu0 %v2697
        %v2699 = vand.u32 %v724, 4294901760
        %v2700 = vsub.f32 %v724, %v2699
        %2701 = vmatprep.subr.mxu0 %v2700
        %v2702 = vand.u32 %v723, 4294901760
        %v2703 = vsub.f32 %v723, %v2702
        %2704 = vmatpush1.msra.mxu0 %v2703
        %v2705 = vand.u32 %v727, 4294901760
        %v2706 = vsub.f32 %v727, %v2705
        %2707 = vmatprep.subr.mxu0 %v2706
        %v2708 = vand.u32 %v726, 4294901760
        %v2709 = vsub.f32 %v726, %v2708
        %2710 = vmatpush1.msra.mxu0 %v2709
        %v2711 = vand.u32 %v730, 4294901760
        %v2712 = vsub.f32 %v730, %v2711
        %2713 = vmatprep.subr.mxu0 %v2712
        %v2714 = vand.u32 %v729, 4294901760
        %v2715 = vsub.f32 %v729, %v2714
        %2716 = vmatpush1.msra.mxu0 %v2715
        %v2717 = vand.u32 %v733, 4294901760
        %v2718 = vsub.f32 %v733, %v2717
        %2719 = vmatprep.subr.mxu0 %v2718
        %v2720 = vand.u32 %v732, 4294901760
        %v2721 = vsub.f32 %v732, %v2720
        %2722 = vmatpush1.msra.mxu0 %v2721
        %v2723 = vand.u32 %v736, 4294901760
        %v2724 = vsub.f32 %v736, %v2723
        %2725 = vmatprep.subr.mxu0 %v2724
        %v2726 = vand.u32 %v735, 4294901760
        %v2727 = vsub.f32 %v735, %v2726
        %2728 = vmatpush1.msra.mxu0 %v2727
        %v2729 = vand.u32 %v739, 4294901760
        %v2730 = vsub.f32 %v739, %v2729
        %2731 = vmatprep.subr.mxu0 %v2730
        %v2732 = vand.u32 %v738, 4294901760
        %v2733 = vsub.f32 %v738, %v2732
        %2734 = vmatpush1.msra.mxu0 %v2733
        %v2735 = vand.u32 %v742, 4294901760
        %v2736 = vsub.f32 %v742, %v2735
        %2737 = vmatprep.subr.mxu0 %v2736
        %v2738 = vand.u32 %v741, 4294901760
        %v2739 = vsub.f32 %v741, %v2738
        %2740 = vmatpush1.msra.mxu0 %v2739
        %v2741 = vand.u32 %v745, 4294901760
        %v2742 = vsub.f32 %v745, %v2741
        %2743 = vmatprep.subr.mxu0 %v2742
        %v2744 = vand.u32 %v744, 4294901760
        %v2745 = vsub.f32 %v744, %v2744
        %2746 = vmatpush1.msra.mxu0 %v2745
        %v2747 = vand.u32 %v748, 4294901760
        %v2748 = vsub.f32 %v748, %v2747
        %2749 = vmatprep.subr.mxu0 %v2748
        %v2750 = vand.u32 %v747, 4294901760
        %v2751 = vsub.f32 %v747, %v2750
        %2752 = vmatpush1.msra.mxu0 %v2751
        %v2753 = vand.u32 %v751, 4294901760
        %v2754 = vsub.f32 %v751, %v2753
        %2755 = vmatprep.subr.mxu0 %v2754
        %v2756 = vand.u32 %v750, 4294901760
        %v2757 = vsub.f32 %v750, %v2756
        %2758 = vmatpush1.msra.mxu0 %v2757
        %v2759 = vand.u32 %v754, 4294901760
        %v2760 = vsub.f32 %v754, %v2759
        %2761 = vmatprep.subr.mxu0 %v2760
        %v2762 = vand.u32 %v753, 4294901760
        %v2763 = vsub.f32 %v753, %v2762
        %2764 = vmatpush1.msra.mxu0 %v2763
        %v2765 = vand.u32 %v757, 4294901760
        %v2766 = vsub.f32 %v757, %v2765
        %2767 = vmatprep.subr.mxu0 %v2766
        %v2768 = vand.u32 %v756, 4294901760
        %v2769 = vsub.f32 %v756, %v2768
        %2770 = vmatpush1.msra.mxu0 %v2769
        %v2771 = vand.u32 %v760, 4294901760
        %v2772 = vsub.f32 %v760, %v2771
        %2773 = vmatprep.subr.mxu0 %v2772
        %v2774 = vand.u32 %v759, 4294901760
        %v2775 = vsub.f32 %v759, %v2774
        %2776 = vmatpush1.msra.mxu0 %v2775
        %v2777 = vand.u32 %v763, 4294901760
        %v2778 = vsub.f32 %v763, %v2777
        %2779 = vmatprep.subr.mxu0 %v2778
        %v2780 = vand.u32 %v762, 4294901760
        %v2781 = vsub.f32 %v762, %v2780
        %2782 = vmatpush1.msra.mxu0 %v2781
        %v2783 = vand.u32 %v766, 4294901760
        %v2784 = vsub.f32 %v766, %v2783
        %2785 = vmatprep.subr.mxu0 %v2784
        %v2786 = vand.u32 %v765, 4294901760
        %v2787 = vsub.f32 %v765, %v2786
        %2788 = vmatpush1.msra.mxu0 %v2787
        %v2789 = vand.u32 %v769, 4294901760
        %v2790 = vsub.f32 %v769, %v2789
        %2791 = vmatprep.subr.mxu0 %v2790
        %v2792 = vand.u32 %v768, 4294901760
        %v2793 = vsub.f32 %v768, %v2792
        %2794 = vmatpush1.msra.mxu0 %v2793
        %v2795 = vand.u32 %v772, 4294901760
        %v2796 = vsub.f32 %v772, %v2795
        %2797 = vmatprep.subr.mxu0 %v2796
        %v2798 = vand.u32 %v771, 4294901760
        %v2799 = vsub.f32 %v771, %v2798
        %2800 = vmatpush1.msra.mxu0 %v2799
        %v2801 = vand.u32 %v775, 4294901760
        %v2802 = vsub.f32 %v775, %v2801
        %2803 = vmatprep.subr.mxu0 %v2802
        %v2804 = vand.u32 %v774, 4294901760
        %v2805 = vsub.f32 %v774, %v2804
        %2806 = vmatpush1.msra.mxu0 %v2805
        %v2807 = vand.u32 %v778, 4294901760
        %v2808 = vsub.f32 %v778, %v2807
        %2809 = vmatprep.subr.mxu0 %v2808
        %v2810 = vand.u32 %v777, 4294901760
        %v2811 = vsub.f32 %v777, %v2810
        %2812 = vmatpush1.msra.mxu0 %v2811
        %v2813 = vand.u32 %v781, 4294901760
        %v2814 = vsub.f32 %v781, %v2813
        %2815 = vmatprep.subr.mxu0 %v2814
        %v2816 = vand.u32 %v780, 4294901760
        %v2817 = vsub.f32 %v780, %v2816
        %2818 = vmatpush1.msra.mxu0 %v2817
        %v2819 = vand.u32 %v800, 4294901760
        %v2820 = vsub.f32 %v800, %v2819
        %2821 = vmatprep.mubr.f32.mxu0 %v2820
        %v2822 = vand.u32 %v798, 4294901760
        %v2823 = vsub.f32 %v798, %v2822
        %2824 = vmatmul.mubr.f32.gmra.mrb[0].mxu0 %v2823
        %v2825 = vpop.f32.mrb[0].mxu0
        %v2826 = vadd.f32 %v2623, %v2825
        %v2827 = vpop.f32.mrb[0].mxu0
        %v2828 = vadd.f32 %v2625, %v2827
        %2829 = vdwg.mxu0
        %v2830 = vand.u32 %v688, 4294901760
        %2831 = vmatprep.subr.mxu0 %v2830
        %v2832 = vand.u32 %v687, 4294901760
        %2833 = vmatpush1.msra.mxu0 %v2832
        %v2834 = vand.u32 %v691, 4294901760
        %2835 = vmatprep.subr.mxu0 %v2834
        %v2836 = vand.u32 %v690, 4294901760
        %2837 = vmatpush1.msra.mxu0 %v2836
        %v2838 = vand.u32 %v694, 4294901760
        %2839 = vmatprep.subr.mxu0 %v2838
        %v2840 = vand.u32 %v693, 4294901760
        %2841 = vmatpush1.msra.mxu0 %v2840
        %v2842 = vand.u32 %v697, 4294901760
        %2843 = vmatprep.subr.mxu0 %v2842
        %v2844 = vand.u32 %v696, 4294901760
        %2845 = vmatpush1.msra.mxu0 %v2844
        %v2846 = vand.u32 %v700, 4294901760
        %2847 = vmatprep.subr.mxu0 %v2846
        %v2848 = vand.u32 %v699, 4294901760
        %2849 = vmatpush1.msra.mxu0 %v2848
        %v2850 = vand.u32 %v703, 4294901760
        %2851 = vmatprep.subr.mxu0 %v2850
        %v2852 = vand.u32 %v702, 4294901760
        %2853 = vmatpush1.msra.mxu0 %v2852
        %v2854 = vand.u32 %v706, 4294901760
        %2855 = vmatprep.subr.mxu0 %v2854
        %v2856 = vand.u32 %v705, 4294901760
        %2857 = vmatpush1.msra.mxu0 %v2856
        %v2858 = vand.u32 %v709, 4294901760
        %2859 = vmatprep.subr.mxu0 %v2858
        %v2860 = vand.u32 %v708, 4294901760
        %2861 = vmatpush1.msra.mxu0 %v2860
        %v2862 = vand.u32 %v712, 4294901760
        %2863 = vmatprep.subr.mxu0 %v2862
        %v2864 = vand.u32 %v711, 4294901760
        %2865 = vmatpush1.msra.mxu0 %v2864
        %v2866 = vand.u32 %v715, 4294901760
        %2867 = vmatprep.subr.mxu0 %v2866
        %v2868 = vand.u32 %v714, 4294901760
        %2869 = vmatpush1.msra.mxu0 %v2868
        %v2870 = vand.u32 %v718, 4294901760
        %2871 = vmatprep.subr.mxu0 %v2870
        %v2872 = vand.u32 %v717, 4294901760
        %2873 = vmatpush1.msra.mxu0 %v2872
        %v2874 = vand.u32 %v721, 4294901760
        %2875 = vmatprep.subr.mxu0 %v2874
        %v2876 = vand.u32 %v720, 4294901760
        %2877 = vmatpush1.msra.mxu0 %v2876
        %v2878 = vand.u32 %v724, 4294901760
        %2879 = vmatprep.subr.mxu0 %v2878
        %v2880 = vand.u32 %v723, 4294901760
        %2881 = vmatpush1.msra.mxu0 %v2880
        %v2882 = vand.u32 %v727, 4294901760
        %2883 = vmatprep.subr.mxu0 %v2882
        %v2884 = vand.u32 %v726, 4294901760
        %2885 = vmatpush1.msra.mxu0 %v2884
        %v2886 = vand.u32 %v730, 4294901760
        %2887 = vmatprep.subr.mxu0 %v2886
        %v2888 = vand.u32 %v729, 4294901760
        %2889 = vmatpush1.msra.mxu0 %v2888
        %v2890 = vand.u32 %v733, 4294901760
        %2891 = vmatprep.subr.mxu0 %v2890
        %v2892 = vand.u32 %v732, 4294901760
        %2893 = vmatpush1.msra.mxu0 %v2892
        %v2894 = vand.u32 %v736, 4294901760
        %2895 = vmatprep.subr.mxu0 %v2894
        %v2896 = vand.u32 %v735, 4294901760
        %2897 = vmatpush1.msra.mxu0 %v2896
        %v2898 = vand.u32 %v739, 4294901760
        %2899 = vmatprep.subr.mxu0 %v2898
        %v2900 = vand.u32 %v738, 4294901760
        %2901 = vmatpush1.msra.mxu0 %v2900
        %v2902 = vand.u32 %v742, 4294901760
        %2903 = vmatprep.subr.mxu0 %v2902
        %v2904 = vand.u32 %v741, 4294901760
        %2905 = vmatpush1.msra.mxu0 %v2904
        %v2906 = vand.u32 %v745, 4294901760
        %2907 = vmatprep.subr.mxu0 %v2906
        %v2908 = vand.u32 %v744, 4294901760
        %2909 = vmatpush1.msra.mxu0 %v2908
        %v2910 = vand.u32 %v748, 4294901760
        %2911 = vmatprep.subr.mxu0 %v2910
        %v2912 = vand.u32 %v747, 4294901760
        %2913 = vmatpush1.msra.mxu0 %v2912
        %v2914 = vand.u32 %v751, 4294901760
        %2915 = vmatprep.subr.mxu0 %v2914
        %v2916 = vand.u32 %v750, 4294901760
        %2917 = vmatpush1.msra.mxu0 %v2916
        %v2918 = vand.u32 %v754, 4294901760
        %2919 = vmatprep.subr.mxu0 %v2918
        %v2920 = vand.u32 %v753, 4294901760
        %2921 = vmatpush1.msra.mxu0 %v2920
        %v2922 = vand.u32 %v757, 4294901760
        %2923 = vmatprep.subr.mxu0 %v2922
        %v2924 = vand.u32 %v756, 4294901760
        %2925 = vmatpush1.msra.mxu0 %v2924
        %v2926 = vand.u32 %v760, 4294901760
        %2927 = vmatprep.subr.mxu0 %v2926
        %v2928 = vand.u32 %v759, 4294901760
        %2929 = vmatpush1.msra.mxu0 %v2928
        %v2930 = vand.u32 %v763, 4294901760
        %2931 = vmatprep.subr.mxu0 %v2930
        %v2932 = vand.u32 %v762, 4294901760
        %2933 = vmatpush1.msra.mxu0 %v2932
        %v2934 = vand.u32 %v766, 4294901760
        %2935 = vmatprep.subr.mxu0 %v2934
        %v2936 = vand.u32 %v765, 4294901760
        %2937 = vmatpush1.msra.mxu0 %v2936
        %v2938 = vand.u32 %v769, 4294901760
        %2939 = vmatprep.subr.mxu0 %v2938
        %v2940 = vand.u32 %v768, 4294901760
        %2941 = vmatpush1.msra.mxu0 %v2940
        %v2942 = vand.u32 %v772, 4294901760
        %2943 = vmatprep.subr.mxu0 %v2942
        %v2944 = vand.u32 %v771, 4294901760
        %2945 = vmatpush1.msra.mxu0 %v2944
        %v2946 = vand.u32 %v775, 4294901760
        %2947 = vmatprep.subr.mxu0 %v2946
        %v2948 = vand.u32 %v774, 4294901760
        %2949 = vmatpush1.msra.mxu0 %v2948
        %v2950 = vand.u32 %v778, 4294901760
        %2951 = vmatprep.subr.mxu0 %v2950
        %v2952 = vand.u32 %v777, 4294901760
        %2953 = vmatpush1.msra.mxu0 %v2952
        %v2954 = vand.u32 %v781, 4294901760
        %2955 = vmatprep.subr.mxu0 %v2954
        %v2956 = vand.u32 %v780, 4294901760
        %2957 = vmatpush1.msra.mxu0 %v2956
        %v2958 = vand.u32 %v800, 4294901760
        %v2959 = vsub.f32 %v800, %v2958
        %v2960 = vand.u32 %v2959, 4294901760
        %2961 = vmatprep.mubr.f32.mxu0 %v2960
        %v2962 = vand.u32 %v798, 4294901760
        %v2963 = vsub.f32 %v798, %v2962
        %v2964 = vand.u32 %v2963, 4294901760
        %2965 = vmatmul.mubr.f32.gmra.mrb[0].mxu0 %v2964
        %v2966 = vpop.f32.mrb[0].mxu0
        %v2967 = vadd.f32 %v2826, %v2966
        %v2968 = vpop.f32.mrb[0].mxu0
        %v2969 = vadd.f32 %v2828, %v2968
        %2970 = vdwg.mxu0
        %v2971 = vand.u32 %v688, 4294901760
        %v2972 = vsub.f32 %v688, %v2971
        %v2973 = vand.u32 %v2972, 4294901760
        %2974 = vmatprep.subr.mxu0 %v2973
        %v2975 = vand.u32 %v687, 4294901760
        %v2976 = vsub.f32 %v687, %v2975
        %v2977 = vand.u32 %v2976, 4294901760
        %2978 = vmatpush1.msra.mxu0 %v2977
        %v2979 = vand.u32 %v691, 4294901760
        %v2980 = vsub.f32 %v691, %v2979
        %v2981 = vand.u32 %v2980, 4294901760
        %2982 = vmatprep.subr.mxu0 %v2981
        %v2983 = vand.u32 %v690, 4294901760
        %v2984 = vsub.f32 %v690, %v2983
        %v2985 = vand.u32 %v2984, 4294901760
        %2986 = vmatpush1.msra.mxu0 %v2985
        %v2987 = vand.u32 %v694, 4294901760
        %v2988 = vsub.f32 %v694, %v2987
        %v2989 = vand.u32 %v2988, 4294901760
        %2990 = vmatprep.subr.mxu0 %v2989
        %v2991 = vand.u32 %v693, 4294901760
        %v2992 = vsub.f32 %v693, %v2991
        %v2993 = vand.u32 %v2992, 4294901760
        %2994 = vmatpush1.msra.mxu0 %v2993
        %v2995 = vand.u32 %v697, 4294901760
        %v2996 = vsub.f32 %v697, %v2995
        %v2997 = vand.u32 %v2996, 4294901760
        %2998 = vmatprep.subr.mxu0 %v2997
        %v2999 = vand.u32 %v696, 4294901760
        %v3000 = vsub.f32 %v696, %v2999
        %v3001 = vand.u32 %v3000, 4294901760
        %3002 = vmatpush1.msra.mxu0 %v3001
        %v3003 = vand.u32 %v700, 4294901760
        %v3004 = vsub.f32 %v700, %v3003
        %v3005 = vand.u32 %v3004, 4294901760
        %3006 = vmatprep.subr.mxu0 %v3005
        %v3007 = vand.u32 %v699, 4294901760
        %v3008 = vsub.f32 %v699, %v3007
        %v3009 = vand.u32 %v3008, 4294901760
        %3010 = vmatpush1.msra.mxu0 %v3009
        %v3011 = vand.u32 %v703, 4294901760
        %v3012 = vsub.f32 %v703, %v3011
        %v3013 = vand.u32 %v3012, 4294901760
        %3014 = vmatprep.subr.mxu0 %v3013
        %v3015 = vand.u32 %v702, 4294901760
        %v3016 = vsub.f32 %v702, %v3015
        %v3017 = vand.u32 %v3016, 4294901760
        %3018 = vmatpush1.msra.mxu0 %v3017
        %v3019 = vand.u32 %v706, 4294901760
        %v3020 = vsub.f32 %v706, %v3019
        %v3021 = vand.u32 %v3020, 4294901760
        %3022 = vmatprep.subr.mxu0 %v3021
        %v3023 = vand.u32 %v705, 4294901760
        %v3024 = vsub.f32 %v705, %v3023
        %v3025 = vand.u32 %v3024, 4294901760
        %3026 = vmatpush1.msra.mxu0 %v3025
        %v3027 = vand.u32 %v709, 4294901760
        %v3028 = vsub.f32 %v709, %v3027
        %v3029 = vand.u32 %v3028, 4294901760
        %3030 = vmatprep.subr.mxu0 %v3029
        %v3031 = vand.u32 %v708, 4294901760
        %v3032 = vsub.f32 %v708, %v3031
        %v3033 = vand.u32 %v3032, 4294901760
        %3034 = vmatpush1.msra.mxu0 %v3033
        %v3035 = vand.u32 %v712, 4294901760
        %v3036 = vsub.f32 %v712, %v3035
        %v3037 = vand.u32 %v3036, 4294901760
        %3038 = vmatprep.subr.mxu0 %v3037
        %v3039 = vand.u32 %v711, 4294901760
        %v3040 = vsub.f32 %v711, %v3039
        %v3041 = vand.u32 %v3040, 4294901760
        %3042 = vmatpush1.msra.mxu0 %v3041
        %v3043 = vand.u32 %v715, 4294901760
        %v3044 = vsub.f32 %v715, %v3043
        %v3045 = vand.u32 %v3044, 4294901760
        %3046 = vmatprep.subr.mxu0 %v3045
        %v3047 = vand.u32 %v714, 4294901760
        %v3048 = vsub.f32 %v714, %v3047
        %v3049 = vand.u32 %v3048, 4294901760
        %3050 = vmatpush1.msra.mxu0 %v3049
        %v3051 = vand.u32 %v718, 4294901760
        %v3052 = vsub.f32 %v718, %v3051
        %v3053 = vand.u32 %v3052, 4294901760
        %3054 = vmatprep.subr.mxu0 %v3053
        %v3055 = vand.u32 %v717, 4294901760
        %v3056 = vsub.f32 %v717, %v3055
        %v3057 = vand.u32 %v3056, 4294901760
        %3058 = vmatpush1.msra.mxu0 %v3057
        %v3059 = vand.u32 %v721, 4294901760
        %v3060 = vsub.f32 %v721, %v3059
        %v3061 = vand.u32 %v3060, 4294901760
        %3062 = vmatprep.subr.mxu0 %v3061
        %v3063 = vand.u32 %v720, 4294901760
        %v3064 = vsub.f32 %v720, %v3063
        %v3065 = vand.u32 %v3064, 4294901760
        %3066 = vmatpush1.msra.mxu0 %v3065
        %v3067 = vand.u32 %v724, 4294901760
        %v3068 = vsub.f32 %v724, %v3067
        %v3069 = vand.u32 %v3068, 4294901760
        %3070 = vmatprep.subr.mxu0 %v3069
        %v3071 = vand.u32 %v723, 4294901760
        %v3072 = vsub.f32 %v723, %v3071
        %v3073 = vand.u32 %v3072, 4294901760
        %3074 = vmatpush1.msra.mxu0 %v3073
        %v3075 = vand.u32 %v727, 4294901760
        %v3076 = vsub.f32 %v727, %v3075
        %v3077 = vand.u32 %v3076, 4294901760
        %3078 = vmatprep.subr.mxu0 %v3077
        %v3079 = vand.u32 %v726, 4294901760
        %v3080 = vsub.f32 %v726, %v3079
        %v3081 = vand.u32 %v3080, 4294901760
        %3082 = vmatpush1.msra.mxu0 %v3081
        %v3083 = vand.u32 %v730, 4294901760
        %v3084 = vsub.f32 %v730, %v3083
        %v3085 = vand.u32 %v3084, 4294901760
        %3086 = vmatprep.subr.mxu0 %v3085
        %v3087 = vand.u32 %v729, 4294901760
        %v3088 = vsub.f32 %v729, %v3087
        %v3089 = vand.u32 %v3088, 4294901760
        %3090 = vmatpush1.msra.mxu0 %v3089
        %v3091 = vand.u32 %v733, 4294901760
        %v3092 = vsub.f32 %v733, %v3091
        %v3093 = vand.u32 %v3092, 4294901760
        %3094 = vmatprep.subr.mxu0 %v3093
        %v3095 = vand.u32 %v732, 4294901760
        %v3096 = vsub.f32 %v732, %v3095
        %v3097 = vand.u32 %v3096, 4294901760
        %3098 = vmatpush1.msra.mxu0 %v3097
        %v3099 = vand.u32 %v736, 4294901760
        %v3100 = vsub.f32 %v736, %v3099
        %v3101 = vand.u32 %v3100, 4294901760
        %3102 = vmatprep.subr.mxu0 %v3101
        %v3103 = vand.u32 %v735, 4294901760
        %v3104 = vsub.f32 %v735, %v3103
        %v3105 = vand.u32 %v3104, 4294901760
        %3106 = vmatpush1.msra.mxu0 %v3105
        %v3107 = vand.u32 %v739, 4294901760
        %v3108 = vsub.f32 %v739, %v3107
        %v3109 = vand.u32 %v3108, 4294901760
        %3110 = vmatprep.subr.mxu0 %v3109
        %v3111 = vand.u32 %v738, 4294901760
        %v3112 = vsub.f32 %v738, %v3111
        %v3113 = vand.u32 %v3112, 4294901760
        %3114 = vmatpush1.msra.mxu0 %v3113
        %v3115 = vand.u32 %v742, 4294901760
        %v3116 = vsub.f32 %v742, %v3115
        %v3117 = vand.u32 %v3116, 4294901760
        %3118 = vmatprep.subr.mxu0 %v3117
        %v3119 = vand.u32 %v741, 4294901760
        %v3120 = vsub.f32 %v741, %v3119
        %v3121 = vand.u32 %v3120, 4294901760
        %3122 = vmatpush1.msra.mxu0 %v3121
        %v3123 = vand.u32 %v745, 4294901760
        %v3124 = vsub.f32 %v745, %v3123
        %v3125 = vand.u32 %v3124, 4294901760
        %3126 = vmatprep.subr.mxu0 %v3125
        %v3127 = vand.u32 %v744, 4294901760
        %v3128 = vsub.f32 %v744, %v3127
        %v3129 = vand.u32 %v3128, 4294901760
        %3130 = vmatpush1.msra.mxu0 %v3129
        %v3131 = vand.u32 %v748, 4294901760
        %v3132 = vsub.f32 %v748, %v3131
        %v3133 = vand.u32 %v3132, 4294901760
        %3134 = vmatprep.subr.mxu0 %v3133
        %v3135 = vand.u32 %v747, 4294901760
        %v3136 = vsub.f32 %v747, %v3135
        %v3137 = vand.u32 %v3136, 4294901760
        %3138 = vmatpush1.msra.mxu0 %v3137
        %v3139 = vand.u32 %v751, 4294901760
        %v3140 = vsub.f32 %v751, %v3139
        %v3141 = vand.u32 %v3140, 4294901760
        %3142 = vmatprep.subr.mxu0 %v3141
        %v3143 = vand.u32 %v750, 4294901760
        %v3144 = vsub.f32 %v750, %v3143
        %v3145 = vand.u32 %v3144, 4294901760
        %3146 = vmatpush1.msra.mxu0 %v3145
        %v3147 = vand.u32 %v754, 4294901760
        %v3148 = vsub.f32 %v754, %v3147
        %v3149 = vand.u32 %v3148, 4294901760
        %3150 = vmatprep.subr.mxu0 %v3149
        %v3151 = vand.u32 %v753, 4294901760
        %v3152 = vsub.f32 %v753, %v3151
        %v3153 = vand.u32 %v3152, 4294901760
        %3154 = vmatpush1.msra.mxu0 %v3153
        %v3155 = vand.u32 %v757, 4294901760
        %v3156 = vsub.f32 %v757, %v3155
        %v3157 = vand.u32 %v3156, 4294901760
        %3158 = vmatprep.subr.mxu0 %v3157
        %v3159 = vand.u32 %v756, 4294901760
        %v3160 = vsub.f32 %v756, %v3159
        %v3161 = vand.u32 %v3160, 4294901760
        %3162 = vmatpush1.msra.mxu0 %v3161
        %v3163 = vand.u32 %v760, 4294901760
        %v3164 = vsub.f32 %v760, %v3163
        %v3165 = vand.u32 %v3164, 4294901760
        %3166 = vmatprep.subr.mxu0 %v3165
        %v3167 = vand.u32 %v759, 4294901760
        %v3168 = vsub.f32 %v759, %v3167
        %v3169 = vand.u32 %v3168, 4294901760
        %3170 = vmatpush1.msra.mxu0 %v3169
        %v3171 = vand.u32 %v763, 4294901760
        %v3172 = vsub.f32 %v763, %v3171
        %v3173 = vand.u32 %v3172, 4294901760
        %3174 = vmatprep.subr.mxu0 %v3173
        %v3175 = vand.u32 %v762, 4294901760
        %v3176 = vsub.f32 %v762, %v3175
        %v3177 = vand.u32 %v3176, 4294901760
        %3178 = vmatpush1.msra.mxu0 %v3177
        %v3179 = vand.u32 %v766, 4294901760
        %v3180 = vsub.f32 %v766, %v3179
        %v3181 = vand.u32 %v3180, 4294901760
        %3182 = vmatprep.subr.mxu0 %v3181
        %v3183 = vand.u32 %v765, 4294901760
        %v3184 = vsub.f32 %v765, %v3183
        %v3185 = vand.u32 %v3184, 4294901760
        %3186 = vmatpush1.msra.mxu0 %v3185
        %v3187 = vand.u32 %v769, 4294901760
        %v3188 = vsub.f32 %v769, %v3187
        %v3189 = vand.u32 %v3188, 4294901760
        %3190 = vmatprep.subr.mxu0 %v3189
        %v3191 = vand.u32 %v768, 4294901760
        %v3192 = vsub.f32 %v768, %v3191
        %v3193 = vand.u32 %v3192, 4294901760
        %3194 = vmatpush1.msra.mxu0 %v3193
        %v3195 = vand.u32 %v772, 4294901760
        %v3196 = vsub.f32 %v772, %v3195
        %v3197 = vand.u32 %v3196, 4294901760
        %3198 = vmatprep.subr.mxu0 %v3197
        %v3199 = vand.u32 %v771, 4294901760
        %v3200 = vsub.f32 %v771, %v3199
        %v3201 = vand.u32 %v3200, 4294901760
        %3202 = vmatpush1.msra.mxu0 %v3201
        %v3203 = vand.u32 %v775, 4294901760
        %v3204 = vsub.f32 %v775, %v3203
        %v3205 = vand.u32 %v3204, 4294901760
        %3206 = vmatprep.subr.mxu0 %v3205
        %v3207 = vand.u32 %v774, 4294901760
        %v3208 = vsub.f32 %v774, %v3207
        %v3209 = vand.u32 %v3208, 4294901760
        %3210 = vmatpush1.msra.mxu0 %v3209
        %v3211 = vand.u32 %v778, 4294901760
        %v3212 = vsub.f32 %v778, %v3211
        %v3213 = vand.u32 %v3212, 4294901760
        %3214 = vmatprep.subr.mxu0 %v3213
        %v3215 = vand.u32 %v777, 4294901760
        %v3216 = vsub.f32 %v777, %v3215
        %v3217 = vand.u32 %v3216, 4294901760
        %3218 = vmatpush1.msra.mxu0 %v3217
        %v3219 = vand.u32 %v781, 4294901760
        %v3220 = vsub.f32 %v781, %v3219
        %v3221 = vand.u32 %v3220, 4294901760
        %3222 = vmatprep.subr.mxu0 %v3221
        %v3223 = vand.u32 %v780, 4294901760
        %v3224 = vsub.f32 %v780, %v3223
        %v3225 = vand.u32 %v3224, 4294901760
        %3226 = vmatpush1.msra.mxu0 %v3225
        %v3227 = vand.u32 %v800, 4294901760
        %3228 = vmatprep.mubr.f32.mxu0 %v3227
        %v3229 = vand.u32 %v798, 4294901760
        %3230 = vmatmul.mubr.f32.gmra.mrb[0].mxu0 %v3229
        %v3231 = vpop.f32.mrb[0].mxu0
        %v3232 = vadd.f32 %v2967, %v3231
        %v3233 = vpop.f32.mrb[0].mxu0
        %v3234 = vadd.f32 %v2969, %v3233
        %3235 = vdwg.mxu0
        %v3236 = vand.u32 %v688, 4294901760
        %3237 = vmatprep.subr.mxu0 %v3236
        %v3238 = vand.u32 %v687, 4294901760
        %3239 = vmatpush1.msra.mxu0 %v3238
        %v3240 = vand.u32 %v691, 4294901760
        %3241 = vmatprep.subr.mxu0 %v3240
        %v3242 = vand.u32 %v690, 4294901760
        %3243 = vmatpush1.msra.mxu0 %v3242
        %v3244 = vand.u32 %v694, 4294901760
        %3245 = vmatprep.subr.mxu0 %v3244
        %v3246 = vand.u32 %v693, 4294901760
        %3247 = vmatpush1.msra.mxu0 %v3246
        %v3248 = vand.u32 %v697, 4294901760
        %3249 = vmatprep.subr.mxu0 %v3248
        %v3250 = vand.u32 %v696, 4294901760
        %3251 = vmatpush1.msra.mxu0 %v3250
        %v3252 = vand.u32 %v700, 4294901760
        %3253 = vmatprep.subr.mxu0 %v3252
        %v3254 = vand.u32 %v699, 4294901760
        %3255 = vmatpush1.msra.mxu0 %v3254
        %v3256 = vand.u32 %v703, 4294901760
        %3257 = vmatprep.subr.mxu0 %v3256
        %v3258 = vand.u32 %v702, 4294901760
        %3259 = vmatpush1.msra.mxu0 %v3258
        %v3260 = vand.u32 %v706, 4294901760
        %3261 = vmatprep.subr.mxu0 %v3260
        %v3262 = vand.u32 %v705, 4294901760
        %3263 = vmatpush1.msra.mxu0 %v3262
        %v3264 = vand.u32 %v709, 4294901760
        %3265 = vmatprep.subr.mxu0 %v3264
        %v3266 = vand.u32 %v708, 4294901760
        %3267 = vmatpush1.msra.mxu0 %v3266
        %v3268 = vand.u32 %v712, 4294901760
        %3269 = vmatprep.subr.mxu0 %v3268
        %v3270 = vand.u32 %v711, 4294901760
        %3271 = vmatpush1.msra.mxu0 %v3270
        %v3272 = vand.u32 %v715, 4294901760
        %3273 = vmatprep.subr.mxu0 %v3272
        %v3274 = vand.u32 %v714, 4294901760
        %3275 = vmatpush1.msra.mxu0 %v3274
        %v3276 = vand.u32 %v718, 4294901760
        %3277 = vmatprep.subr.mxu0 %v3276
        %v3278 = vand.u32 %v717, 4294901760
        %3279 = vmatpush1.msra.mxu0 %v3278
        %v3280 = vand.u32 %v721, 4294901760
        %3281 = vmatprep.subr.mxu0 %v3280
        %v3282 = vand.u32 %v720, 4294901760
        %3283 = vmatpush1.msra.mxu0 %v3282
        %v3284 = vand.u32 %v724, 4294901760
        %3285 = vmatprep.subr.mxu0 %v3284
        %v3286 = vand.u32 %v723, 4294901760
        %3287 = vmatpush1.msra.mxu0 %v3286
        %v3288 = vand.u32 %v727, 4294901760
        %3289 = vmatprep.subr.mxu0 %v3288
        %v3290 = vand.u32 %v726, 4294901760
        %3291 = vmatpush1.msra.mxu0 %v3290
        %v3292 = vand.u32 %v730, 4294901760
        %3293 = vmatprep.subr.mxu0 %v3292
        %v3294 = vand.u32 %v729, 4294901760
        %3295 = vmatpush1.msra.mxu0 %v3294
        %v3296 = vand.u32 %v733, 4294901760
        %3297 = vmatprep.subr.mxu0 %v3296
        %v3298 = vand.u32 %v732, 4294901760
        %3299 = vmatpush1.msra.mxu0 %v3298
        %v3300 = vand.u32 %v736, 4294901760
        %3301 = vmatprep.subr.mxu0 %v3300
        %v3302 = vand.u32 %v735, 4294901760
        %3303 = vmatpush1.msra.mxu0 %v3302
        %v3304 = vand.u32 %v739, 4294901760
        %3305 = vmatprep.subr.mxu0 %v3304
        %v3306 = vand.u32 %v738, 4294901760
        %3307 = vmatpush1.msra.mxu0 %v3306
        %v3308 = vand.u32 %v742, 4294901760
        %3309 = vmatprep.subr.mxu0 %v3308
        %v3310 = vand.u32 %v741, 4294901760
        %3311 = vmatpush1.msra.mxu0 %v3310
        %v3312 = vand.u32 %v745, 4294901760
        %3313 = vmatprep.subr.mxu0 %v3312
        %v3314 = vand.u32 %v744, 4294901760
        %3315 = vmatpush1.msra.mxu0 %v3314
        %v3316 = vand.u32 %v748, 4294901760
        %3317 = vmatprep.subr.mxu0 %v3316
        %v3318 = vand.u32 %v747, 4294901760
        %3319 = vmatpush1.msra.mxu0 %v3318
        %v3320 = vand.u32 %v751, 4294901760
        %3321 = vmatprep.subr.mxu0 %v3320
        %v3322 = vand.u32 %v750, 4294901760
        %3323 = vmatpush1.msra.mxu0 %v3322
        %v3324 = vand.u32 %v754, 4294901760
        %3325 = vmatprep.subr.mxu0 %v3324
        %v3326 = vand.u32 %v753, 4294901760
        %3327 = vmatpush1.msra.mxu0 %v3326
        %v3328 = vand.u32 %v757, 4294901760
        %3329 = vmatprep.subr.mxu0 %v3328
        %v3330 = vand.u32 %v756, 4294901760
        %3331 = vmatpush1.msra.mxu0 %v3330
        %v3332 = vand.u32 %v760, 4294901760
        %3333 = vmatprep.subr.mxu0 %v3332
        %v3334 = vand.u32 %v759, 4294901760
        %3335 = vmatpush1.msra.mxu0 %v3334
        %v3336 = vand.u32 %v763, 4294901760
        %3337 = vmatprep.subr.mxu0 %v3336
        %v3338 = vand.u32 %v762, 4294901760
        %3339 = vmatpush1.msra.mxu0 %v3338
        %v3340 = vand.u32 %v766, 4294901760
        %3341 = vmatprep.subr.mxu0 %v3340
        %v3342 = vand.u32 %v765, 4294901760
        %3343 = vmatpush1.msra.mxu0 %v3342
        %v3344 = vand.u32 %v769, 4294901760
        %3345 = vmatprep.subr.mxu0 %v3344
        %v3346 = vand.u32 %v768, 4294901760
        %3347 = vmatpush1.msra.mxu0 %v3346
        %v3348 = vand.u32 %v772, 4294901760
        %3349 = vmatprep.subr.mxu0 %v3348
        %v3350 = vand.u32 %v771, 4294901760
        %3351 = vmatpush1.msra.mxu0 %v3350
        %v3352 = vand.u32 %v775, 4294901760
        %3353 = vmatprep.subr.mxu0 %v3352
        %v3354 = vand.u32 %v774, 4294901760
        %3355 = vmatpush1.msra.mxu0 %v3354
        %v3356 = vand.u32 %v778, 4294901760
        %3357 = vmatprep.subr.mxu0 %v3356
        %v3358 = vand.u32 %v777, 4294901760
        %3359 = vmatpush1.msra.mxu0 %v3358
        %v3360 = vand.u32 %v781, 4294901760
        %3361 = vmatprep.subr.mxu0 %v3360
        %v3362 = vand.u32 %v780, 4294901760
        %3363 = vmatpush1.msra.mxu0 %v3362
        %v3364 = vand.u32 %v800, 4294901760
        %3365 = vmatprep.mubr.f32.mxu0 %v3364
        %v3366 = vand.u32 %v798, 4294901760
        %3367 = vmatmul.mubr.f32.gmra.mrb[0].mxu0 %v3366
        %v3368 = vpop.f32.mrb[0].mxu0
        %v3369 = vadd.f32 %v3232, %v3368
        %v3370 = vpop.f32.mrb[0].mxu0
        %v3371 = vadd.f32 %v3234, %v3370
        %3372 = vdwg.mxu0
        %3373 = vmatprep.subr.mxu0 0.0
        %v3374 = vand.u32 %v593, 4294901760
        %3375 = vmatpush1.msra.mxu0 %v3374
        %3376 = vmatprep.subr.mxu0 0.0
        %v3377 = vand.u32 %v596, 4294901760
        %3378 = vmatpush1.msra.mxu0 %v3377
        %3379 = vmatprep.subr.mxu0 0.0
        %v3380 = vand.u32 %v599, 4294901760
        %3381 = vmatpush1.msra.mxu0 %v3380
        %3382 = vmatprep.subr.mxu0 0.0
        %v3383 = vand.u32 %v602, 4294901760
        %3384 = vmatpush1.msra.mxu0 %v3383
        %3385 = vmatprep.subr.mxu0 0.0
        %v3386 = vand.u32 %v605, 4294901760
        %3387 = vmatpush1.msra.mxu0 %v3386
        %3388 = vmatprep.subr.mxu0 0.0
        %v3389 = vand.u32 %v608, 4294901760
        %3390 = vmatpush1.msra.mxu0 %v3389
        %3391 = vmatprep.subr.mxu0 0.0
        %v3392 = vand.u32 %v611, 4294901760
        %3393 = vmatpush1.msra.mxu0 %v3392
        %3394 = vmatprep.subr.mxu0 0.0
        %v3395 = vand.u32 %v614, 4294901760
        %3396 = vmatpush1.msra.mxu0 %v3395
        %3397 = vmatprep.subr.mxu0 0.0
        %v3398 = vand.u32 %v617, 4294901760
        %3399 = vmatpush1.msra.mxu0 %v3398
        %3400 = vmatprep.subr.mxu0 0.0
        %v3401 = vand.u32 %v620, 4294901760
        %3402 = vmatpush1.msra.mxu0 %v3401
        %3403 = vmatprep.subr.mxu0 0.0
        %v3404 = vand.u32 %v623, 4294901760
        %3405 = vmatpush1.msra.mxu0 %v3404
        %3406 = vmatprep.subr.mxu0 0.0
        %v3407 = vand.u32 %v626, 4294901760
        %3408 = vmatpush1.msra.mxu0 %v3407
        %3409 = vmatprep.subr.mxu0 0.0
        %v3410 = vand.u32 %v629, 4294901760
        %3411 = vmatpush1.msra.mxu0 %v3410
        %3412 = vmatprep.subr.mxu0 0.0
        %v3413 = vand.u32 %v632, 4294901760
        %3414 = vmatpush1.msra.mxu0 %v3413
        %3415 = vmatprep.subr.mxu0 0.0
        %v3416 = vand.u32 %v635, 4294901760
        %3417 = vmatpush1.msra.mxu0 %v3416
        %3418 = vmatprep.subr.mxu0 0.0
        %v3419 = vand.u32 %v638, 4294901760
        %3420 = vmatpush1.msra.mxu0 %v3419
        %3421 = vmatprep.subr.mxu0 0.0
        %v3422 = vand.u32 %v641, 4294901760
        %3423 = vmatpush1.msra.mxu0 %v3422
        %3424 = vmatprep.subr.mxu0 0.0
        %v3425 = vand.u32 %v644, 4294901760
        %3426 = vmatpush1.msra.mxu0 %v3425
        %3427 = vmatprep.subr.mxu0 0.0
        %v3428 = vand.u32 %v647, 4294901760
        %3429 = vmatpush1.msra.mxu0 %v3428
        %3430 = vmatprep.subr.mxu0 0.0
        %v3431 = vand.u32 %v650, 4294901760
        %3432 = vmatpush1.msra.mxu0 %v3431
        %3433 = vmatprep.subr.mxu0 0.0
        %v3434 = vand.u32 %v653, 4294901760
        %3435 = vmatpush1.msra.mxu0 %v3434
        %3436 = vmatprep.subr.mxu0 0.0
        %v3437 = vand.u32 %v656, 4294901760
        %3438 = vmatpush1.msra.mxu0 %v3437
        %3439 = vmatprep.subr.mxu0 0.0
        %v3440 = vand.u32 %v659, 4294901760
        %3441 = vmatpush1.msra.mxu0 %v3440
        %3442 = vmatprep.subr.mxu0 0.0
        %v3443 = vand.u32 %v662, 4294901760
        %3444 = vmatpush1.msra.mxu0 %v3443
        %3445 = vmatprep.subr.mxu0 0.0
        %v3446 = vand.u32 %v665, 4294901760
        %3447 = vmatpush1.msra.mxu0 %v3446
        %3448 = vmatprep.subr.mxu0 0.0
        %v3449 = vand.u32 %v668, 4294901760
        %3450 = vmatpush1.msra.mxu0 %v3449
        %3451 = vmatprep.subr.mxu0 0.0
        %v3452 = vand.u32 %v671, 4294901760
        %3453 = vmatpush1.msra.mxu0 %v3452
        %3454 = vmatprep.subr.mxu0 0.0
        %v3455 = vand.u32 %v674, 4294901760
        %3456 = vmatpush1.msra.mxu0 %v3455
        %3457 = vmatprep.subr.mxu0 0.0
        %v3458 = vand.u32 %v677, 4294901760
        %3459 = vmatpush1.msra.mxu0 %v3458
        %3460 = vmatprep.subr.mxu0 0.0
        %v3461 = vand.u32 %v680, 4294901760
        %3462 = vmatpush1.msra.mxu0 %v3461
        %3463 = vmatprep.subr.mxu0 0.0
        %v3464 = vand.u32 %v683, 4294901760
        %3465 = vmatpush1.msra.mxu0 %v3464
        %3466 = vmatprep.subr.mxu0 0.0
        %v3467 = vand.u32 %v686, 4294901760
        %3468 = vmatpush1.msra.mxu0 %v3467
        %v3469 = vand.u32 %v799, 4294901760
        %v3470 = vsub.f32 %v799, %v3469
        %v3471 = vand.u32 %v3470, 4294901760
        %v3472 = vsub.f32 %v3470, %v3471
        %v3473 = vand.u32 %v3472, 4294901760
        %3474 = vmatprep.mubr.f32.mxu0 %v3473
        %v3475 = vand.u32 %v791, 4294901760
        %v3476 = vsub.f32 %v791, %v3475
        %v3477 = vand.u32 %v3476, 4294901760
        %v3478 = vsub.f32 %v3476, %v3477
        %v3479 = vand.u32 %v3478, 4294901760
        %3480 = vmatmul.mubr.f32.gmra.mrb[0].mxu0 %v3479
        %v3481 = vpop.f32.mrb[0].mxu0
        %v3482 = vadd.f32 0.0, %v3481
        %v3483 = vpop.f32.mrb[0].mxu0
        %3484 = vdwg.mxu0
        %3485 = vmatprep.subr.mxu0 0.0
        %v3486 = vand.u32 %v593, 4294901760
        %v3487 = vsub.f32 %v593, %v3486
        %v3488 = vand.u32 %v3487, 4294901760
        %v3489 = vsub.f32 %v3487, %v3488
        %v3490 = vand.u32 %v3489, 4294901760
        %3491 = vmatpush1.msra.mxu0 %v3490
        %3492 = vmatprep.subr.mxu0 0.0
        %v3493 = vand.u32 %v596, 4294901760
        %v3494 = vsub.f32 %v596, %v3493
        %v3495 = vand.u32 %v3494, 4294901760
        %v3496 = vsub.f32 %v3494, %v3495
        %v3497 = vand.u32 %v3496, 4294901760
        %3498 = vmatpush1.msra.mxu0 %v3497
        %3499 = vmatprep.subr.mxu0 0.0
        %v3500 = vand.u32 %v599, 4294901760
        %v3501 = vsub.f32 %v599, %v3500
        %v3502 = vand.u32 %v3501, 4294901760
        %v3503 = vsub.f32 %v3501, %v3502
        %v3504 = vand.u32 %v3503, 4294901760
        %3505 = vmatpush1.msra.mxu0 %v3504
        %3506 = vmatprep.subr.mxu0 0.0
        %v3507 = vand.u32 %v602, 4294901760
        %v3508 = vsub.f32 %v602, %v3507
        %v3509 = vand.u32 %v3508, 4294901760
        %v3510 = vsub.f32 %v3508, %v3509
        %v3511 = vand.u32 %v3510, 4294901760
        %3512 = vmatpush1.msra.mxu0 %v3511
        %3513 = vmatprep.subr.mxu0 0.0
        %v3514 = vand.u32 %v605, 4294901760
        %v3515 = vsub.f32 %v605, %v3514
        %v3516 = vand.u32 %v3515, 4294901760
        %v3517 = vsub.f32 %v3515, %v3516
        %v3518 = vand.u32 %v3517, 4294901760
        %3519 = vmatpush1.msra.mxu0 %v3518
        %3520 = vmatprep.subr.mxu0 0.0
        %v3521 = vand.u32 %v608, 4294901760
        %v3522 = vsub.f32 %v608, %v3521
        %v3523 = vand.u32 %v3522, 4294901760
        %v3524 = vsub.f32 %v3522, %v3523
        %v3525 = vand.u32 %v3524, 4294901760
        %3526 = vmatpush1.msra.mxu0 %v3525
        %3527 = vmatprep.subr.mxu0 0.0
        %v3528 = vand.u32 %v611, 4294901760
        %v3529 = vsub.f32 %v611, %v3528
        %v3530 = vand.u32 %v3529, 4294901760
        %v3531 = vsub.f32 %v3529, %v3530
        %v3532 = vand.u32 %v3531, 4294901760
        %3533 = vmatpush1.msra.mxu0 %v3532
        %3534 = vmatprep.subr.mxu0 0.0
        %v3535 = vand.u32 %v614, 4294901760
        %v3536 = vsub.f32 %v614, %v3535
        %v3537 = vand.u32 %v3536, 4294901760
        %v3538 = vsub.f32 %v3536, %v3537
        %v3539 = vand.u32 %v3538, 4294901760
        %3540 = vmatpush1.msra.mxu0 %v3539
        %3541 = vmatprep.subr.mxu0 0.0
        %v3542 = vand.u32 %v617, 4294901760
        %v3543 = vsub.f32 %v617, %v3542
        %v3544 = vand.u32 %v3543, 4294901760
        %v3545 = vsub.f32 %v3543, %v3544
        %v3546 = vand.u32 %v3545, 4294901760
        %3547 = vmatpush1.msra.mxu0 %v3546
        %3548 = vmatprep.subr.mxu0 0.0
        %v3549 = vand.u32 %v620, 4294901760
        %v3550 = vsub.f32 %v620, %v3549
        %v3551 = vand.u32 %v3550, 4294901760
        %v3552 = vsub.f32 %v3550, %v3551
        %v3553 = vand.u32 %v3552, 4294901760
        %3554 = vmatpush1.msra.mxu0 %v3553
        %3555 = vmatprep.subr.mxu0 0.0
        %v3556 = vand.u32 %v623, 4294901760
        %v3557 = vsub.f32 %v623, %v3556
        %v3558 = vand.u32 %v3557, 4294901760
        %v3559 = vsub.f32 %v3557, %v3558
        %v3560 = vand.u32 %v3559, 4294901760
        %3561 = vmatpush1.msra.mxu0 %v3560
        %3562 = vmatprep.subr.mxu0 0.0
        %v3563 = vand.u32 %v626, 4294901760
        %v3564 = vsub.f32 %v626, %v3563
        %v3565 = vand.u32 %v3564, 4294901760
        %v3566 = vsub.f32 %v3564, %v3565
        %v3567 = vand.u32 %v3566, 4294901760
        %3568 = vmatpush1.msra.mxu0 %v3567
        %3569 = vmatprep.subr.mxu0 0.0
        %v3570 = vand.u32 %v629, 4294901760
        %v3571 = vsub.f32 %v629, %v3570
        %v3572 = vand.u32 %v3571, 4294901760
        %v3573 = vsub.f32 %v3571, %v3572
        %v3574 = vand.u32 %v3573, 4294901760
        %3575 = vmatpush1.msra.mxu0 %v3574
        %3576 = vmatprep.subr.mxu0 0.0
        %v3577 = vand.u32 %v632, 4294901760
        %v3578 = vsub.f32 %v632, %v3577
        %v3579 = vand.u32 %v3578, 4294901760
        %v3580 = vsub.f32 %v3578, %v3579
        %v3581 = vand.u32 %v3580, 4294901760
        %3582 = vmatpush1.msra.mxu0 %v3581
        %3583 = vmatprep.subr.mxu0 0.0
        %v3584 = vand.u32 %v635, 4294901760
        %v3585 = vsub.f32 %v635, %v3584
        %v3586 = vand.u32 %v3585, 4294901760
        %v3587 = vsub.f32 %v3585, %v3586
        %v3588 = vand.u32 %v3587, 4294901760
        %3589 = vmatpush1.msra.mxu0 %v3588
        %3590 = vmatprep.subr.mxu0 0.0
        %v3591 = vand.u32 %v638, 4294901760
        %v3592 = vsub.f32 %v638, %v3591
        %v3593 = vand.u32 %v3592, 4294901760
        %v3594 = vsub.f32 %v3592, %v3593
        %v3595 = vand.u32 %v3594, 4294901760
        %3596 = vmatpush1.msra.mxu0 %v3595
        %3597 = vmatprep.subr.mxu0 0.0
        %v3598 = vand.u32 %v641, 4294901760
        %v3599 = vsub.f32 %v641, %v3598
        %v3600 = vand.u32 %v3599, 4294901760
        %v3601 = vsub.f32 %v3599, %v3600
        %v3602 = vand.u32 %v3601, 4294901760
        %3603 = vmatpush1.msra.mxu0 %v3602
        %3604 = vmatprep.subr.mxu0 0.0
        %v3605 = vand.u32 %v644, 4294901760
        %v3606 = vsub.f32 %v644, %v3605
        %v3607 = vand.u32 %v3606, 4294901760
        %v3608 = vsub.f32 %v3606, %v3607
        %v3609 = vand.u32 %v3608, 4294901760
        %3610 = vmatpush1.msra.mxu0 %v3609
        %3611 = vmatprep.subr.mxu0 0.0
        %v3612 = vand.u32 %v647, 4294901760
        %v3613 = vsub.f32 %v647, %v3612
        %v3614 = vand.u32 %v3613, 4294901760
        %v3615 = vsub.f32 %v3613, %v3614
        %v3616 = vand.u32 %v3615, 4294901760
        %3617 = vmatpush1.msra.mxu0 %v3616
        %3618 = vmatprep.subr.mxu0 0.0
        %v3619 = vand.u32 %v650, 4294901760
        %v3620 = vsub.f32 %v650, %v3619
        %v3621 = vand.u32 %v3620, 4294901760
        %v3622 = vsub.f32 %v3620, %v3621
        %v3623 = vand.u32 %v3622, 4294901760
        %3624 = vmatpush1.msra.mxu0 %v3623
        %3625 = vmatprep.subr.mxu0 0.0
        %v3626 = vand.u32 %v653, 4294901760
        %v3627 = vsub.f32 %v653, %v3626
        %v3628 = vand.u32 %v3627, 4294901760
        %v3629 = vsub.f32 %v3627, %v3628
        %v3630 = vand.u32 %v3629, 4294901760
        %3631 = vmatpush1.msra.mxu0 %v3630
        %3632 = vmatprep.subr.mxu0 0.0
        %v3633 = vand.u32 %v656, 4294901760
        %v3634 = vsub.f32 %v656, %v3633
        %v3635 = vand.u32 %v3634, 4294901760
        %v3636 = vsub.f32 %v3634, %v3635
        %v3637 = vand.u32 %v3636, 4294901760
        %3638 = vmatpush1.msra.mxu0 %v3637
        %3639 = vmatprep.subr.mxu0 0.0
        %v3640 = vand.u32 %v659, 4294901760
        %v3641 = vsub.f32 %v659, %v3640
        %v3642 = vand.u32 %v3641, 4294901760
        %v3643 = vsub.f32 %v3641, %v3642
        %v3644 = vand.u32 %v3643, 4294901760
        %3645 = vmatpush1.msra.mxu0 %v3644
        %3646 = vmatprep.subr.mxu0 0.0
        %v3647 = vand.u32 %v662, 4294901760
        %v3648 = vsub.f32 %v662, %v3647
        %v3649 = vand.u32 %v3648, 4294901760
        %v3650 = vsub.f32 %v3648, %v3649
        %v3651 = vand.u32 %v3650, 4294901760
        %3652 = vmatpush1.msra.mxu0 %v3651
        %3653 = vmatprep.subr.mxu0 0.0
        %v3654 = vand.u32 %v665, 4294901760
        %v3655 = vsub.f32 %v665, %v3654
        %v3656 = vand.u32 %v3655, 4294901760
        %v3657 = vsub.f32 %v3655, %v3656
        %v3658 = vand.u32 %v3657, 4294901760
        %3659 = vmatpush1.msra.mxu0 %v3658
        %3660 = vmatprep.subr.mxu0 0.0
        %v3661 = vand.u32 %v668, 4294901760
        %v3662 = vsub.f32 %v668, %v3661
        %v3663 = vand.u32 %v3662, 4294901760
        %v3664 = vsub.f32 %v3662, %v3663
        %v3665 = vand.u32 %v3664, 4294901760
        %3666 = vmatpush1.msra.mxu0 %v3665
        %3667 = vmatprep.subr.mxu0 0.0
        %v3668 = vand.u32 %v671, 4294901760
        %v3669 = vsub.f32 %v671, %v3668
        %v3670 = vand.u32 %v3669, 4294901760
        %v3671 = vsub.f32 %v3669, %v3670
        %v3672 = vand.u32 %v3671, 4294901760
        %3673 = vmatpush1.msra.mxu0 %v3672
        %3674 = vmatprep.subr.mxu0 0.0
        %v3675 = vand.u32 %v674, 4294901760
        %v3676 = vsub.f32 %v674, %v3675
        %v3677 = vand.u32 %v3676, 4294901760
        %v3678 = vsub.f32 %v3676, %v3677
        %v3679 = vand.u32 %v3678, 4294901760
        %3680 = vmatpush1.msra.mxu0 %v3679
        %3681 = vmatprep.subr.mxu0 0.0
        %v3682 = vand.u32 %v677, 4294901760
        %v3683 = vsub.f32 %v677, %v3682
        %v3684 = vand.u32 %v3683, 4294901760
        %v3685 = vsub.f32 %v3683, %v3684
        %v3686 = vand.u32 %v3685, 4294901760
        %3687 = vmatpush1.msra.mxu0 %v3686
        %3688 = vmatprep.subr.mxu0 0.0
        %v3689 = vand.u32 %v680, 4294901760
        %v3690 = vsub.f32 %v680, %v3689
        %v3691 = vand.u32 %v3690, 4294901760
        %v3692 = vsub.f32 %v3690, %v3691
        %v3693 = vand.u32 %v3692, 4294901760
        %3694 = vmatpush1.msra.mxu0 %v3693
        %3695 = vmatprep.subr.mxu0 0.0
        %v3696 = vand.u32 %v683, 4294901760
        %v3697 = vsub.f32 %v683, %v3696
        %v3698 = vand.u32 %v3697, 4294901760
        %v3699 = vsub.f32 %v3697, %v3698
        %v3700 = vand.u32 %v3699, 4294901760
        %3701 = vmatpush1.msra.mxu0 %v3700
        %3702 = vmatprep.subr.mxu0 0.0
        %v3703 = vand.u32 %v686, 4294901760
        %v3704 = vsub.f32 %v686, %v3703
        %v3705 = vand.u32 %v3704, 4294901760
        %v3706 = vsub.f32 %v3704, %v3705
        %v3707 = vand.u32 %v3706, 4294901760
        %3708 = vmatpush1.msra.mxu0 %v3707
        %v3709 = vand.u32 %v799, 4294901760
        %3710 = vmatprep.mubr.f32.mxu0 %v3709
        %v3711 = vand.u32 %v791, 4294901760
        %3712 = vmatmul.mubr.f32.gmra.mrb[0].mxu0 %v3711
        %v3713 = vpop.f32.mrb[0].mxu0
        %v3714 = vadd.f32 %v3482, %v3713
        %v3715 = vpop.f32.mrb[0].mxu0
        %3716 = vdwg.mxu0
        %3717 = vmatprep.subr.mxu0 0.0
        %v3718 = vand.u32 %v593, 4294901760
        %v3719 = vsub.f32 %v593, %v3718
        %3720 = vmatpush1.msra.mxu0 %v3719
        %3721 = vmatprep.subr.mxu0 0.0
        %v3722 = vand.u32 %v596, 4294901760
        %v3723 = vsub.f32 %v596, %v3722
        %3724 = vmatpush1.msra.mxu0 %v3723
        %3725 = vmatprep.subr.mxu0 0.0
        %v3726 = vand.u32 %v599, 4294901760
        %v3727 = vsub.f32 %v599, %v3726
        %3728 = vmatpush1.msra.mxu0 %v3727
        %3729 = vmatprep.subr.mxu0 0.0
        %v3730 = vand.u32 %v602, 4294901760
        %v3731 = vsub.f32 %v602, %v3730
        %3732 = vmatpush1.msra.mxu0 %v3731
        %3733 = vmatprep.subr.mxu0 0.0
        %v3734 = vand.u32 %v605, 4294901760
        %v3735 = vsub.f32 %v605, %v3734
        %3736 = vmatpush1.msra.mxu0 %v3735
        %3737 = vmatprep.subr.mxu0 0.0
        %v3738 = vand.u32 %v608, 4294901760
        %v3739 = vsub.f32 %v608, %v3738
        %3740 = vmatpush1.msra.mxu0 %v3739
        %3741 = vmatprep.subr.mxu0 0.0
        %v3742 = vand.u32 %v611, 4294901760
        %v3743 = vsub.f32 %v611, %v3742
        %3744 = vmatpush1.msra.mxu0 %v3743
        %3745 = vmatprep.subr.mxu0 0.0
        %v3746 = vand.u32 %v614, 4294901760
        %v3747 = vsub.f32 %v614, %v3746
        %3748 = vmatpush1.msra.mxu0 %v3747
        %3749 = vmatprep.subr.mxu0 0.0
        %v3750 = vand.u32 %v617, 4294901760
        %v3751 = vsub.f32 %v617, %v3750
        %3752 = vmatpush1.msra.mxu0 %v3751
        %3753 = vmatprep.subr.mxu0 0.0
        %v3754 = vand.u32 %v620, 4294901760
        %v3755 = vsub.f32 %v620, %v3754
        %3756 = vmatpush1.msra.mxu0 %v3755
        %3757 = vmatprep.subr.mxu0 0.0
        %v3758 = vand.u32 %v623, 4294901760
        %v3759 = vsub.f32 %v623, %v3758
        %3760 = vmatpush1.msra.mxu0 %v3759
        %3761 = vmatprep.subr.mxu0 0.0
        %v3762 = vand.u32 %v626, 4294901760
        %v3763 = vsub.f32 %v626, %v3762
        %3764 = vmatpush1.msra.mxu0 %v3763
        %3765 = vmatprep.subr.mxu0 0.0
        %v3766 = vand.u32 %v629, 4294901760
        %v3767 = vsub.f32 %v629, %v3766
        %3768 = vmatpush1.msra.mxu0 %v3767
        %3769 = vmatprep.subr.mxu0 0.0
        %v3770 = vand.u32 %v632, 4294901760
        %v3771 = vsub.f32 %v632, %v3770
        %3772 = vmatpush1.msra.mxu0 %v3771
        %3773 = vmatprep.subr.mxu0 0.0
        %v3774 = vand.u32 %v635, 4294901760
        %v3775 = vsub.f32 %v635, %v3774
        %3776 = vmatpush1.msra.mxu0 %v3775
        %3777 = vmatprep.subr.mxu0 0.0
        %v3778 = vand.u32 %v638, 4294901760
        %v3779 = vsub.f32 %v638, %v3778
        %3780 = vmatpush1.msra.mxu0 %v3779
        %3781 = vmatprep.subr.mxu0 0.0
        %v3782 = vand.u32 %v641, 4294901760
        %v3783 = vsub.f32 %v641, %v3782
        %3784 = vmatpush1.msra.mxu0 %v3783
        %3785 = vmatprep.subr.mxu0 0.0
        %v3786 = vand.u32 %v644, 4294901760
        %v3787 = vsub.f32 %v644, %v3786
        %3788 = vmatpush1.msra.mxu0 %v3787
        %3789 = vmatprep.subr.mxu0 0.0
        %v3790 = vand.u32 %v647, 4294901760
        %v3791 = vsub.f32 %v647, %v3790
        %3792 = vmatpush1.msra.mxu0 %v3791
        %3793 = vmatprep.subr.mxu0 0.0
        %v3794 = vand.u32 %v650, 4294901760
        %v3795 = vsub.f32 %v650, %v3794
        %3796 = vmatpush1.msra.mxu0 %v3795
        %3797 = vmatprep.subr.mxu0 0.0
        %v3798 = vand.u32 %v653, 4294901760
        %v3799 = vsub.f32 %v653, %v3798
        %3800 = vmatpush1.msra.mxu0 %v3799
        %3801 = vmatprep.subr.mxu0 0.0
        %v3802 = vand.u32 %v656, 4294901760
        %v3803 = vsub.f32 %v656, %v3802
        %3804 = vmatpush1.msra.mxu0 %v3803
        %3805 = vmatprep.subr.mxu0 0.0
        %v3806 = vand.u32 %v659, 4294901760
        %v3807 = vsub.f32 %v659, %v3806
        %3808 = vmatpush1.msra.mxu0 %v3807
        %3809 = vmatprep.subr.mxu0 0.0
        %v3810 = vand.u32 %v662, 4294901760
        %v3811 = vsub.f32 %v662, %v3810
        %3812 = vmatpush1.msra.mxu0 %v3811
        %3813 = vmatprep.subr.mxu0 0.0
        %v3814 = vand.u32 %v665, 4294901760
        %v3815 = vsub.f32 %v665, %v3814
        %3816 = vmatpush1.msra.mxu0 %v3815
        %3817 = vmatprep.subr.mxu0 0.0
        %v3818 = vand.u32 %v668, 4294901760
        %v3819 = vsub.f32 %v668, %v3818
        %3820 = vmatpush1.msra.mxu0 %v3819
        %3821 = vmatprep.subr.mxu0 0.0
        %v3822 = vand.u32 %v671, 4294901760
        %v3823 = vsub.f32 %v671, %v3822
        %3824 = vmatpush1.msra.mxu0 %v3823
        %3825 = vmatprep.subr.mxu0 0.0
        %v3826 = vand.u32 %v674, 4294901760
        %v3827 = vsub.f32 %v674, %v3826
        %3828 = vmatpush1.msra.mxu0 %v3827
        %3829 = vmatprep.subr.mxu0 0.0
        %v3830 = vand.u32 %v677, 4294901760
        %v3831 = vsub.f32 %v677, %v3830
        %3832 = vmatpush1.msra.mxu0 %v3831
        %3833 = vmatprep.subr.mxu0 0.0
        %v3834 = vand.u32 %v680, 4294901760
        %v3835 = vsub.f32 %v680, %v3834
        %3836 = vmatpush1.msra.mxu0 %v3835
        %3837 = vmatprep.subr.mxu0 0.0
        %v3838 = vand.u32 %v683, 4294901760
        %v3839 = vsub.f32 %v683, %v3838
        %3840 = vmatpush1.msra.mxu0 %v3839
        %3841 = vmatprep.subr.mxu0 0.0
        %v3842 = vand.u32 %v686, 4294901760
        %v3843 = vsub.f32 %v686, %v3842
        %3844 = vmatpush1.msra.mxu0 %v3843
        %v3845 = vand.u32 %v799, 4294901760
        %v3846 = vsub.f32 %v799, %v3845
        %3847 = vmatprep.mubr.f32.mxu0 %v3846
        %v3848 = vand.u32 %v791, 4294901760
        %v3849 = vsub.f32 %v791, %v3848
        %3850 = vmatmul.mubr.f32.gmra.mrb[0].mxu0 %v3849
        %v3851 = vpop.f32.mrb[0].mxu0
        %v3852 = vadd.f32 %v3714, %v3851
        %v3853 = vpop.f32.mrb[0].mxu0
        %3854 = vdwg.mxu0
        %3855 = vmatprep.subr.mxu0 0.0
        %v3856 = vand.u32 %v593, 4294901760
        %3857 = vmatpush1.msra.mxu0 %v3856
        %3858 = vmatprep.subr.mxu0 0.0
        %v3859 = vand.u32 %v596, 4294901760
        %3860 = vmatpush1.msra.mxu0 %v3859
        %3861 = vmatprep.subr.mxu0 0.0
        %v3862 = vand.u32 %v599, 4294901760
        %3863 = vmatpush1.msra.mxu0 %v3862
        %3864 = vmatprep.subr.mxu0 0.0
        %v3865 = vand.u32 %v602, 4294901760
        %3866 = vmatpush1.msra.mxu0 %v3865
        %3867 = vmatprep.subr.mxu0 0.0
        %v3868 = vand.u32 %v605, 4294901760
        %3869 = vmatpush1.msra.mxu0 %v3868
        %3870 = vmatprep.subr.mxu0 0.0
        %v3871 = vand.u32 %v608, 4294901760
        %3872 = vmatpush1.msra.mxu0 %v3871
        %3873 = vmatprep.subr.mxu0 0.0
        %v3874 = vand.u32 %v611, 4294901760
        %3875 = vmatpush1.msra.mxu0 %v3874
        %3876 = vmatprep.subr.mxu0 0.0
        %v3877 = vand.u32 %v614, 4294901760
        %3878 = vmatpush1.msra.mxu0 %v3877
        %3879 = vmatprep.subr.mxu0 0.0
        %v3880 = vand.u32 %v617, 4294901760
        %3881 = vmatpush1.msra.mxu0 %v3880
        %3882 = vmatprep.subr.mxu0 0.0
        %v3883 = vand.u32 %v620, 4294901760
        %3884 = vmatpush1.msra.mxu0 %v3883
        %3885 = vmatprep.subr.mxu0 0.0
        %v3886 = vand.u32 %v623, 4294901760
        %3887 = vmatpush1.msra.mxu0 %v3886
        %3888 = vmatprep.subr.mxu0 0.0
        %v3889 = vand.u32 %v626, 4294901760
        %3890 = vmatpush1.msra.mxu0 %v3889
        %3891 = vmatprep.subr.mxu0 0.0
        %v3892 = vand.u32 %v629, 4294901760
        %3893 = vmatpush1.msra.mxu0 %v3892
        %3894 = vmatprep.subr.mxu0 0.0
        %v3895 = vand.u32 %v632, 4294901760
        %3896 = vmatpush1.msra.mxu0 %v3895
        %3897 = vmatprep.subr.mxu0 0.0
        %v3898 = vand.u32 %v635, 4294901760
        %3899 = vmatpush1.msra.mxu0 %v3898
        %3900 = vmatprep.subr.mxu0 0.0
        %v3901 = vand.u32 %v638, 4294901760
        %3902 = vmatpush1.msra.mxu0 %v3901
        %3903 = vmatprep.subr.mxu0 0.0
        %v3904 = vand.u32 %v641, 4294901760
        %3905 = vmatpush1.msra.mxu0 %v3904
        %3906 = vmatprep.subr.mxu0 0.0
        %v3907 = vand.u32 %v644, 4294901760
        %3908 = vmatpush1.msra.mxu0 %v3907
        %3909 = vmatprep.subr.mxu0 0.0
        %v3910 = vand.u32 %v647, 4294901760
        %3911 = vmatpush1.msra.mxu0 %v3910
        %3912 = vmatprep.subr.mxu0 0.0
        %v3913 = vand.u32 %v650, 4294901760
        %3914 = vmatpush1.msra.mxu0 %v3913
        %3915 = vmatprep.subr.mxu0 0.0
        %v3916 = vand.u32 %v653, 4294901760
        %3917 = vmatpush1.msra.mxu0 %v3916
        %3918 = vmatprep.subr.mxu0 0.0
        %v3919 = vand.u32 %v656, 4294901760
        %3920 = vmatpush1.msra.mxu0 %v3919
        %3921 = vmatprep.subr.mxu0 0.0
        %v3922 = vand.u32 %v659, 4294901760
        %3923 = vmatpush1.msra.mxu0 %v3922
        %3924 = vmatprep.subr.mxu0 0.0
        %v3925 = vand.u32 %v662, 4294901760
        %3926 = vmatpush1.msra.mxu0 %v3925
        %3927 = vmatprep.subr.mxu0 0.0
        %v3928 = vand.u32 %v665, 4294901760
        %3929 = vmatpush1.msra.mxu0 %v3928
        %3930 = vmatprep.subr.mxu0 0.0
        %v3931 = vand.u32 %v668, 4294901760
        %3932 = vmatpush1.msra.mxu0 %v3931
        %3933 = vmatprep.subr.mxu0 0.0
        %v3934 = vand.u32 %v671, 4294901760
        %3935 = vmatpush1.msra.mxu0 %v3934
        %3936 = vmatprep.subr.mxu0 0.0
        %v3937 = vand.u32 %v674, 4294901760
        %3938 = vmatpush1.msra.mxu0 %v3937
        %3939 = vmatprep.subr.mxu0 0.0
        %v3940 = vand.u32 %v677, 4294901760
        %3941 = vmatpush1.msra.mxu0 %v3940
        %3942 = vmatprep.subr.mxu0 0.0
        %v3943 = vand.u32 %v680, 4294901760
        %3944 = vmatpush1.msra.mxu0 %v3943
        %3945 = vmatprep.subr.mxu0 0.0
        %v3946 = vand.u32 %v683, 4294901760
        %3947 = vmatpush1.msra.mxu0 %v3946
        %3948 = vmatprep.subr.mxu0 0.0
        %v3949 = vand.u32 %v686, 4294901760
        %3950 = vmatpush1.msra.mxu0 %v3949
        %v3951 = vand.u32 %v799, 4294901760
        %v3952 = vsub.f32 %v799, %v3951
        %v3953 = vand.u32 %v3952, 4294901760
        %3954 = vmatprep.mubr.f32.mxu0 %v3953
        %v3955 = vand.u32 %v791, 4294901760
        %v3956 = vsub.f32 %v791, %v3955
        %v3957 = vand.u32 %v3956, 4294901760
        %3958 = vmatmul.mubr.f32.gmra.mrb[0].mxu0 %v3957
        %v3959 = vpop.f32.mrb[0].mxu0
        %v3960 = vadd.f32 %v3852, %v3959
        %v3961 = vpop.f32.mrb[0].mxu0
        %3962 = vdwg.mxu0
        %3963 = vmatprep.subr.mxu0 0.0
        %v3964 = vand.u32 %v593, 4294901760
        %v3965 = vsub.f32 %v593, %v3964
        %v3966 = vand.u32 %v3965, 4294901760
        %3967 = vmatpush1.msra.mxu0 %v3966
        %3968 = vmatprep.subr.mxu0 0.0
        %v3969 = vand.u32 %v596, 4294901760
        %v3970 = vsub.f32 %v596, %v3969
        %v3971 = vand.u32 %v3970, 4294901760
        %3972 = vmatpush1.msra.mxu0 %v3971
        %3973 = vmatprep.subr.mxu0 0.0
        %v3974 = vand.u32 %v599, 4294901760
        %v3975 = vsub.f32 %v599, %v3974
        %v3976 = vand.u32 %v3975, 4294901760
        %3977 = vmatpush1.msra.mxu0 %v3976
        %3978 = vmatprep.subr.mxu0 0.0
        %v3979 = vand.u32 %v602, 4294901760
        %v3980 = vsub.f32 %v602, %v3979
        %v3981 = vand.u32 %v3980, 4294901760
        %3982 = vmatpush1.msra.mxu0 %v3981
        %3983 = vmatprep.subr.mxu0 0.0
        %v3984 = vand.u32 %v605, 4294901760
        %v3985 = vsub.f32 %v605, %v3984
        %v3986 = vand.u32 %v3985, 4294901760
        %3987 = vmatpush1.msra.mxu0 %v3986
        %3988 = vmatprep.subr.mxu0 0.0
        %v3989 = vand.u32 %v608, 4294901760
        %v3990 = vsub.f32 %v608, %v3989
        %v3991 = vand.u32 %v3990, 4294901760
        %3992 = vmatpush1.msra.mxu0 %v3991
        %3993 = vmatprep.subr.mxu0 0.0
        %v3994 = vand.u32 %v611, 4294901760
        %v3995 = vsub.f32 %v611, %v3994
        %v3996 = vand.u32 %v3995, 4294901760
        %3997 = vmatpush1.msra.mxu0 %v3996
        %3998 = vmatprep.subr.mxu0 0.0
        %v3999 = vand.u32 %v614, 4294901760
        %v4000 = vsub.f32 %v614, %v3999
        %v4001 = vand.u32 %v4000, 4294901760
        %4002 = vmatpush1.msra.mxu0 %v4001
        %4003 = vmatprep.subr.mxu0 0.0
        %v4004 = vand.u32 %v617, 4294901760
        %v4005 = vsub.f32 %v617, %v4004
        %v4006 = vand.u32 %v4005, 4294901760
        %4007 = vmatpush1.msra.mxu0 %v4006
        %4008 = vmatprep.subr.mxu0 0.0
        %v4009 = vand.u32 %v620, 4294901760
        %v4010 = vsub.f32 %v620, %v4009
        %v4011 = vand.u32 %v4010, 4294901760
        %4012 = vmatpush1.msra.mxu0 %v4011
        %4013 = vmatprep.subr.mxu0 0.0
        %v4014 = vand.u32 %v623, 4294901760
        %v4015 = vsub.f32 %v623, %v4014
        %v4016 = vand.u32 %v4015, 4294901760
        %4017 = vmatpush1.msra.mxu0 %v4016
        %4018 = vmatprep.subr.mxu0 0.0
        %v4019 = vand.u32 %v626, 4294901760
        %v4020 = vsub.f32 %v626, %v4019
        %v4021 = vand.u32 %v4020, 4294901760
        %4022 = vmatpush1.msra.mxu0 %v4021
        %4023 = vmatprep.subr.mxu0 0.0
        %v4024 = vand.u32 %v629, 4294901760
        %v4025 = vsub.f32 %v629, %v4024
        %v4026 = vand.u32 %v4025, 4294901760
        %4027 = vmatpush1.msra.mxu0 %v4026
        %4028 = vmatprep.subr.mxu0 0.0
        %v4029 = vand.u32 %v632, 4294901760
        %v4030 = vsub.f32 %v632, %v4029
        %v4031 = vand.u32 %v4030, 4294901760
        %4032 = vmatpush1.msra.mxu0 %v4031
        %4033 = vmatprep.subr.mxu0 0.0
        %v4034 = vand.u32 %v635, 4294901760
        %v4035 = vsub.f32 %v635, %v4034
        %v4036 = vand.u32 %v4035, 4294901760
        %4037 = vmatpush1.msra.mxu0 %v4036
        %4038 = vmatprep.subr.mxu0 0.0
        %v4039 = vand.u32 %v638, 4294901760
        %v4040 = vsub.f32 %v638, %v4039
        %v4041 = vand.u32 %v4040, 4294901760
        %4042 = vmatpush1.msra.mxu0 %v4041
        %4043 = vmatprep.subr.mxu0 0.0
        %v4044 = vand.u32 %v641, 4294901760
        %v4045 = vsub.f32 %v641, %v4044
        %v4046 = vand.u32 %v4045, 4294901760
        %4047 = vmatpush1.msra.mxu0 %v4046
        %4048 = vmatprep.subr.mxu0 0.0
        %v4049 = vand.u32 %v644, 4294901760
        %v4050 = vsub.f32 %v644, %v4049
        %v4051 = vand.u32 %v4050, 4294901760
        %4052 = vmatpush1.msra.mxu0 %v4051
        %4053 = vmatprep.subr.mxu0 0.0
        %v4054 = vand.u32 %v647, 4294901760
        %v4055 = vsub.f32 %v647, %v4054
        %v4056 = vand.u32 %v4055, 4294901760
        %4057 = vmatpush1.msra.mxu0 %v4056
        %4058 = vmatprep.subr.mxu0 0.0
        %v4059 = vand.u32 %v650, 4294901760
        %v4060 = vsub.f32 %v650, %v4059
        %v4061 = vand.u32 %v4060, 4294901760
        %4062 = vmatpush1.msra.mxu0 %v4061
        %4063 = vmatprep.subr.mxu0 0.0
        %v4064 = vand.u32 %v653, 4294901760
        %v4065 = vsub.f32 %v653, %v4064
        %v4066 = vand.u32 %v4065, 4294901760
        %4067 = vmatpush1.msra.mxu0 %v4066
        %4068 = vmatprep.subr.mxu0 0.0
        %v4069 = vand.u32 %v656, 4294901760
        %v4070 = vsub.f32 %v656, %v4069
        %v4071 = vand.u32 %v4070, 4294901760
        %4072 = vmatpush1.msra.mxu0 %v4071
        %4073 = vmatprep.subr.mxu0 0.0
        %v4074 = vand.u32 %v659, 4294901760
        %v4075 = vsub.f32 %v659, %v4074
        %v4076 = vand.u32 %v4075, 4294901760
        %4077 = vmatpush1.msra.mxu0 %v4076
        %4078 = vmatprep.subr.mxu0 0.0
        %v4079 = vand.u32 %v662, 4294901760
        %v4080 = vsub.f32 %v662, %v4079
        %v4081 = vand.u32 %v4080, 4294901760
        %4082 = vmatpush1.msra.mxu0 %v4081
        %4083 = vmatprep.subr.mxu0 0.0
        %v4084 = vand.u32 %v665, 4294901760
        %v4085 = vsub.f32 %v665, %v4084
        %v4086 = vand.u32 %v4085, 4294901760
        %4087 = vmatpush1.msra.mxu0 %v4086
        %4088 = vmatprep.subr.mxu0 0.0
        %v4089 = vand.u32 %v668, 4294901760
        %v4090 = vsub.f32 %v668, %v4089
        %v4091 = vand.u32 %v4090, 4294901760
        %4092 = vmatpush1.msra.mxu0 %v4091
        %4093 = vmatprep.subr.mxu0 0.0
        %v4094 = vand.u32 %v671, 4294901760
        %v4095 = vsub.f32 %v671, %v4094
        %v4096 = vand.u32 %v4095, 4294901760
        %4097 = vmatpush1.msra.mxu0 %v4096
        %4098 = vmatprep.subr.mxu0 0.0
        %v4099 = vand.u32 %v674, 4294901760
        %v4100 = vsub.f32 %v674, %v4099
        %v4101 = vand.u32 %v4100, 4294901760
        %4102 = vmatpush1.msra.mxu0 %v4101
        %4103 = vmatprep.subr.mxu0 0.0
        %v4104 = vand.u32 %v677, 4294901760
        %v4105 = vsub.f32 %v677, %v4104
        %v4106 = vand.u32 %v4105, 4294901760
        %4107 = vmatpush1.msra.mxu0 %v4106
        %4108 = vmatprep.subr.mxu0 0.0
        %v4109 = vand.u32 %v680, 4294901760
        %v4110 = vsub.f32 %v680, %v4109
        %v4111 = vand.u32 %v4110, 4294901760
        %4112 = vmatpush1.msra.mxu0 %v4111
        %4113 = vmatprep.subr.mxu0 0.0
        %v4114 = vand.u32 %v683, 4294901760
        %v4115 = vsub.f32 %v683, %v4114
        %v4116 = vand.u32 %v4115, 4294901760
        %4117 = vmatpush1.msra.mxu0 %v4116
        %4118 = vmatprep.subr.mxu0 0.0
        %v4119 = vand.u32 %v686, 4294901760
        %v4120 = vsub.f32 %v686, %v4119
        %v4121 = vand.u32 %v4120, 4294901760
        %4122 = vmatpush1.msra.mxu0 %v4121
        %v4123 = vand.u32 %v799, 4294901760
        %4124 = vmatprep.mubr.f32.mxu0 %v4123
        %v4125 = vand.u32 %v791, 4294901760
        %4126 = vmatmul.mubr.f32.gmra.mrb[0].mxu0 %v4125
        %v4127 = vpop.f32.mrb[0].mxu0
        %v4128 = vadd.f32 %v3960, %v4127
        %v4129 = vpop.f32.mrb[0].mxu0
        %4130 = vdwg.mxu0
        %4131 = vmatprep.subr.mxu0 0.0
        %v4132 = vand.u32 %v593, 4294901760
        %4133 = vmatpush1.msra.mxu0 %v4132
        %4134 = vmatprep.subr.mxu0 0.0
        %v4135 = vand.u32 %v596, 4294901760
        %4136 = vmatpush1.msra.mxu0 %v4135
        %4137 = vmatprep.subr.mxu0 0.0
        %v4138 = vand.u32 %v599, 4294901760
        %4139 = vmatpush1.msra.mxu0 %v4138
        %4140 = vmatprep.subr.mxu0 0.0
        %v4141 = vand.u32 %v602, 4294901760
        %4142 = vmatpush1.msra.mxu0 %v4141
        %4143 = vmatprep.subr.mxu0 0.0
        %v4144 = vand.u32 %v605, 4294901760
        %4145 = vmatpush1.msra.mxu0 %v4144
        %4146 = vmatprep.subr.mxu0 0.0
        %v4147 = vand.u32 %v608, 4294901760
        %4148 = vmatpush1.msra.mxu0 %v4147
        %4149 = vmatprep.subr.mxu0 0.0
        %v4150 = vand.u32 %v611, 4294901760
        %4151 = vmatpush1.msra.mxu0 %v4150
        %4152 = vmatprep.subr.mxu0 0.0
        %v4153 = vand.u32 %v614, 4294901760
        %4154 = vmatpush1.msra.mxu0 %v4153
        %4155 = vmatprep.subr.mxu0 0.0
        %v4156 = vand.u32 %v617, 4294901760
        %4157 = vmatpush1.msra.mxu0 %v4156
        %4158 = vmatprep.subr.mxu0 0.0
        %v4159 = vand.u32 %v620, 4294901760
        %4160 = vmatpush1.msra.mxu0 %v4159
        %4161 = vmatprep.subr.mxu0 0.0
        %v4162 = vand.u32 %v623, 4294901760
        %4163 = vmatpush1.msra.mxu0 %v4162
        %4164 = vmatprep.subr.mxu0 0.0
        %v4165 = vand.u32 %v626, 4294901760
        %4166 = vmatpush1.msra.mxu0 %v4165
        %4167 = vmatprep.subr.mxu0 0.0
        %v4168 = vand.u32 %v629, 4294901760
        %4169 = vmatpush1.msra.mxu0 %v4168
        %4170 = vmatprep.subr.mxu0 0.0
        %v4171 = vand.u32 %v632, 4294901760
        %4172 = vmatpush1.msra.mxu0 %v4171
        %4173 = vmatprep.subr.mxu0 0.0
        %v4174 = vand.u32 %v635, 4294901760
        %4175 = vmatpush1.msra.mxu0 %v4174
        %4176 = vmatprep.subr.mxu0 0.0
        %v4177 = vand.u32 %v638, 4294901760
        %4178 = vmatpush1.msra.mxu0 %v4177
        %4179 = vmatprep.subr.mxu0 0.0
        %v4180 = vand.u32 %v641, 4294901760
        %4181 = vmatpush1.msra.mxu0 %v4180
        %4182 = vmatprep.subr.mxu0 0.0
        %v4183 = vand.u32 %v644, 4294901760
        %4184 = vmatpush1.msra.mxu0 %v4183
        %4185 = vmatprep.subr.mxu0 0.0
        %v4186 = vand.u32 %v647, 4294901760
        %4187 = vmatpush1.msra.mxu0 %v4186
        %4188 = vmatprep.subr.mxu0 0.0
        %v4189 = vand.u32 %v650, 4294901760
        %4190 = vmatpush1.msra.mxu0 %v4189
        %4191 = vmatprep.subr.mxu0 0.0
        %v4192 = vand.u32 %v653, 4294901760
        %4193 = vmatpush1.msra.mxu0 %v4192
        %4194 = vmatprep.subr.mxu0 0.0
        %v4195 = vand.u32 %v656, 4294901760
        %4196 = vmatpush1.msra.mxu0 %v4195
        %4197 = vmatprep.subr.mxu0 0.0
        %v4198 = vand.u32 %v659, 4294901760
        %4199 = vmatpush1.msra.mxu0 %v4198
        %4200 = vmatprep.subr.mxu0 0.0
        %v4201 = vand.u32 %v662, 4294901760
        %4202 = vmatpush1.msra.mxu0 %v4201
        %4203 = vmatprep.subr.mxu0 0.0
        %v4204 = vand.u32 %v665, 4294901760
        %4205 = vmatpush1.msra.mxu0 %v4204
        %4206 = vmatprep.subr.mxu0 0.0
        %v4207 = vand.u32 %v668, 4294901760
        %4208 = vmatpush1.msra.mxu0 %v4207
        %4209 = vmatprep.subr.mxu0 0.0
        %v4210 = vand.u32 %v671, 4294901760
        %4211 = vmatpush1.msra.mxu0 %v4210
        %4212 = vmatprep.subr.mxu0 0.0
        %v4213 = vand.u32 %v674, 4294901760
        %4214 = vmatpush1.msra.mxu0 %v4213
        %4215 = vmatprep.subr.mxu0 0.0
        %v4216 = vand.u32 %v677, 4294901760
        %4217 = vmatpush1.msra.mxu0 %v4216
        %4218 = vmatprep.subr.mxu0 0.0
        %v4219 = vand.u32 %v680, 4294901760
        %4220 = vmatpush1.msra.mxu0 %v4219
        %4221 = vmatprep.subr.mxu0 0.0
        %v4222 = vand.u32 %v683, 4294901760
        %4223 = vmatpush1.msra.mxu0 %v4222
        %4224 = vmatprep.subr.mxu0 0.0
        %v4225 = vand.u32 %v686, 4294901760
        %4226 = vmatpush1.msra.mxu0 %v4225
        %v4227 = vand.u32 %v799, 4294901760
        %4228 = vmatprep.mubr.f32.mxu0 %v4227
        %v4229 = vand.u32 %v791, 4294901760
        %4230 = vmatmul.mubr.f32.gmra.mrb[0].mxu0 %v4229
        %v4231 = vpop.f32.mrb[0].mxu0
        %v4232 = vadd.f32 %v4128, %v4231
        %v4233 = vpop.f32.mrb[0].mxu0
        %4234 = vdwg.mxu0
        %4235 = vmatprep.subr.mxu0 0.0
        %v4236 = vand.u32 %v689, 4294901760
        %4237 = vmatpush1.msra.mxu0 %v4236
        %4238 = vmatprep.subr.mxu0 0.0
        %v4239 = vand.u32 %v692, 4294901760
        %4240 = vmatpush1.msra.mxu0 %v4239
        %4241 = vmatprep.subr.mxu0 0.0
        %v4242 = vand.u32 %v695, 4294901760
        %4243 = vmatpush1.msra.mxu0 %v4242
        %4244 = vmatprep.subr.mxu0 0.0
        %v4245 = vand.u32 %v698, 4294901760
        %4246 = vmatpush1.msra.mxu0 %v4245
        %4247 = vmatprep.subr.mxu0 0.0
        %v4248 = vand.u32 %v701, 4294901760
        %4249 = vmatpush1.msra.mxu0 %v4248
        %4250 = vmatprep.subr.mxu0 0.0
        %v4251 = vand.u32 %v704, 4294901760
        %4252 = vmatpush1.msra.mxu0 %v4251
        %4253 = vmatprep.subr.mxu0 0.0
        %v4254 = vand.u32 %v707, 4294901760
        %4255 = vmatpush1.msra.mxu0 %v4254
        %4256 = vmatprep.subr.mxu0 0.0
        %v4257 = vand.u32 %v710, 4294901760
        %4258 = vmatpush1.msra.mxu0 %v4257
        %4259 = vmatprep.subr.mxu0 0.0
        %v4260 = vand.u32 %v713, 4294901760
        %4261 = vmatpush1.msra.mxu0 %v4260
        %4262 = vmatprep.subr.mxu0 0.0
        %v4263 = vand.u32 %v716, 4294901760
        %4264 = vmatpush1.msra.mxu0 %v4263
        %4265 = vmatprep.subr.mxu0 0.0
        %v4266 = vand.u32 %v719, 4294901760
        %4267 = vmatpush1.msra.mxu0 %v4266
        %4268 = vmatprep.subr.mxu0 0.0
        %v4269 = vand.u32 %v722, 4294901760
        %4270 = vmatpush1.msra.mxu0 %v4269
        %4271 = vmatprep.subr.mxu0 0.0
        %v4272 = vand.u32 %v725, 4294901760
        %4273 = vmatpush1.msra.mxu0 %v4272
        %4274 = vmatprep.subr.mxu0 0.0
        %v4275 = vand.u32 %v728, 4294901760
        %4276 = vmatpush1.msra.mxu0 %v4275
        %4277 = vmatprep.subr.mxu0 0.0
        %v4278 = vand.u32 %v731, 4294901760
        %4279 = vmatpush1.msra.mxu0 %v4278
        %4280 = vmatprep.subr.mxu0 0.0
        %v4281 = vand.u32 %v734, 4294901760
        %4282 = vmatpush1.msra.mxu0 %v4281
        %4283 = vmatprep.subr.mxu0 0.0
        %v4284 = vand.u32 %v737, 4294901760
        %4285 = vmatpush1.msra.mxu0 %v4284
        %4286 = vmatprep.subr.mxu0 0.0
        %v4287 = vand.u32 %v740, 4294901760
        %4288 = vmatpush1.msra.mxu0 %v4287
        %4289 = vmatprep.subr.mxu0 0.0
        %v4290 = vand.u32 %v743, 4294901760
        %4291 = vmatpush1.msra.mxu0 %v4290
        %4292 = vmatprep.subr.mxu0 0.0
        %v4293 = vand.u32 %v746, 4294901760
        %4294 = vmatpush1.msra.mxu0 %v4293
        %4295 = vmatprep.subr.mxu0 0.0
        %v4296 = vand.u32 %v749, 4294901760
        %4297 = vmatpush1.msra.mxu0 %v4296
        %4298 = vmatprep.subr.mxu0 0.0
        %v4299 = vand.u32 %v752, 4294901760
        %4300 = vmatpush1.msra.mxu0 %v4299
        %4301 = vmatprep.subr.mxu0 0.0
        %v4302 = vand.u32 %v755, 4294901760
        %4303 = vmatpush1.msra.mxu0 %v4302
        %4304 = vmatprep.subr.mxu0 0.0
        %v4305 = vand.u32 %v758, 4294901760
        %4306 = vmatpush1.msra.mxu0 %v4305
        %4307 = vmatprep.subr.mxu0 0.0
        %v4308 = vand.u32 %v761, 4294901760
        %4309 = vmatpush1.msra.mxu0 %v4308
        %4310 = vmatprep.subr.mxu0 0.0
        %v4311 = vand.u32 %v764, 4294901760
        %4312 = vmatpush1.msra.mxu0 %v4311
        %4313 = vmatprep.subr.mxu0 0.0
        %v4314 = vand.u32 %v767, 4294901760
        %4315 = vmatpush1.msra.mxu0 %v4314
        %4316 = vmatprep.subr.mxu0 0.0
        %v4317 = vand.u32 %v770, 4294901760
        %4318 = vmatpush1.msra.mxu0 %v4317
        %4319 = vmatprep.subr.mxu0 0.0
        %v4320 = vand.u32 %v773, 4294901760
        %4321 = vmatpush1.msra.mxu0 %v4320
        %4322 = vmatprep.subr.mxu0 0.0
        %v4323 = vand.u32 %v776, 4294901760
        %4324 = vmatpush1.msra.mxu0 %v4323
        %4325 = vmatprep.subr.mxu0 0.0
        %v4326 = vand.u32 %v779, 4294901760
        %4327 = vmatpush1.msra.mxu0 %v4326
        %4328 = vmatprep.subr.mxu0 0.0
        %v4329 = vand.u32 %v782, 4294901760
        %4330 = vmatpush1.msra.mxu0 %v4329
        %v4331 = vand.u32 %v800, 4294901760
        %v4332 = vsub.f32 %v800, %v4331
        %v4333 = vand.u32 %v4332, 4294901760
        %v4334 = vsub.f32 %v4332, %v4333
        %v4335 = vand.u32 %v4334, 4294901760
        %4336 = vmatprep.mubr.f32.mxu0 %v4335
        %v4337 = vand.u32 %v798, 4294901760
        %v4338 = vsub.f32 %v798, %v4337
        %v4339 = vand.u32 %v4338, 4294901760
        %v4340 = vsub.f32 %v4338, %v4339
        %v4341 = vand.u32 %v4340, 4294901760
        %4342 = vmatmul.mubr.f32.gmra.mrb[0].mxu0 %v4341
        %v4343 = vpop.f32.mrb[0].mxu0
        %v4344 = vadd.f32 %v4232, %v4343
        %v4345 = vpop.f32.mrb[0].mxu0
        %4346 = vdwg.mxu0
        %4347 = vmatprep.subr.mxu0 0.0
        %v4348 = vand.u32 %v689, 4294901760
        %v4349 = vsub.f32 %v689, %v4348
        %v4350 = vand.u32 %v4349, 4294901760
        %v4351 = vsub.f32 %v4349, %v4350
        %v4352 = vand.u32 %v4351, 4294901760
        %4353 = vmatpush1.msra.mxu0 %v4352
        %4354 = vmatprep.subr.mxu0 0.0
        %v4355 = vand.u32 %v692, 4294901760
        %v4356 = vsub.f32 %v692, %v4355
        %v4357 = vand.u32 %v4356, 4294901760
        %v4358 = vsub.f32 %v4356, %v4357
        %v4359 = vand.u32 %v4358, 4294901760
        %4360 = vmatpush1.msra.mxu0 %v4359
        %4361 = vmatprep.subr.mxu0 0.0
        %v4362 = vand.u32 %v695, 4294901760
        %v4363 = vsub.f32 %v695, %v4362
        %v4364 = vand.u32 %v4363, 4294901760
        %v4365 = vsub.f32 %v4363, %v4364
        %v4366 = vand.u32 %v4365, 4294901760
        %4367 = vmatpush1.msra.mxu0 %v4366
        %4368 = vmatprep.subr.mxu0 0.0
        %v4369 = vand.u32 %v698, 4294901760
        %v4370 = vsub.f32 %v698, %v4369
        %v4371 = vand.u32 %v4370, 4294901760
        %v4372 = vsub.f32 %v4370, %v4371
        %v4373 = vand.u32 %v4372, 4294901760
        %4374 = vmatpush1.msra.mxu0 %v4373
        %4375 = vmatprep.subr.mxu0 0.0
        %v4376 = vand.u32 %v701, 4294901760
        %v4377 = vsub.f32 %v701, %v4376
        %v4378 = vand.u32 %v4377, 4294901760
        %v4379 = vsub.f32 %v4377, %v4378
        %v4380 = vand.u32 %v4379, 4294901760
        %4381 = vmatpush1.msra.mxu0 %v4380
        %4382 = vmatprep.subr.mxu0 0.0
        %v4383 = vand.u32 %v704, 4294901760
        %v4384 = vsub.f32 %v704, %v4383
        %v4385 = vand.u32 %v4384, 4294901760
        %v4386 = vsub.f32 %v4384, %v4385
        %v4387 = vand.u32 %v4386, 4294901760
        %4388 = vmatpush1.msra.mxu0 %v4387
        %4389 = vmatprep.subr.mxu0 0.0
        %v4390 = vand.u32 %v707, 4294901760
        %v4391 = vsub.f32 %v707, %v4390
        %v4392 = vand.u32 %v4391, 4294901760
        %v4393 = vsub.f32 %v4391, %v4392
        %v4394 = vand.u32 %v4393, 4294901760
        %4395 = vmatpush1.msra.mxu0 %v4394
        %4396 = vmatprep.subr.mxu0 0.0
        %v4397 = vand.u32 %v710, 4294901760
        %v4398 = vsub.f32 %v710, %v4397
        %v4399 = vand.u32 %v4398, 4294901760
        %v4400 = vsub.f32 %v4398, %v4399
        %v4401 = vand.u32 %v4400, 4294901760
        %4402 = vmatpush1.msra.mxu0 %v4401
        %4403 = vmatprep.subr.mxu0 0.0
        %v4404 = vand.u32 %v713, 4294901760
        %v4405 = vsub.f32 %v713, %v4404
        %v4406 = vand.u32 %v4405, 4294901760
        %v4407 = vsub.f32 %v4405, %v4406
        %v4408 = vand.u32 %v4407, 4294901760
        %4409 = vmatpush1.msra.mxu0 %v4408
        %4410 = vmatprep.subr.mxu0 0.0
        %v4411 = vand.u32 %v716, 4294901760
        %v4412 = vsub.f32 %v716, %v4411
        %v4413 = vand.u32 %v4412, 4294901760
        %v4414 = vsub.f32 %v4412, %v4413
        %v4415 = vand.u32 %v4414, 4294901760
        %4416 = vmatpush1.msra.mxu0 %v4415
        %4417 = vmatprep.subr.mxu0 0.0
        %v4418 = vand.u32 %v719, 4294901760
        %v4419 = vsub.f32 %v719, %v4418
        %v4420 = vand.u32 %v4419, 4294901760
        %v4421 = vsub.f32 %v4419, %v4420
        %v4422 = vand.u32 %v4421, 4294901760
        %4423 = vmatpush1.msra.mxu0 %v4422
        %4424 = vmatprep.subr.mxu0 0.0
        %v4425 = vand.u32 %v722, 4294901760
        %v4426 = vsub.f32 %v722, %v4425
        %v4427 = vand.u32 %v4426, 4294901760
        %v4428 = vsub.f32 %v4426, %v4427
        %v4429 = vand.u32 %v4428, 4294901760
        %4430 = vmatpush1.msra.mxu0 %v4429
        %4431 = vmatprep.subr.mxu0 0.0
        %v4432 = vand.u32 %v725, 4294901760
        %v4433 = vsub.f32 %v725, %v4432
        %v4434 = vand.u32 %v4433, 4294901760
        %v4435 = vsub.f32 %v4433, %v4434
        %v4436 = vand.u32 %v4435, 4294901760
        %4437 = vmatpush1.msra.mxu0 %v4436
        %4438 = vmatprep.subr.mxu0 0.0
        %v4439 = vand.u32 %v728, 4294901760
        %v4440 = vsub.f32 %v728, %v4439
        %v4441 = vand.u32 %v4440, 4294901760
        %v4442 = vsub.f32 %v4440, %v4441
        %v4443 = vand.u32 %v4442, 4294901760
        %4444 = vmatpush1.msra.mxu0 %v4443
        %4445 = vmatprep.subr.mxu0 0.0
        %v4446 = vand.u32 %v731, 4294901760
        %v4447 = vsub.f32 %v731, %v4446
        %v4448 = vand.u32 %v4447, 4294901760
        %v4449 = vsub.f32 %v4447, %v4448
        %v4450 = vand.u32 %v4449, 4294901760
        %4451 = vmatpush1.msra.mxu0 %v4450
        %4452 = vmatprep.subr.mxu0 0.0
        %v4453 = vand.u32 %v734, 4294901760
        %v4454 = vsub.f32 %v734, %v4453
        %v4455 = vand.u32 %v4454, 4294901760
        %v4456 = vsub.f32 %v4454, %v4455
        %v4457 = vand.u32 %v4456, 4294901760
        %4458 = vmatpush1.msra.mxu0 %v4457
        %4459 = vmatprep.subr.mxu0 0.0
        %v4460 = vand.u32 %v737, 4294901760
        %v4461 = vsub.f32 %v737, %v4460
        %v4462 = vand.u32 %v4461, 4294901760
        %v4463 = vsub.f32 %v4461, %v4462
        %v4464 = vand.u32 %v4463, 4294901760
        %4465 = vmatpush1.msra.mxu0 %v4464
        %4466 = vmatprep.subr.mxu0 0.0
        %v4467 = vand.u32 %v740, 4294901760
        %v4468 = vsub.f32 %v740, %v4467
        %v4469 = vand.u32 %v4468, 4294901760
        %v4470 = vsub.f32 %v4468, %v4469
        %v4471 = vand.u32 %v4470, 4294901760
        %4472 = vmatpush1.msra.mxu0 %v4471
        %4473 = vmatprep.subr.mxu0 0.0
        %v4474 = vand.u32 %v743, 4294901760
        %v4475 = vsub.f32 %v743, %v4474
        %v4476 = vand.u32 %v4475, 4294901760
        %v4477 = vsub.f32 %v4475, %v4476
        %v4478 = vand.u32 %v4477, 4294901760
        %4479 = vmatpush1.msra.mxu0 %v4478
        %4480 = vmatprep.subr.mxu0 0.0
        %v4481 = vand.u32 %v746, 4294901760
        %v4482 = vsub.f32 %v746, %v4481
        %v4483 = vand.u32 %v4482, 4294901760
        %v4484 = vsub.f32 %v4482, %v4483
        %v4485 = vand.u32 %v4484, 4294901760
        %4486 = vmatpush1.msra.mxu0 %v4485
        %4487 = vmatprep.subr.mxu0 0.0
        %v4488 = vand.u32 %v749, 4294901760
        %v4489 = vsub.f32 %v749, %v4488
        %v4490 = vand.u32 %v4489, 4294901760
        %v4491 = vsub.f32 %v4489, %v4490
        %v4492 = vand.u32 %v4491, 4294901760
        %4493 = vmatpush1.msra.mxu0 %v4492
        %4494 = vmatprep.subr.mxu0 0.0
        %v4495 = vand.u32 %v752, 4294901760
        %v4496 = vsub.f32 %v752, %v4495
        %v4497 = vand.u32 %v4496, 4294901760
        %v4498 = vsub.f32 %v4496, %v4497
        %v4499 = vand.u32 %v4498, 4294901760
        %4500 = vmatpush1.msra.mxu0 %v4499
        %4501 = vmatprep.subr.mxu0 0.0
        %v4502 = vand.u32 %v755, 4294901760
        %v4503 = vsub.f32 %v755, %v4502
        %v4504 = vand.u32 %v4503, 4294901760
        %v4505 = vsub.f32 %v4503, %v4504
        %v4506 = vand.u32 %v4505, 4294901760
        %4507 = vmatpush1.msra.mxu0 %v4506
        %4508 = vmatprep.subr.mxu0 0.0
        %v4509 = vand.u32 %v758, 4294901760
        %v4510 = vsub.f32 %v758, %v4509
        %v4511 = vand.u32 %v4510, 4294901760
        %v4512 = vsub.f32 %v4510, %v4511
        %v4513 = vand.u32 %v4512, 4294901760
        %4514 = vmatpush1.msra.mxu0 %v4513
        %4515 = vmatprep.subr.mxu0 0.0
        %v4516 = vand.u32 %v761, 4294901760
        %v4517 = vsub.f32 %v761, %v4516
        %v4518 = vand.u32 %v4517, 4294901760
        %v4519 = vsub.f32 %v4517, %v4518
        %v4520 = vand.u32 %v4519, 4294901760
        %4521 = vmatpush1.msra.mxu0 %v4520
        %4522 = vmatprep.subr.mxu0 0.0
        %v4523 = vand.u32 %v764, 4294901760
        %v4524 = vsub.f32 %v764, %v4523
        %v4525 = vand.u32 %v4524, 4294901760
        %v4526 = vsub.f32 %v4524, %v4525
        %v4527 = vand.u32 %v4526, 4294901760
        %4528 = vmatpush1.msra.mxu0 %v4527
        %4529 = vmatprep.subr.mxu0 0.0
        %v4530 = vand.u32 %v767, 4294901760
        %v4531 = vsub.f32 %v767, %v4530
        %v4532 = vand.u32 %v4531, 4294901760
        %v4533 = vsub.f32 %v4531, %v4532
        %v4534 = vand.u32 %v4533, 4294901760
        %4535 = vmatpush1.msra.mxu0 %v4534
        %4536 = vmatprep.subr.mxu0 0.0
        %v4537 = vand.u32 %v770, 4294901760
        %v4538 = vsub.f32 %v770, %v4537
        %v4539 = vand.u32 %v4538, 4294901760
        %v4540 = vsub.f32 %v4538, %v4539
        %v4541 = vand.u32 %v4540, 4294901760
        %4542 = vmatpush1.msra.mxu0 %v4541
        %4543 = vmatprep.subr.mxu0 0.0
        %v4544 = vand.u32 %v773, 4294901760
        %v4545 = vsub.f32 %v773, %v4544
        %v4546 = vand.u32 %v4545, 4294901760
        %v4547 = vsub.f32 %v4545, %v4546
        %v4548 = vand.u32 %v4547, 4294901760
        %4549 = vmatpush1.msra.mxu0 %v4548
        %4550 = vmatprep.subr.mxu0 0.0
        %v4551 = vand.u32 %v776, 4294901760
        %v4552 = vsub.f32 %v776, %v4551
        %v4553 = vand.u32 %v4552, 4294901760
        %v4554 = vsub.f32 %v4552, %v4553
        %v4555 = vand.u32 %v4554, 4294901760
        %4556 = vmatpush1.msra.mxu0 %v4555
        %4557 = vmatprep.subr.mxu0 0.0
        %v4558 = vand.u32 %v779, 4294901760
        %v4559 = vsub.f32 %v779, %v4558
        %v4560 = vand.u32 %v4559, 4294901760
        %v4561 = vsub.f32 %v4559, %v4560
        %v4562 = vand.u32 %v4561, 4294901760
        %4563 = vmatpush1.msra.mxu0 %v4562
        %4564 = vmatprep.subr.mxu0 0.0
        %v4565 = vand.u32 %v782, 4294901760
        %v4566 = vsub.f32 %v782, %v4565
        %v4567 = vand.u32 %v4566, 4294901760
        %v4568 = vsub.f32 %v4566, %v4567
        %v4569 = vand.u32 %v4568, 4294901760
        %4570 = vmatpush1.msra.mxu0 %v4569
        %v4571 = vand.u32 %v800, 4294901760
        %4572 = vmatprep.mubr.f32.mxu0 %v4571
        %v4573 = vand.u32 %v798, 4294901760
        %4574 = vmatmul.mubr.f32.gmra.mrb[0].mxu0 %v4573
        %v4575 = vpop.f32.mrb[0].mxu0
        %v4576 = vadd.f32 %v4344, %v4575
        %v4577 = vpop.f32.mrb[0].mxu0
        %4578 = vdwg.mxu0
        %4579 = vmatprep.subr.mxu0 0.0
        %v4580 = vand.u32 %v689, 4294901760
        %v4581 = vsub.f32 %v689, %v4580
        %4582 = vmatpush1.msra.mxu0 %v4581
        %4583 = vmatprep.subr.mxu0 0.0
        %v4584 = vand.u32 %v692, 4294901760
        %v4585 = vsub.f32 %v692, %v4584
        %4586 = vmatpush1.msra.mxu0 %v4585
        %4587 = vmatprep.subr.mxu0 0.0
        %v4588 = vand.u32 %v695, 4294901760
        %v4589 = vsub.f32 %v695, %v4588
        %4590 = vmatpush1.msra.mxu0 %v4589
        %4591 = vmatprep.subr.mxu0 0.0
        %v4592 = vand.u32 %v698, 4294901760
        %v4593 = vsub.f32 %v698, %v4592
        %4594 = vmatpush1.msra.mxu0 %v4593
        %4595 = vmatprep.subr.mxu0 0.0
        %v4596 = vand.u32 %v701, 4294901760
        %v4597 = vsub.f32 %v701, %v4596
        %4598 = vmatpush1.msra.mxu0 %v4597
        %4599 = vmatprep.subr.mxu0 0.0
        %v4600 = vand.u32 %v704, 4294901760
        %v4601 = vsub.f32 %v704, %v4600
        %4602 = vmatpush1.msra.mxu0 %v4601
        %4603 = vmatprep.subr.mxu0 0.0
        %v4604 = vand.u32 %v707, 4294901760
        %v4605 = vsub.f32 %v707, %v4604
        %4606 = vmatpush1.msra.mxu0 %v4605
        %4607 = vmatprep.subr.mxu0 0.0
        %v4608 = vand.u32 %v710, 4294901760
        %v4609 = vsub.f32 %v710, %v4608
        %4610 = vmatpush1.msra.mxu0 %v4609
        %4611 = vmatprep.subr.mxu0 0.0
        %v4612 = vand.u32 %v713, 4294901760
        %v4613 = vsub.f32 %v713, %v4612
        %4614 = vmatpush1.msra.mxu0 %v4613
        %4615 = vmatprep.subr.mxu0 0.0
        %v4616 = vand.u32 %v716, 4294901760
        %v4617 = vsub.f32 %v716, %v4616
        %4618 = vmatpush1.msra.mxu0 %v4617
        %4619 = vmatprep.subr.mxu0 0.0
        %v4620 = vand.u32 %v719, 4294901760
        %v4621 = vsub.f32 %v719, %v4620
        %4622 = vmatpush1.msra.mxu0 %v4621
        %4623 = vmatprep.subr.mxu0 0.0
        %v4624 = vand.u32 %v722, 4294901760
        %v4625 = vsub.f32 %v722, %v4624
        %4626 = vmatpush1.msra.mxu0 %v4625
        %4627 = vmatprep.subr.mxu0 0.0
        %v4628 = vand.u32 %v725, 4294901760
        %v4629 = vsub.f32 %v725, %v4628
        %4630 = vmatpush1.msra.mxu0 %v4629
        %4631 = vmatprep.subr.mxu0 0.0
        %v4632 = vand.u32 %v728, 4294901760
        %v4633 = vsub.f32 %v728, %v4632
        %4634 = vmatpush1.msra.mxu0 %v4633
        %4635 = vmatprep.subr.mxu0 0.0
        %v4636 = vand.u32 %v731, 4294901760
        %v4637 = vsub.f32 %v731, %v4636
        %4638 = vmatpush1.msra.mxu0 %v4637
        %4639 = vmatprep.subr.mxu0 0.0
        %v4640 = vand.u32 %v734, 4294901760
        %v4641 = vsub.f32 %v734, %v4640
        %4642 = vmatpush1.msra.mxu0 %v4641
        %4643 = vmatprep.subr.mxu0 0.0
        %v4644 = vand.u32 %v737, 4294901760
        %v4645 = vsub.f32 %v737, %v4644
        %4646 = vmatpush1.msra.mxu0 %v4645
        %4647 = vmatprep.subr.mxu0 0.0
        %v4648 = vand.u32 %v740, 4294901760
        %v4649 = vsub.f32 %v740, %v4648
        %4650 = vmatpush1.msra.mxu0 %v4649
        %4651 = vmatprep.subr.mxu0 0.0
        %v4652 = vand.u32 %v743, 4294901760
        %v4653 = vsub.f32 %v743, %v4652
        %4654 = vmatpush1.msra.mxu0 %v4653
        %4655 = vmatprep.subr.mxu0 0.0
        %v4656 = vand.u32 %v746, 4294901760
        %v4657 = vsub.f32 %v746, %v4656
        %4658 = vmatpush1.msra.mxu0 %v4657
        %4659 = vmatprep.subr.mxu0 0.0
        %v4660 = vand.u32 %v749, 4294901760
        %v4661 = vsub.f32 %v749, %v4660
        %4662 = vmatpush1.msra.mxu0 %v4661
        %4663 = vmatprep.subr.mxu0 0.0
        %v4664 = vand.u32 %v752, 4294901760
        %v4665 = vsub.f32 %v752, %v4664
        %4666 = vmatpush1.msra.mxu0 %v4665
        %4667 = vmatprep.subr.mxu0 0.0
        %v4668 = vand.u32 %v755, 4294901760
        %v4669 = vsub.f32 %v755, %v4668
        %4670 = vmatpush1.msra.mxu0 %v4669
        %4671 = vmatprep.subr.mxu0 0.0
        %v4672 = vand.u32 %v758, 4294901760
        %v4673 = vsub.f32 %v758, %v4672
        %4674 = vmatpush1.msra.mxu0 %v4673
        %4675 = vmatprep.subr.mxu0 0.0
        %v4676 = vand.u32 %v761, 4294901760
        %v4677 = vsub.f32 %v761, %v4676
        %4678 = vmatpush1.msra.mxu0 %v4677
        %4679 = vmatprep.subr.mxu0 0.0
        %v4680 = vand.u32 %v764, 4294901760
        %v4681 = vsub.f32 %v764, %v4680
        %4682 = vmatpush1.msra.mxu0 %v4681
        %4683 = vmatprep.subr.mxu0 0.0
        %v4684 = vand.u32 %v767, 4294901760
        %v4685 = vsub.f32 %v767, %v4684
        %4686 = vmatpush1.msra.mxu0 %v4685
        %4687 = vmatprep.subr.mxu0 0.0
        %v4688 = vand.u32 %v770, 4294901760
        %v4689 = vsub.f32 %v770, %v4688
        %4690 = vmatpush1.msra.mxu0 %v4689
        %4691 = vmatprep.subr.mxu0 0.0
        %v4692 = vand.u32 %v773, 4294901760
        %v4693 = vsub.f32 %v773, %v4692
        %4694 = vmatpush1.msra.mxu0 %v4693
        %4695 = vmatprep.subr.mxu0 0.0
        %v4696 = vand.u32 %v776, 4294901760
        %v4697 = vsub.f32 %v776, %v4696
        %4698 = vmatpush1.msra.mxu0 %v4697
        %4699 = vmatprep.subr.mxu0 0.0
        %v4700 = vand.u32 %v779, 4294901760
        %v4701 = vsub.f32 %v779, %v4700
        %4702 = vmatpush1.msra.mxu0 %v4701
        %4703 = vmatprep.subr.mxu0 0.0
        %v4704 = vand.u32 %v782, 4294901760
        %v4705 = vsub.f32 %v782, %v4704
        %4706 = vmatpush1.msra.mxu0 %v4705
        %v4707 = vand.u32 %v800, 4294901760
        %v4708 = vsub.f32 %v800, %v4707
        %4709 = vmatprep.mubr.f32.mxu0 %v4708
        %v4710 = vand.u32 %v798, 4294901760
        %v4711 = vsub.f32 %v798, %v4710
        %4712 = vmatmul.mubr.f32.gmra.mrb[0].mxu0 %v4711
        %v4713 = vpop.f32.mrb[0].mxu0
        %v4714 = vadd.f32 %v4576, %v4713
        %v4715 = vpop.f32.mrb[0].mxu0
        %4716 = vdwg.mxu0
        %4717 = vmatprep.subr.mxu0 0.0
        %v4718 = vand.u32 %v689, 4294901760
        %4719 = vmatpush1.msra.mxu0 %v4718
        %4720 = vmatprep.subr.mxu0 0.0
        %v4721 = vand.u32 %v692, 4294901760
        %4722 = vmatpush1.msra.mxu0 %v4721
        %4723 = vmatprep.subr.mxu0 0.0
        %v4724 = vand.u32 %v695, 4294901760
        %4725 = vmatpush1.msra.mxu0 %v4724
        %4726 = vmatprep.subr.mxu0 0.0
        %v4727 = vand.u32 %v698, 4294901760
        %4728 = vmatpush1.msra.mxu0 %v4727
        %4729 = vmatprep.subr.mxu0 0.0
        %v4730 = vand.u32 %v701, 4294901760
        %4731 = vmatpush1.msra.mxu0 %v4730
        %4732 = vmatprep.subr.mxu0 0.0
        %v4733 = vand.u32 %v704, 4294901760
        %4734 = vmatpush1.msra.mxu0 %v4733
        %4735 = vmatprep.subr.mxu0 0.0
        %v4736 = vand.u32 %v707, 4294901760
        %4737 = vmatpush1.msra.mxu0 %v4736
        %4738 = vmatprep.subr.mxu0 0.0
        %v4739 = vand.u32 %v710, 4294901760
        %4740 = vmatpush1.msra.mxu0 %v4739
        %4741 = vmatprep.subr.mxu0 0.0
        %v4742 = vand.u32 %v713, 4294901760
        %4743 = vmatpush1.msra.mxu0 %v4742
        %4744 = vmatprep.subr.mxu0 0.0
        %v4745 = vand.u32 %v716, 4294901760
        %4746 = vmatpush1.msra.mxu0 %v4745
        %4747 = vmatprep.subr.mxu0 0.0
        %v4748 = vand.u32 %v719, 4294901760
        %4749 = vmatpush1.msra.mxu0 %v4748
        %4750 = vmatprep.subr.mxu0 0.0
        %v4751 = vand.u32 %v722, 4294901760
        %4752 = vmatpush1.msra.mxu0 %v4751
        %4753 = vmatprep.subr.mxu0 0.0
        %v4754 = vand.u32 %v725, 4294901760
        %4755 = vmatpush1.msra.mxu0 %v4754
        %4756 = vmatprep.subr.mxu0 0.0
        %v4757 = vand.u32 %v728, 4294901760
        %4758 = vmatpush1.msra.mxu0 %v4757
        %4759 = vmatprep.subr.mxu0 0.0
        %v4760 = vand.u32 %v731, 4294901760
        %4761 = vmatpush1.msra.mxu0 %v4760
        %4762 = vmatprep.subr.mxu0 0.0
        %v4763 = vand.u32 %v734, 4294901760
        %4764 = vmatpush1.msra.mxu0 %v4763
        %4765 = vmatprep.subr.mxu0 0.0
        %v4766 = vand.u32 %v737, 4294901760
        %4767 = vmatpush1.msra.mxu0 %v4766
        %4768 = vmatprep.subr.mxu0 0.0
        %v4769 = vand.u32 %v740, 4294901760
        %4770 = vmatpush1.msra.mxu0 %v4769
        %4771 = vmatprep.subr.mxu0 0.0
        %v4772 = vand.u32 %v743, 4294901760
        %4773 = vmatpush1.msra.mxu0 %v4772
        %4774 = vmatprep.subr.mxu0 0.0
        %v4775 = vand.u32 %v746, 4294901760
        %4776 = vmatpush1.msra.mxu0 %v4775
        %4777 = vmatprep.subr.mxu0 0.0
        %v4778 = vand.u32 %v749, 4294901760
        %4779 = vmatpush1.msra.mxu0 %v4778
        %4780 = vmatprep.subr.mxu0 0.0
        %v4781 = vand.u32 %v752, 4294901760
        %4782 = vmatpush1.msra.mxu0 %v4781
        %4783 = vmatprep.subr.mxu0 0.0
        %v4784 = vand.u32 %v755, 4294901760
        %4785 = vmatpush1.msra.mxu0 %v4784
        %4786 = vmatprep.subr.mxu0 0.0
        %v4787 = vand.u32 %v758, 4294901760
        %4788 = vmatpush1.msra.mxu0 %v4787
        %4789 = vmatprep.subr.mxu0 0.0
        %v4790 = vand.u32 %v761, 4294901760
        %4791 = vmatpush1.msra.mxu0 %v4790
        %4792 = vmatprep.subr.mxu0 0.0
        %v4793 = vand.u32 %v764, 4294901760
        %4794 = vmatpush1.msra.mxu0 %v4793
        %4795 = vmatprep.subr.mxu0 0.0
        %v4796 = vand.u32 %v767, 4294901760
        %4797 = vmatpush1.msra.mxu0 %v4796
        %4798 = vmatprep.subr.mxu0 0.0
        %v4799 = vand.u32 %v770, 4294901760
        %4800 = vmatpush1.msra.mxu0 %v4799
        %4801 = vmatprep.subr.mxu0 0.0
        %v4802 = vand.u32 %v773, 4294901760
        %4803 = vmatpush1.msra.mxu0 %v4802
        %4804 = vmatprep.subr.mxu0 0.0
        %v4805 = vand.u32 %v776, 4294901760
        %4806 = vmatpush1.msra.mxu0 %v4805
        %4807 = vmatprep.subr.mxu0 0.0
        %v4808 = vand.u32 %v779, 4294901760
        %4809 = vmatpush1.msra.mxu0 %v4808
        %4810 = vmatprep.subr.mxu0 0.0
        %v4811 = vand.u32 %v782, 4294901760
        %4812 = vmatpush1.msra.mxu0 %v4811
        %v4813 = vand.u32 %v800, 4294901760
        %v4814 = vsub.f32 %v800, %v4813
        %v4815 = vand.u32 %v4814, 4294901760
        %4816 = vmatprep.mubr.f32.mxu0 %v4815
        %v4817 = vand.u32 %v798, 4294901760
        %v4818 = vsub.f32 %v798, %v4817
        %v4819 = vand.u32 %v4818, 4294901760
        %4820 = vmatmul.mubr.f32.gmra.mrb[0].mxu0 %v4819
        %v4821 = vpop.f32.mrb[0].mxu0
        %v4822 = vadd.f32 %v4714, %v4821
        %v4823 = vpop.f32.mrb[0].mxu0
        %4824 = vdwg.mxu0
        %4825 = vmatprep.subr.mxu0 0.0
        %v4826 = vand.u32 %v689, 4294901760
        %v4827 = vsub.f32 %v689, %v4826
        %v4828 = vand.u32 %v4827, 4294901760
        %4829 = vmatpush1.msra.mxu0 %v4828
        %4830 = vmatprep.subr.mxu0 0.0
        %v4831 = vand.u32 %v692, 4294901760
        %v4832 = vsub.f32 %v692, %v4831
        %v4833 = vand.u32 %v4832, 4294901760
        %4834 = vmatpush1.msra.mxu0 %v4833
        %4835 = vmatprep.subr.mxu0 0.0
        %v4836 = vand.u32 %v695, 4294901760
        %v4837 = vsub.f32 %v695, %v4836
        %v4838 = vand.u32 %v4837, 4294901760
        %4839 = vmatpush1.msra.mxu0 %v4838
        %4840 = vmatprep.subr.mxu0 0.0
        %v4841 = vand.u32 %v698, 4294901760
        %v4842 = vsub.f32 %v698, %v4841
        %v4843 = vand.u32 %v4842, 4294901760
        %4844 = vmatpush1.msra.mxu0 %v4843
        %4845 = vmatprep.subr.mxu0 0.0
        %v4846 = vand.u32 %v701, 4294901760
        %v4847 = vsub.f32 %v701, %v4846
        %v4848 = vand.u32 %v4847, 4294901760
        %4849 = vmatpush1.msra.mxu0 %v4848
        %4850 = vmatprep.subr.mxu0 0.0
        %v4851 = vand.u32 %v704, 4294901760
        %v4852 = vsub.f32 %v704, %v4851
        %v4853 = vand.u32 %v4852, 4294901760
        %4854 = vmatpush1.msra.mxu0 %v4853
        %4855 = vmatprep.subr.mxu0 0.0
        %v4856 = vand.u32 %v707, 4294901760
        %v4857 = vsub.f32 %v707, %v4856
        %v4858 = vand.u32 %v4857, 4294901760
        %4859 = vmatpush1.msra.mxu0 %v4858
        %4860 = vmatprep.subr.mxu0 0.0
        %v4861 = vand.u32 %v710, 4294901760
        %v4862 = vsub.f32 %v710, %v4861
        %v4863 = vand.u32 %v4862, 4294901760
        %4864 = vmatpush1.msra.mxu0 %v4863
        %4865 = vmatprep.subr.mxu0 0.0
        %v4866 = vand.u32 %v713, 4294901760
        %v4867 = vsub.f32 %v713, %v4866
        %v4868 = vand.u32 %v4867, 4294901760
        %4869 = vmatpush1.msra.mxu0 %v4868
        %4870 = vmatprep.subr.mxu0 0.0
        %v4871 = vand.u32 %v716, 4294901760
        %v4872 = vsub.f32 %v716, %v4871
        %v4873 = vand.u32 %v4872, 4294901760
        %4874 = vmatpush1.msra.mxu0 %v4873
        %4875 = vmatprep.subr.mxu0 0.0
        %v4876 = vand.u32 %v719, 4294901760
        %v4877 = vsub.f32 %v719, %v4876
        %v4878 = vand.u32 %v4877, 4294901760
        %4879 = vmatpush1.msra.mxu0 %v4878
        %4880 = vmatprep.subr.mxu0 0.0
        %v4881 = vand.u32 %v722, 4294901760
        %v4882 = vsub.f32 %v722, %v4881
        %v4883 = vand.u32 %v4882, 4294901760
        %4884 = vmatpush1.msra.mxu0 %v4883
        %4885 = vmatprep.subr.mxu0 0.0
        %v4886 = vand.u32 %v725, 4294901760
        %v4887 = vsub.f32 %v725, %v4886
        %v4888 = vand.u32 %v4887, 4294901760
        %4889 = vmatpush1.msra.mxu0 %v4888
        %4890 = vmatprep.subr.mxu0 0.0
        %v4891 = vand.u32 %v728, 4294901760
        %v4892 = vsub.f32 %v728, %v4891
        %v4893 = vand.u32 %v4892, 4294901760
        %4894 = vmatpush1.msra.mxu0 %v4893
        %4895 = vmatprep.subr.mxu0 0.0
        %v4896 = vand.u32 %v731, 4294901760
        %v4897 = vsub.f32 %v731, %v4896
        %v4898 = vand.u32 %v4897, 4294901760
        %4899 = vmatpush1.msra.mxu0 %v4898
        %4900 = vmatprep.subr.mxu0 0.0
        %v4901 = vand.u32 %v734, 4294901760
        %v4902 = vsub.f32 %v734, %v4901
        %v4903 = vand.u32 %v4902, 4294901760
        %4904 = vmatpush1.msra.mxu0 %v4903
        %4905 = vmatprep.subr.mxu0 0.0
        %v4906 = vand.u32 %v737, 4294901760
        %v4907 = vsub.f32 %v737, %v4906
        %v4908 = vand.u32 %v4907, 4294901760
        %4909 = vmatpush1.msra.mxu0 %v4908
        %4910 = vmatprep.subr.mxu0 0.0
        %v4911 = vand.u32 %v740, 4294901760
        %v4912 = vsub.f32 %v740, %v4911
        %v4913 = vand.u32 %v4912, 4294901760
        %4914 = vmatpush1.msra.mxu0 %v4913
        %4915 = vmatprep.subr.mxu0 0.0
        %v4916 = vand.u32 %v743, 4294901760
        %v4917 = vsub.f32 %v743, %v4916
        %v4918 = vand.u32 %v4917, 4294901760
        %4919 = vmatpush1.msra.mxu0 %v4918
        %4920 = vmatprep.subr.mxu0 0.0
        %v4921 = vand.u32 %v746, 4294901760
        %v4922 = vsub.f32 %v746, %v4921
        %v4923 = vand.u32 %v4922, 4294901760
        %4924 = vmatpush1.msra.mxu0 %v4923
        %4925 = vmatprep.subr.mxu0 0.0
        %v4926 = vand.u32 %v749, 4294901760
        %v4927 = vsub.f32 %v749, %v4926
        %v4928 = vand.u32 %v4927, 4294901760
        %4929 = vmatpush1.msra.mxu0 %v4928
        %4930 = vmatprep.subr.mxu0 0.0
        %v4931 = vand.u32 %v752, 4294901760
        %v4932 = vsub.f32 %v752, %v4931
        %v4933 = vand.u32 %v4932, 4294901760
        %4934 = vmatpush1.msra.mxu0 %v4933
        %4935 = vmatprep.subr.mxu0 0.0
        %v4936 = vand.u32 %v755, 4294901760
        %v4937 = vsub.f32 %v755, %v4936
        %v4938 = vand.u32 %v4937, 4294901760
        %4939 = vmatpush1.msra.mxu0 %v4938
        %4940 = vmatprep.subr.mxu0 0.0
        %v4941 = vand.u32 %v758, 4294901760
        %v4942 = vsub.f32 %v758, %v4941
        %v4943 = vand.u32 %v4942, 4294901760
        %4944 = vmatpush1.msra.mxu0 %v4943
        %4945 = vmatprep.subr.mxu0 0.0
        %v4946 = vand.u32 %v761, 4294901760
        %v4947 = vsub.f32 %v761, %v4946
        %v4948 = vand.u32 %v4947, 4294901760
        %4949 = vmatpush1.msra.mxu0 %v4948
        %4950 = vmatprep.subr.mxu0 0.0
        %v4951 = vand.u32 %v764, 4294901760
        %v4952 = vsub.f32 %v764, %v4951
        %v4953 = vand.u32 %v4952, 4294901760
        %4954 = vmatpush1.msra.mxu0 %v4953
        %4955 = vmatprep.subr.mxu0 0.0
        %v4956 = vand.u32 %v767, 4294901760
        %v4957 = vsub.f32 %v767, %v4956
        %v4958 = vand.u32 %v4957, 4294901760
        %4959 = vmatpush1.msra.mxu0 %v4958
        %4960 = vmatprep.subr.mxu0 0.0
        %v4961 = vand.u32 %v770, 4294901760
        %v4962 = vsub.f32 %v770, %v4961
        %v4963 = vand.u32 %v4962, 4294901760
        %4964 = vmatpush1.msra.mxu0 %v4963
        %4965 = vmatprep.subr.mxu0 0.0
        %v4966 = vand.u32 %v773, 4294901760
        %v4967 = vsub.f32 %v773, %v4966
        %v4968 = vand.u32 %v4967, 4294901760
        %4969 = vmatpush1.msra.mxu0 %v4968
        %4970 = vmatprep.subr.mxu0 0.0
        %v4971 = vand.u32 %v776, 4294901760
        %v4972 = vsub.f32 %v776, %v4971
        %v4973 = vand.u32 %v4972, 4294901760
        %4974 = vmatpush1.msra.mxu0 %v4973
        %4975 = vmatprep.subr.mxu0 0.0
        %v4976 = vand.u32 %v779, 4294901760
        %v4977 = vsub.f32 %v779, %v4976
        %v4978 = vand.u32 %v4977, 4294901760
        %4979 = vmatpush1.msra.mxu0 %v4978
        %4980 = vmatprep.subr.mxu0 0.0
        %v4981 = vand.u32 %v782, 4294901760
        %v4982 = vsub.f32 %v782, %v4981
        %v4983 = vand.u32 %v4982, 4294901760
        %4984 = vmatpush1.msra.mxu0 %v4983
        %v4985 = vand.u32 %v800, 4294901760
        %4986 = vmatprep.mubr.f32.mxu0 %v4985
        %v4987 = vand.u32 %v798, 4294901760
        %4988 = vmatmul.mubr.f32.gmra.mrb[0].mxu0 %v4987
        %v4989 = vpop.f32.mrb[0].mxu0
        %v4990 = vadd.f32 %v4822, %v4989
        %v4991 = vpop.f32.mrb[0].mxu0
        %4992 = vdwg.mxu0
        %4993 = vmatprep.subr.mxu0 0.0
        %v4994 = vand.u32 %v689, 4294901760
        %4995 = vmatpush1.msra.mxu0 %v4994
        %4996 = vmatprep.subr.mxu0 0.0
        %v4997 = vand.u32 %v692, 4294901760
        %4998 = vmatpush1.msra.mxu0 %v4997
        %4999 = vmatprep.subr.mxu0 0.0
        %v5000 = vand.u32 %v695, 4294901760
        %5001 = vmatpush1.msra.mxu0 %v5000
        %5002 = vmatprep.subr.mxu0 0.0
        %v5003 = vand.u32 %v698, 4294901760
        %5004 = vmatpush1.msra.mxu0 %v5003
        %5005 = vmatprep.subr.mxu0 0.0
        %v5006 = vand.u32 %v701, 4294901760
        %5007 = vmatpush1.msra.mxu0 %v5006
        %5008 = vmatprep.subr.mxu0 0.0
        %v5009 = vand.u32 %v704, 4294901760
        %5010 = vmatpush1.msra.mxu0 %v5009
        %5011 = vmatprep.subr.mxu0 0.0
        %v5012 = vand.u32 %v707, 4294901760
        %5013 = vmatpush1.msra.mxu0 %v5012
        %5014 = vmatprep.subr.mxu0 0.0
        %v5015 = vand.u32 %v710, 4294901760
        %5016 = vmatpush1.msra.mxu0 %v5015
        %5017 = vmatprep.subr.mxu0 0.0
        %v5018 = vand.u32 %v713, 4294901760
        %5019 = vmatpush1.msra.mxu0 %v5018
        %5020 = vmatprep.subr.mxu0 0.0
        %v5021 = vand.u32 %v716, 4294901760
        %5022 = vmatpush1.msra.mxu0 %v5021
        %5023 = vmatprep.subr.mxu0 0.0
        %v5024 = vand.u32 %v719, 4294901760
        %5025 = vmatpush1.msra.mxu0 %v5024
        %5026 = vmatprep.subr.mxu0 0.0
        %v5027 = vand.u32 %v722, 4294901760
        %5028 = vmatpush1.msra.mxu0 %v5027
        %5029 = vmatprep.subr.mxu0 0.0
        %v5030 = vand.u32 %v725, 4294901760
        %5031 = vmatpush1.msra.mxu0 %v5030
        %5032 = vmatprep.subr.mxu0 0.0
        %v5033 = vand.u32 %v728, 4294901760
        %5034 = vmatpush1.msra.mxu0 %v5033
        %5035 = vmatprep.subr.mxu0 0.0
        %v5036 = vand.u32 %v731, 4294901760
        %5037 = vmatpush1.msra.mxu0 %v5036
        %5038 = vmatprep.subr.mxu0 0.0
        %v5039 = vand.u32 %v734, 4294901760
        %5040 = vmatpush1.msra.mxu0 %v5039
        %5041 = vmatprep.subr.mxu0 0.0
        %v5042 = vand.u32 %v737, 4294901760
        %5043 = vmatpush1.msra.mxu0 %v5042
        %5044 = vmatprep.subr.mxu0 0.0
        %v5045 = vand.u32 %v740, 4294901760
        %5046 = vmatpush1.msra.mxu0 %v5045
        %5047 = vmatprep.subr.mxu0 0.0
        %v5048 = vand.u32 %v743, 4294901760
        %5049 = vmatpush1.msra.mxu0 %v5048
        %5050 = vmatprep.subr.mxu0 0.0
        %v5051 = vand.u32 %v746, 4294901760
        %5052 = vmatpush1.msra.mxu0 %v5051
        %5053 = vmatprep.subr.mxu0 0.0
        %v5054 = vand.u32 %v749, 4294901760
        %5055 = vmatpush1.msra.mxu0 %v5054
        %5056 = vmatprep.subr.mxu0 0.0
        %v5057 = vand.u32 %v752, 4294901760
        %5058 = vmatpush1.msra.mxu0 %v5057
        %5059 = vmatprep.subr.mxu0 0.0
        %v5060 = vand.u32 %v755, 4294901760
        %5061 = vmatpush1.msra.mxu0 %v5060
        %5062 = vmatprep.subr.mxu0 0.0
        %v5063 = vand.u32 %v758, 4294901760
        %5064 = vmatpush1.msra.mxu0 %v5063
        %5065 = vmatprep.subr.mxu0 0.0
        %v5066 = vand.u32 %v761, 4294901760
        %5067 = vmatpush1.msra.mxu0 %v5066
        %5068 = vmatprep.subr.mxu0 0.0
        %v5069 = vand.u32 %v764, 4294901760
        %5070 = vmatpush1.msra.mxu0 %v5069
        %5071 = vmatprep.subr.mxu0 0.0
        %v5072 = vand.u32 %v767, 4294901760
        %5073 = vmatpush1.msra.mxu0 %v5072
        %5074 = vmatprep.subr.mxu0 0.0
        %v5075 = vand.u32 %v770, 4294901760
        %5076 = vmatpush1.msra.mxu0 %v5075
        %5077 = vmatprep.subr.mxu0 0.0
        %v5078 = vand.u32 %v773, 4294901760
        %5079 = vmatpush1.msra.mxu0 %v5078
        %5080 = vmatprep.subr.mxu0 0.0
        %v5081 = vand.u32 %v776, 4294901760
        %5082 = vmatpush1.msra.mxu0 %v5081
        %5083 = vmatprep.subr.mxu0 0.0
        %v5084 = vand.u32 %v779, 4294901760
        %5085 = vmatpush1.msra.mxu0 %v5084
        %5086 = vmatprep.subr.mxu0 0.0
        %v5087 = vand.u32 %v782, 4294901760
        %5088 = vmatpush1.msra.mxu0 %v5087
        %v5089 = vand.u32 %v800, 4294901760
        %5090 = vmatprep.mubr.f32.mxu0 %v5089
        %v5091 = vand.u32 %v798, 4294901760
        %5092 = vmatmul.mubr.f32.gmra.mrb[0].mxu0 %v5091
        %v5093 = vpop.f32.mrb[0].mxu0
        %v5094 = vadd.f32 %v4990, %v5093
        %v5095 = vpop.f32.mrb[0].mxu0
        %5096 = vdwg.mxu0
        %v5100 = vcombine.low %v3369, %v3371
        %v5102 = vunpack.c.l.s4 1983009808
        %v5103 = vunpack.c.0.s8 %v5102
        %v5104 = vlaneseq
        %v5105 = vshrl.u32 %v5104, 7
        %v5106 = vsub.s32 %v5103, %v5105
        %v5107 = vrot.slane %v5100, %v5106
        %v5109 = vunpack.c.l.s4 1983009808
        %v5110 = vunpack.c.0.s8 %v5109
        %v5111 = vlaneseq
        %v5112 = vshrl.u32 %v5111, 7
        %v5113 = vsub.s32 %v5110, %v5112
        %v5114 = vrot.slane %v5094, %v5113
        %v5115 = vcombine.low %v5107, %v5114
        %5117 = vst [vmem:[%s588] sm:$0x3f] %v5115
        %s5118 = smul.u32 3, %s18
        %p5119 = scmp.lt.s32.totalorder %s17, 0
        %s5120 = scalar_select %p5119, %s17, 0
        %p5121 = scmp.lt.s32.totalorder %s5118, 5
        %s5122 = scalar_select %p5121, %s5118, 5
        %s5123 = smul.addr %s5120, 6
        %s5124 = sadd.s32 %s5122, %s5123
        %s5125 = smul.addr %s5124, 2
        %s5126 = scalar_lea.vmem %s2, %s5125
        // Predicated region
        $region52: #{neural_fourier_layer_forward.1} parent=46 // pred_check
          %p5127 = pneg %p97
        $region53: #{neural_fourier_layer_forward.1} parent=46 // pred_check_branch
          %5129 = sbr.rel (%p5127) target = $region55
        $region54: #{neural_fourier_layer_forward.1} parent=46 // pred_region
          %s5130 = smul.u32 3, %s18
        $region55: #{neural_fourier_layer_forward.1} parent=46 // pred_fallthru
          _
      $region47: #{neural_fourier_layer_forward.1} parent=5 // pred_fallthru
        _
      %p5131 = scmp.le.s32.totalorder 2, %s8
      // Predicated region
      $region56: #{neural_fourier_layer_forward.1} parent=5 // pred_check
        %p5132 = pneg %p5131
      $region57: #{neural_fourier_layer_forward.1} parent=5 // pred_check_branch
        %5134 = sbr.rel (%p5132) target = $region59
      $region58: #{neural_fourier_layer_forward.1} parent=5 // pred_region
        %s5135 = ssub.s32 %s8, 2
        // Predicated region
        $region60: #{neural_fourier_layer_forward.1} parent=58 // pred_check
          %p5136 = pneg %p103
        $region61: #{neural_fourier_layer_forward.1} parent=58 // pred_check_branch
          %5138 = sbr.rel (%p5136) target = $region63
        $region62: #{neural_fourier_layer_forward.1} parent=58 // pred_region
          %s5139 = smul.u32 3, %s20
          %p5140 = scmp.lt.s32.totalorder %s19, 0
          %s5141 = scalar_select %p5140, %s19, 0
          %p5142 = scmp.lt.s32.totalorder %s5139, 5
          %s5143 = scalar_select %p5142, %s5139, 5
          %s5144 = smul.addr %s5141, 6
          %s5145 = sadd.s32 %s5143, %s5144
          %s5146 = smul.addr %s5145, 2
          %s5147 = scalar_lea.vmem %s2, %s5146
        $region63: #{neural_fourier_layer_forward.1} parent=58 // pred_fallthru
          _
      $region59: #{neural_fourier_layer_forward.1} parent=5 // pred_fallthru
        _
    $region6: #{neural_fourier_layer_forward.1} parent=1 // loop_footer
      %s12 = sadd.s32 1, %s8
    $region7: #{neural_fourier_layer_forward.1} parent=1 // loop_footer_branch
      %7 = sbr.rel target = $region3
    $region8: #{neural_fourier_layer_forward.1} parent=1 // loop_exit
      _

</llo_original>
